<compile_context>
chip_gen: v7x
topology: tpu7x:2x2x1
jax: 0.10.0
libtpu: 0.0.40
codegen_flags: <defaults>
</compile_context>

<pallas_src>
import math

import numpy as np
import jax
import jax.numpy as jnp
from jax.experimental import pallas as pl
from jax.experimental.pallas import tpu as pltpu


# ----------------------------- kernels -----------------------------

def _sine_nchw_kernel(y_ref, x_ref, inv_ref, ph_ref, o_ref):
    """Direct channel-first output: o[b, c, p], p = flattened (h, w).

    y_ref, x_ref : (1, 1, TP)  f32  normalized row/col positions (cumsum'd in wrapper)
    inv_ref      : (F, 1)      f32  1/dim_t per channel (shared by the y and x halves)
    ph_ref       : (F, 1)      f32  0 for even channels, pi/2 for odd (cos(z) = sin(z+pi/2))
    o_ref        : (1, 2F, TP)      [pos_y | pos_x] along the channel (sublane) axis
    """
    f = inv_ref.shape[0]
    y = y_ref[...]                         # (1, 1, TP)   broadcast along sublanes
    x = x_ref[...]
    inv = inv_ref[...][None, :, :]         # (1, F, 1)    broadcast along lanes
    ph = ph_ref[...][None, :, :]
    # One sin per element; each half needs only one mul + one add of broadcast constants.
    o_ref[:, :f, :] = jnp.sin(y * inv + ph).astype(o_ref.dtype)
    o_ref[:, f:, :] = jnp.sin(x * inv + ph).astype(o_ref.dtype)


def _sine_nhwc_kernel(y_ref, x_ref, invy_ref, invx_ref, ph_ref, o_ref):
    """Channel-last output: o[r, w, c] with rows = B*H fused, channels on lanes.

    y_ref, x_ref : (TR, W)   f32
    invy_ref     : (1, 2F)   f32  1/dim_t on lanes [0,F), 0 on lanes [F,2F)
    invx_ref     : (1, 2F)   f32  0 on lanes [0,F), 1/dim_t on lanes [F,2F)
    ph_ref       : (1, 2F)   f32  0 for even lanes, pi/2 for odd lanes
    o_ref        : (TR, W, 2F)
    """
    two_f = invy_ref.shape[-1]
    y = y_ref[...][:, :, None]                   # (TR, W, 1)
    x = x_ref[...][:, :, None]
    inv_y = invy_ref[...].reshape(1, 1, two_f)   # (1, 1, 2F)
    inv_x = invx_ref[...].reshape(1, 1, two_f)
    phase = ph_ref[...].reshape(1, 1, two_f)
    arg = y * inv_y + x * inv_x + phase          # (TR, W, 2F)
    o_ref[...] = jnp.sin(arg).astype(o_ref.dtype)


# ----------------------------- helpers -----------------------------

def _dim_t_constants(num_pos_feats, temperature):
    i = np.arange(num_pos_feats, dtype=np.float64)
    dim_t = float(temperature) ** (2.0 * np.floor(i / 2.0) / float(num_pos_feats))
    inv = (1.0 / dim_t).astype(np.float32)
    phase = np.where(np.arange(num_pos_feats) % 2 == 0, 0.0, np.pi / 2.0).astype(np.float32)
    return inv, phase


def _pick_row_tile(total_rows, row_bytes, budget_bytes=4 * 1024 * 1024):
    """Largest row tile whose output block fits the VMEM budget (full, or multiple of 8)."""
    if total_rows * row_bytes <= budget_bytes:
        return total_rows
    tr = max(8, (budget_bytes // row_bytes) // 8 * 8)
    return int(min(tr, total_rows))


def _pick_lane_tile(total_lanes, bytes_per_lane, budget_bytes=4 * 1024 * 1024):
    """Largest pixel (lane) tile whose output block fits the VMEM budget (full, or mult of 128)."""
    if total_lanes * bytes_per_lane <= budget_bytes:
        return total_lanes
    tp = max(128, (budget_bytes // bytes_per_lane) // 128 * 128)
    return int(min(tp, total_lanes))


# ----------------------------- wrapper -----------------------------

def position_embedding_sine(mask, *, num_pos_feats=64, temperature=10000,
                            normalize=False, scale=None,
                            out_dtype=jnp.float32, channels_last=False):
    """mask: (B, H, W) bool, True = padded.

    Returns (B, 2*num_pos_feats, H, W) by default (PyTorch layout, computed directly in that
    layout - no transpose), or (B, H, W, 2*num_pos_feats) if channels_last=True.
    """
    if scale is not None and normalize is False:
        raise ValueError('normalize should be True if scale is passed')
    if scale is None:
        scale = 2 * math.pi

    F = num_pos_feats
    assert F % 2 == 0, "num_pos_feats must be even (PyTorch stack/flatten requires it)"
    B, H, W = mask.shape

    # ---- hoisted cumsum + normalize on tiny (B,H,W) arrays (plain XLA) ----
    not_mask = (~mask).astype(jnp.float32)
    y_embed = jnp.cumsum(not_mask, axis=1)
    x_embed = jnp.cumsum(not_mask, axis=2)
    if normalize:
        eps = 1e-6
        y_embed = y_embed / (y_embed[:, -1:, :] + eps) * scale
        x_embed = x_embed / (x_embed[:, :, -1:] + eps) * scale

    inv, phase = _dim_t_constants(F, temperature)
    out_itemsize = np.dtype(out_dtype).itemsize

    # ---------------- direct NCHW path (default) ----------------
    if (not channels_last) and (F % 8 == 0):
        P = H * W
        y_flat = y_embed.reshape(B, 1, P)
        x_flat = x_embed.reshape(B, 1, P)
        inv_col = jnp.asarray(inv[:, None])      # (F, 1)
        ph_col = jnp.asarray(phase[:, None])     # (F, 1)

        TP = _pick_lane_tile(P, 2 * F * out_itemsize)
        grid = (B, pl.cdiv(P, TP))

        out = pl.pallas_call(
            _sine_nchw_kernel,
            out_shape=jax.ShapeDtypeStruct((B, 2 * F, P), out_dtype),
            grid=grid,
            in_specs=[
                pl.BlockSpec((1, 1, TP), lambda b, p: (b, 0, p)),
                pl.BlockSpec((1, 1, TP), lambda b, p: (b, 0, p)),
                pl.BlockSpec((F, 1), lambda b, p: (0, 0)),
                pl.BlockSpec((F, 1), lambda b, p: (0, 0)),
            ],
            out_specs=pl.BlockSpec((1, 2 * F, TP), lambda b, p: (b, 0, p)),
            compiler_params=pltpu.CompilerParams(
                dimension_semantics=("parallel", "parallel")),
        )(y_flat, x_flat, inv_col, ph_col)
        # trailing-dim split: free (no data movement)
        return out.reshape(B, 2 * F, H, W)

    # ---------------- NHWC path (channels_last, or odd-feature fallback) ----------------
    R = B * H
    y_rows = y_embed.reshape(R, W)
    x_rows = x_embed.reshape(R, W)

    zeros = np.zeros(F, dtype=np.float32)
    inv_y2 = jnp.asarray(np.concatenate([inv, zeros])[None, :])     # (1, 2F)
    inv_x2 = jnp.asarray(np.concatenate([zeros, inv])[None, :])     # (1, 2F)
    ph2 = jnp.asarray(np.concatenate([phase, phase])[None, :])      # (1, 2F)

    row_bytes = W * 2 * F * out_itemsize
    TR = _pick_row_tile(R, row_bytes)
    grid = (pl.cdiv(R, TR),)

    out_rows = pl.pallas_call(
        _sine_nhwc_kernel,
        out_shape=jax.ShapeDtypeStruct((R, W, 2 * F), out_dtype),
        grid=grid,
        in_specs=[
            pl.BlockSpec((TR, W), lambda r: (r, 0)),
            pl.BlockSpec((TR, W), lambda r: (r, 0)),
            pl.BlockSpec((1, 2 * F), lambda r: (0, 0)),
            pl.BlockSpec((1, 2 * F), lambda r: (0, 0)),
            pl.BlockSpec((1, 2 * F), lambda r: (0, 0)),
        ],
        out_specs=pl.BlockSpec((TR, W, 2 * F), lambda r: (r, 0, 0)),
        compiler_params=pltpu.CompilerParams(dimension_semantics=("parallel",)),
    )(y_rows, x_rows, inv_y2, inv_x2, ph2)

    out_nhwc = out_rows.reshape(B, H, W, 2 * F)
    if channels_last:
        return out_nhwc
    return jnp.transpose(out_nhwc, (0, 3, 1, 2))


# ----------------------------- reference & test -----------------------------

def _reference(mask, *, num_pos_feats, temperature, normalize, scale):
    """Pure-JAX reference mirroring the PyTorch forward (for validation)."""
    not_mask = (~mask).astype(jnp.float32)
    y_embed = jnp.cumsum(not_mask, axis=1)
    x_embed = jnp.cumsum(not_mask, axis=2)
    if normalize:
        eps = 1e-6
        y_embed = y_embed / (y_embed[:, -1:, :] + eps) * scale
        x_embed = x_embed / (x_embed[:, :, -1:] + eps) * scale
    dim_t = jnp.arange(num_pos_feats, dtype=jnp.float32)
    dim_t = temperature ** (2 * jnp.floor(dim_t / 2) / num_pos_feats)
    pos_x = x_embed[:, :, :, None] / dim_t
    pos_y = y_embed[:, :, :, None] / dim_t
    pos_x = jnp.stack((jnp.sin(pos_x[..., 0::2]), jnp.cos(pos_x[..., 1::2])),
                      axis=4).reshape(*pos_x.shape[:3], -1)
    pos_y = jnp.stack((jnp.sin(pos_y[..., 0::2]), jnp.cos(pos_y[..., 1::2])),
                      axis=4).reshape(*pos_y.shape[:3], -1)
    pos = jnp.concatenate((pos_y, pos_x), axis=3)
    return jnp.transpose(pos, (0, 3, 1, 2))


if __name__ == "__main__":
    key = jax.random.PRNGKey(0)
    B, C, H, W = 2, 4, 16, 16
    num_pos_feats = 64
    temperature = 10000
    normalize = True
    scale = 2 * math.pi

    kx, km = jax.random.split(key)
    x = jax.random.normal(kx, (B, C, H, W), dtype=jnp.float32)  # tensors (unused by the math)
    # padding-style mask: True = padded. Last few columns/rows padded per batch item.
    mask = jnp.zeros((B, H, W), dtype=bool)
    mask = mask.at[0, :, 12:].set(True)
    mask = mask.at[1, 13:, :].set(True)
    rand_pad = jax.random.bernoulli(km, 0.05, (B, H, W))
    mask = jnp.logical_or(mask, rand_pad)

    ref = _reference(mask, num_pos_feats=num_pos_feats, temperature=temperature,
                     normalize=normalize, scale=scale)

    # default PyTorch NCHW layout (computed directly in NCHW, no transpose)
    pos = position_embedding_sine(
        mask, num_pos_feats=num_pos_feats, temperature=temperature,
        normalize=normalize, scale=scale)
    pos = jax.block_until_ready(pos)
    assert pos.shape == (B, 2 * num_pos_feats, H, W), pos.shape
    assert pos.dtype == jnp.float32
    assert jnp.allclose(pos, ref, atol=1e-5, rtol=1e-5), float(jnp.max(jnp.abs(pos - ref)))

    # transpose-free NHWC path should match the permuted reference
    pos_nhwc = position_embedding_sine(
        mask, num_pos_feats=num_pos_feats, temperature=temperature,
        normalize=normalize, scale=scale, channels_last=True)
    pos_nhwc = jax.block_until_ready(pos_nhwc)
    ref_nhwc = jnp.transpose(ref, (0, 2, 3, 1))
    assert jnp.allclose(pos_nhwc, ref_nhwc, atol=1e-5, rtol=1e-5), \
        float(jnp.max(jnp.abs(pos_nhwc - ref_nhwc)))

    print("KERNEL_OK")
</pallas_src>

<mosaic_0001>
module attributes {stable_mosaic.version = 11 : i64} {
  func.func @_sine_nchw_kernel(%arg0: i32, %arg1: i32, %arg2: memref<1x1x256xf32, #tpu.memory_space<vmem>>, %arg3: memref<1x1x256xf32, #tpu.memory_space<vmem>>, %arg4: memref<64x1xf32, #tpu.memory_space<vmem>>, %arg5: memref<64x1xf32, #tpu.memory_space<vmem>>, %arg6: memref<1x128x256xf32, #tpu.memory_space<vmem>>) attributes {dimension_semantics = [#tpu.dimension_semantics<parallel>, #tpu.dimension_semantics<parallel>], iteration_bounds = array<i64: 2, 1>, scalar_prefetch = 0 : i64, scratch_operands = 0 : i64, tpu.core_type = #tpu.core_type<tc>, window_params = [{transform_indices = @transform_0, window_bounds = array<i64: 1, 1, 256>}, {transform_indices = @transform_1, window_bounds = array<i64: 1, 1, 256>}, {pipeline_mode = #tpu.pipeline_mode<synchronous>, transform_indices = @transform_2, window_bounds = array<i64: 64, 1>}, {pipeline_mode = #tpu.pipeline_mode<synchronous>, transform_indices = @transform_3, window_bounds = array<i64: 64, 1>}, {transform_indices = @transform_4, window_bounds = array<i64: 1, 128, 256>}]} {
    %c0 = arith.constant 0 : index
    %c0_0 = arith.constant 0 : index
    %c0_1 = arith.constant 0 : index
    %0 = vector.load %arg2[%c0, %c0_0, %c0_1] : memref<1x1x256xf32, #tpu.memory_space<vmem>>, vector<1x1x256xf32>
    %c0_2 = arith.constant 0 : index
    %c0_3 = arith.constant 0 : index
    %c0_4 = arith.constant 0 : index
    %1 = vector.load %arg3[%c0_2, %c0_3, %c0_4] : memref<1x1x256xf32, #tpu.memory_space<vmem>>, vector<1x1x256xf32>
    %c0_5 = arith.constant 0 : index
    %c0_6 = arith.constant 0 : index
    %2 = vector.load %arg4[%c0_5, %c0_6] : memref<64x1xf32, #tpu.memory_space<vmem>>, vector<64x1xf32>
    %3 = vector.shape_cast %2 : vector<64x1xf32> to vector<1x64x1xf32>
    %c0_7 = arith.constant 0 : index
    %c0_8 = arith.constant 0 : index
    %4 = vector.load %arg5[%c0_7, %c0_8] : memref<64x1xf32, #tpu.memory_space<vmem>>, vector<64x1xf32>
    %5 = vector.shape_cast %4 : vector<64x1xf32> to vector<1x64x1xf32>
    %6 = vector.broadcast %0 : vector<1x1x256xf32> to vector<1x64x256xf32>
    %7 = vector.broadcast %3 : vector<1x64x1xf32> to vector<1x64x256xf32>
    %8 = arith.mulf %6, %7 : vector<1x64x256xf32>
    %9 = vector.broadcast %5 : vector<1x64x1xf32> to vector<1x64x256xf32>
    %10 = arith.addf %8, %9 : vector<1x64x256xf32>
    %11 = math.sin %10 : vector<1x64x256xf32>
    %c0_9 = arith.constant 0 : index
    %c0_10 = arith.constant 0 : index
    %c0_11 = arith.constant 0 : index
    %12 = vector.load %arg6[%c0_9, %c0_10, %c0_11] : memref<1x128x256xf32, #tpu.memory_space<vmem>>, vector<1x64x256xf32>
    tpu.vector_store %arg6[%c0_9, %c0_10, %c0_11], %11 {strides = array<i32>} : memref<1x128x256xf32, #tpu.memory_space<vmem>>, vector<1x64x256xf32>,
    %13 = vector.broadcast %1 : vector<1x1x256xf32> to vector<1x64x256xf32>
    %14 = vector.broadcast %3 : vector<1x64x1xf32> to vector<1x64x256xf32>
    %15 = arith.mulf %13, %14 : vector<1x64x256xf32>
    %16 = vector.broadcast %5 : vector<1x64x1xf32> to vector<1x64x256xf32>
    %17 = arith.addf %15, %16 : vector<1x64x256xf32>
    %18 = math.sin %17 : vector<1x64x256xf32>
    %c0_12 = arith.constant 0 : index
    %c64 = arith.constant 64 : index
    %c0_13 = arith.constant 0 : index
    %19 = vector.load %arg6[%c0_12, %c64, %c0_13] : memref<1x128x256xf32, #tpu.memory_space<vmem>>, vector<1x64x256xf32>
    tpu.vector_store %arg6[%c0_12, %c64, %c0_13], %18 {strides = array<i32>} : memref<1x128x256xf32, #tpu.memory_space<vmem>>, vector<1x64x256xf32>,
    return
  }
  func.func @transform_0(%arg0: i32, %arg1: i32) -> (i32, i32, i32) {
    %c0_i32 = arith.constant 0 : i32
    %c0_i32_0 = arith.constant 0 : i32
    return %arg0, %c0_i32, %arg1 : i32, i32, i32
  }
  func.func @transform_1(%arg0: i32, %arg1: i32) -> (i32, i32, i32) {
    %c0_i32 = arith.constant 0 : i32
    %c0_i32_0 = arith.constant 0 : i32
    return %arg0, %c0_i32, %arg1 : i32, i32, i32
  }
  func.func @transform_2(%arg0: i32, %arg1: i32) -> (i32, i32) {
    %c0_i32 = arith.constant 0 : i32
    %c0_i32_0 = arith.constant 0 : i32
    %c0_i32_1 = arith.constant 0 : i32
    return %c0_i32, %c0_i32_0 : i32, i32
  }
  func.func @transform_3(%arg0: i32, %arg1: i32) -> (i32, i32) {
    %c0_i32 = arith.constant 0 : i32
    %c0_i32_0 = arith.constant 0 : i32
    %c0_i32_1 = arith.constant 0 : i32
    return %c0_i32, %c0_i32_0 : i32, i32
  }
  func.func @transform_4(%arg0: i32, %arg1: i32) -> (i32, i32, i32) {
    %c0_i32 = arith.constant 0 : i32
    %c0_i32_0 = arith.constant 0 : i32
    return %arg0, %c0_i32, %arg1 : i32, i32, i32
  }
}

</mosaic_0001>

<llo_original>
// kernel: tpu_custom_call.1
$region0: #{tpu_custom_call.1}
  #allocation0 [shape = 'u32[]', space=smem, size = 0x4, offset = 0x4, fixed_abs, tag = 'smem constant byte address 0x4 - core index']
  #allocation1 [shape = 'u32[144,128]{1,0:T(1,128)}', space=vmem, size = 0x12000, scoped, tag = 'internal scratch']
  %s0 = inlined_call_operand.vmem [shape: f32[2,1,256], index: 0, kind: input, shape index: {}]
  %s1 = inlined_call_operand.vmem [shape: f32[2,1,256], index: 1, kind: input, shape index: {}]
  %s2 = inlined_call_operand.vmem [shape: f32[64,1], index: 2, kind: input, shape index: {}]
  %s3 = inlined_call_operand.vmem [shape: f32[64,1], index: 3, kind: input, shape index: {}]
  %s4 = inlined_call_operand.hbm [shape: f32[2,128,256], index: 4, kind: output, shape index: {}]
  %s5 = sld [smem:[#allocation0]]
  $region49: #{tpu_custom_call.1} parent=0
    _
  %s7 = ssub.s32 1, %s5
  %s8 = scalar_select 0, %s7, %s5
  $region1: #{tpu_custom_call.1} parent=0
    #allocation2 [shape = 'u8[262144]{0}', space=vmem, size = 0x40000, scoped, tag = 'output window, operand 0']
    #allocation3 [shape = 's32[2]{0}', space=sflag, size = 0x8, scoped, tag = 'scoped memory for tpu_custom_call.1']
    %9 = vsyncpa [#allocation3], 0
    %s10 = scalar_lea.sflag [#allocation3], 1
    %11 = vsyncpa %s10, 0
    loop: start=0, step=1, limit=4
    $region2: #{tpu_custom_call.1} parent=1 // loop_pre_header
      _
    $region3: #{tpu_custom_call.1} parent=1 // loop_header
      %s13 = sphi 0, %s17
      %p14 = scmp.ge.s32.totalorder %s13, 4
      %s20 = sphi 0, %s32
      %s21 = sphi 0, %s28
      %s22 = sphi 0, %s20
      %s23 = sphi 0, %s21
      %s24 = sphi 0, %s22
      %s25 = sphi 0, %s23
      %s37 = sphi 0, %s39
      %s40 = sphi 0, %s37
      %s41 = sphi 0, %s40
      %s57 = sphi 0, %s41
      %s65 = sphi 0, %s67
      %s68 = sphi 0, %s65
      %s69 = sphi 0, %s68
      %s85 = sphi 0, %s69
      %s89 = sphi 0, %s89
      %s91 = sphi 0, %s89
      %s92 = sphi 0, %s91
      %s106 = sphi 0, %s92
      %s110 = sphi 0, %s110
      %s112 = sphi 0, %s110
      %s113 = sphi 0, %s112
      %s127 = sphi 0, %s113
      %s135 = sphi 0, %s137
      %s138 = sphi 0, %s135
      %s139 = sphi 0, %s138
      %s155 = sphi 0, %s139
    $region4: #{tpu_custom_call.1} parent=1 // loop_header_branch
      %16 = sbr.rel (%p14) target = $region8
    $region5: #{tpu_custom_call.1} parent=1 // loop_body
      %s18 = ssub.s32 %s13, 1
      %s19 = ssub.s32 %s13, 2
      %s26 = sadd.s32 1, %s21
      %p27 = scmp.ge.s32.totalorder %s26, 1
      %s28 = scalar_select %p27, 0, %s26
      %s29 = sadd.s32 1, %s20
      %s30 = scalar_select %p27, %s29, %s20
      %p31 = scmp.ge.s32.totalorder %s30, 2
      %s32 = scalar_select %p31, 0, %s30
      %s33 = ssub.s32 %s20, %s32
      %s34 = ssub.s32 %s21, %s28
      %s35 = sor.u32 %s33, %s34
      %p36 = scmp.eq.s32.totalorder %s35, 0
      %s38 = sadd.s32 %s37, 1
      %s39 = scalar_select %p36, %s37, %s38
      %p42 = pneg %p36
      %p43 = scmp.eq.s32.totalorder %s13, 1
      %p44 = por %p42, %p43
      %p45 = scmp.ne.s32.totalorder %s37, %s40
      %p46 = scmp.eq.s32.totalorder %s13, 0
      %p47 = por %p45, %p46
      %p48 = scmp.ne.s32.totalorder %s37, %s40
      %p49 = scmp.eq.s32.totalorder %s18, 1
      %p50 = por %p48, %p49
      %p51 = scmp.ne.s32.totalorder %s40, %s41
      %p52 = scmp.eq.s32.totalorder %s18, 0
      %p53 = por %p51, %p52
      %p54 = scmp.ne.s32.totalorder %s40, %s41
      %p55 = scmp.eq.s32.totalorder %s19, 1
      %p56 = por %p54, %p55
      %p58 = scmp.ne.s32.totalorder %s41, %s57
      %p59 = scmp.eq.s32.totalorder %s19, 0
      %p60 = por %p58, %p59
      %s61 = ssub.s32 %s20, %s32
      %s62 = ssub.s32 %s21, %s28
      %s63 = sor.u32 %s61, %s62
      %p64 = scmp.eq.s32.totalorder %s63, 0
      %s66 = sadd.s32 %s65, 1
      %s67 = scalar_select %p64, %s65, %s66
      %p70 = pneg %p64
      %p71 = scmp.eq.s32.totalorder %s13, 1
      %p72 = por %p70, %p71
      %p73 = scmp.ne.s32.totalorder %s65, %s68
      %p74 = scmp.eq.s32.totalorder %s13, 0
      %p75 = por %p73, %p74
      %p76 = scmp.ne.s32.totalorder %s65, %s68
      %p77 = scmp.eq.s32.totalorder %s18, 1
      %p78 = por %p76, %p77
      %p79 = scmp.ne.s32.totalorder %s68, %s69
      %p80 = scmp.eq.s32.totalorder %s18, 0
      %p81 = por %p79, %p80
      %p82 = scmp.ne.s32.totalorder %s68, %s69
      %p83 = scmp.eq.s32.totalorder %s19, 1
      %p84 = por %p82, %p83
      %p86 = scmp.ne.s32.totalorder %s69, %s85
      %p87 = scmp.eq.s32.totalorder %s19, 0
      %p88 = por %p86, %p87
      %s90 = sadd.s32 %s89, 1
      %p93 = scmp.eq.s32.totalorder %s13, 1
      %p94 = scmp.ne.s32.totalorder %s89, %s91
      %p95 = scmp.eq.s32.totalorder %s13, 0
      %p96 = por %p94, %p95
      %p97 = scmp.ne.s32.totalorder %s89, %s91
      %p98 = scmp.eq.s32.totalorder %s18, 1
      %p99 = por %p97, %p98
      %p100 = scmp.ne.s32.totalorder %s91, %s92
      %p101 = scmp.eq.s32.totalorder %s18, 0
      %p102 = por %p100, %p101
      %p103 = scmp.ne.s32.totalorder %s91, %s92
      %p104 = scmp.eq.s32.totalorder %s19, 1
      %p105 = por %p103, %p104
      %p107 = scmp.ne.s32.totalorder %s92, %s106
      %p108 = scmp.eq.s32.totalorder %s19, 0
      %p109 = por %p107, %p108
      %s111 = sadd.s32 %s110, 1
      %p114 = scmp.eq.s32.totalorder %s13, 1
      %p115 = scmp.ne.s32.totalorder %s110, %s112
      %p116 = scmp.eq.s32.totalorder %s13, 0
      %p117 = por %p115, %p116
      %p118 = scmp.ne.s32.totalorder %s110, %s112
      %p119 = scmp.eq.s32.totalorder %s18, 1
      %p120 = por %p118, %p119
      %p121 = scmp.ne.s32.totalorder %s112, %s113
      %p122 = scmp.eq.s32.totalorder %s18, 0
      %p123 = por %p121, %p122
      %p124 = scmp.ne.s32.totalorder %s112, %s113
      %p125 = scmp.eq.s32.totalorder %s19, 1
      %p126 = por %p124, %p125
      %p128 = scmp.ne.s32.totalorder %s113, %s127
      %p129 = scmp.eq.s32.totalorder %s19, 0
      %p130 = por %p128, %p129
      %s131 = ssub.s32 %s20, %s32
      %s132 = ssub.s32 %s21, %s28
      %s133 = sor.u32 %s131, %s132
      %p134 = scmp.eq.s32.totalorder %s133, 0
      %s136 = sadd.s32 %s135, 1
      %s137 = scalar_select %p134, %s135, %s136
      %p140 = pneg %p134
      %p141 = scmp.eq.s32.totalorder %s13, 1
      %p142 = por %p140, %p141
      %p143 = scmp.ne.s32.totalorder %s135, %s138
      %p144 = scmp.eq.s32.totalorder %s13, 0
      %p145 = por %p143, %p144
      %p146 = scmp.ne.s32.totalorder %s135, %s138
      %p147 = scmp.eq.s32.totalorder %s18, 1
      %p148 = por %p146, %p147
      %p149 = scmp.ne.s32.totalorder %s138, %s139
      %p150 = scmp.eq.s32.totalorder %s18, 0
      %p151 = por %p149, %p150
      %p152 = scmp.ne.s32.totalorder %s138, %s139
      %p153 = scmp.eq.s32.totalorder %s19, 1
      %p154 = por %p152, %p153
      %p156 = scmp.ne.s32.totalorder %s139, %s155
      %p157 = scmp.eq.s32.totalorder %s19, 0
      %p158 = por %p156, %p157
      %p159 = scmp.le.s32.totalorder 1, %s13
      %p160 = scmp.lt.s32.totalorder %s13, 3
      %p161 = pnand %p159, %p160
      %p162 = pneg %p161
      // Predicated region
      $region9: #{tpu_custom_call.1} parent=5 // pred_check
        _
      $region10: #{tpu_custom_call.1} parent=5 // pred_check_branch
        %164 = sbr.rel (%p161) target = $region12
      $region11: #{tpu_custom_call.1} parent=5 // pred_region
        %s165 = ssub.s32 %s13, 1
        // Predicated region
        $region13: #{tpu_custom_call.1} parent=11 // pred_check
          %p166 = pneg %p102
        $region14: #{tpu_custom_call.1} parent=11 // pred_check_branch
          %168 = sbr.rel (%p166) target = $region16
        $region15: #{tpu_custom_call.1} parent=11 // pred_region
          _
        $region16: #{tpu_custom_call.1} parent=11 // pred_fallthru
          _
        // Predicated region
        $region17: #{tpu_custom_call.1} parent=11 // pred_check
          %p169 = pneg %p123
        $region18: #{tpu_custom_call.1} parent=11 // pred_check_branch
          %171 = sbr.rel (%p169) target = $region20
        $region19: #{tpu_custom_call.1} parent=11 // pred_region
          _
        $region20: #{tpu_custom_call.1} parent=11 // pred_fallthru
          _
      $region12: #{tpu_custom_call.1} parent=5 // pred_fallthru
        _
      %p172 = scmp.lt.s32.totalorder %s13, 2
      // Predicated region
      $region21: #{tpu_custom_call.1} parent=5 // pred_check
        %p173 = pneg %p172
      $region22: #{tpu_custom_call.1} parent=5 // pred_check_branch
        %175 = sbr.rel (%p173) target = $region24
      $region23: #{tpu_custom_call.1} parent=5 // pred_region
        // Predicated region
        $region25: #{tpu_custom_call.1} parent=23 // pred_check
          %p176 = pneg %p47
        $region26: #{tpu_custom_call.1} parent=23 // pred_check_branch
          %178 = sbr.rel (%p176) target = $region28
        $region27: #{tpu_custom_call.1} parent=23 // pred_region
          %s179 = smul.u32 2, %s21
          %p180 = scmp.lt.s32.totalorder %s20, 1
          %s181 = scalar_select %p180, %s20, 1
          %p182 = scmp.lt.s32.totalorder %s179, 1
          %s183 = scalar_select %p182, %s179, 1
          %s184 = smul.addr %s181, 2
          %s185 = sadd.s32 %s183, %s184
          %s186 = scalar_lea.vmem %s0, %s185
          %s187 = smul.u32 2, %s21
        $region28: #{tpu_custom_call.1} parent=23 // pred_fallthru
          _
        // Predicated region
        $region29: #{tpu_custom_call.1} parent=23 // pred_check
          %p188 = pneg %p75
        $region30: #{tpu_custom_call.1} parent=23 // pred_check_branch
          %190 = sbr.rel (%p188) target = $region32
        $region31: #{tpu_custom_call.1} parent=23 // pred_region
          %s191 = smul.u32 2, %s21
          %p192 = scmp.lt.s32.totalorder %s20, 1
          %s193 = scalar_select %p192, %s20, 1
          %p194 = scmp.lt.s32.totalorder %s191, 1
          %s195 = scalar_select %p194, %s191, 1
          %s196 = smul.addr %s193, 2
          %s197 = sadd.s32 %s195, %s196
          %s198 = scalar_lea.vmem %s1, %s197
          %s199 = smul.u32 2, %s21
        $region32: #{tpu_custom_call.1} parent=23 // pred_fallthru
          _
      $region24: #{tpu_custom_call.1} parent=5 // pred_fallthru
        _
      %p200 = scmp.le.s32.totalorder 1, %s13
      %p201 = scmp.lt.s32.totalorder %s13, 3
      %p202 = pnand %p200, %p201
      %p203 = pneg %p202
      // Predicated region
      $region33: #{tpu_custom_call.1} parent=5 // pred_check
        _
      $region34: #{tpu_custom_call.1} parent=5 // pred_check_branch
        %205 = sbr.rel (%p202) target = $region36
      $region35: #{tpu_custom_call.1} parent=5 // pred_region
        %s206 = ssub.s32 %s13, 1
        %s207 = smul.u32 2, %s23
        %p208 = scmp.lt.s32.totalorder %s22, 1
        %s209 = scalar_select %p208, %s22, 1
        %p210 = scmp.lt.s32.totalorder %s207, 1
        %s211 = scalar_select %p210, %s207, 1
        %s212 = smul.addr %s209, 2
        %s213 = sadd.s32 %s211, %s212
        %s214 = scalar_lea.vmem %s0, %s213
        %p215 = pneg %p53
        %p216 = pneg %p50
        %s217 = smul.u32 2, %s23
        %p218 = scmp.lt.s32.totalorder %s22, 1
        %s219 = scalar_select %p218, %s22, 1
        %p220 = scmp.lt.s32.totalorder %s217, 1
        %s221 = scalar_select %p220, %s217, 1
        %s222 = smul.addr %s219, 2
        %s223 = sadd.s32 %s221, %s222
        %s224 = scalar_lea.vmem %s1, %s223
        %p225 = pneg %p81
        %p226 = pneg %p78
        %p227 = pneg %p102
        %p228 = pneg %p99
        %p229 = pneg %p123
        %p230 = pneg %p120
        %p231 = pneg %p151
        %p232 = pneg %p148
        %s233 = sand.u32 %s138, 1
        %s234 = scalar_lea.sflag [#allocation3], %s233
        %s235 = sand.u32 %s138, 1
        %s236 = smul.addr %s235, 256
        %s237 = scalar_lea.vmem [#allocation2], %s236
        %s238 = smul.u32 2, %s23
        %p239 = scmp.lt.s32.totalorder %s22, 1
        %s240 = scalar_select %p239, %s22, 1
        %p241 = scmp.lt.s32.totalorder %s238, 1
        %s242 = scalar_select %p241, %s238, 1
        %s243 = smul.addr %s240, 2
        %s244 = sadd.s32 %s242, %s243
        %s245 = scalar_lea.vmem %s0, %s244
        %s246 = smul.u32 2, %s23
        %s247 = smul.u32 2, %s23
        %p248 = scmp.lt.s32.totalorder %s22, 1
        %s249 = scalar_select %p248, %s22, 1
        %p250 = scmp.lt.s32.totalorder %s247, 1
        %s251 = scalar_select %p250, %s247, 1
        %s252 = smul.addr %s249, 2
        %s253 = sadd.s32 %s251, %s252
        %s254 = scalar_lea.vmem %s1, %s253
        %s255 = smul.u32 2, %s23
        %s256 = smul.u32 2, %s23
        %v257 = vld [vmem:[%s245] sm:$0x3]
        %v258 = vld [vmem:[%s254] sm:$0x3]
        %v259 = vld [vmem:[%s2] sm:$0xff]
        %v260 = vld [vmem:[%s2 + $0x8] sm:$0xff]
        %v261 = vld [vmem:[%s2 + $0x10] sm:$0xff]
        %v262 = vld [vmem:[%s2 + $0x18] sm:$0xff]
        %v263 = vld [vmem:[%s2 + $0x20] sm:$0xff]
        %v264 = vld [vmem:[%s2 + $0x28] sm:$0xff]
        %v265 = vld [vmem:[%s2 + $0x30] sm:$0xff]
        %v266 = vld [vmem:[%s2 + $0x38] sm:$0xff]
        %v267 = vld [vmem:[%s3] sm:$0xff]
        %v268 = vld [vmem:[%s3 + $0x8] sm:$0xff]
        %v269 = vld [vmem:[%s3 + $0x10] sm:$0xff]
        %v270 = vld [vmem:[%s3 + $0x18] sm:$0xff]
        %v271 = vld [vmem:[%s3 + $0x20] sm:$0xff]
        %v272 = vld [vmem:[%s3 + $0x28] sm:$0xff]
        %v273 = vld [vmem:[%s3 + $0x30] sm:$0xff]
        %v274 = vld [vmem:[%s3 + $0x38] sm:$0xff]
        %v276 = vlaneseq
        %v277 = vshrl.u32 %v276, 7
        %v278 = vsub.s32 0, %v277
        %v279 = vrot.slane %v257, %v278
        %v280 = vlaneseq
        %v281 = vshrl.u32 %v280, 7
        %v282 = vsub.s32 1, %v281
        %v283 = vrot.slane %v257, %v282
        %287 = vset.pattern.permute.xlu0 0
        %288 = vperm.xlu0 %287, %v259
        %v289 = vpop.permute.xlu0 %288
        %292 = vset.pattern.permute.xlu0 0
        %293 = vperm.xlu0 %292, %v260
        %v294 = vpop.permute.xlu0 %293
        %297 = vset.pattern.permute.xlu0 0
        %298 = vperm.xlu0 %297, %v261
        %v299 = vpop.permute.xlu0 %298
        %302 = vset.pattern.permute.xlu0 0
        %303 = vperm.xlu0 %302, %v262
        %v304 = vpop.permute.xlu0 %303
        %307 = vset.pattern.permute.xlu0 0
        %308 = vperm.xlu0 %307, %v263
        %v309 = vpop.permute.xlu0 %308
        %312 = vset.pattern.permute.xlu0 0
        %313 = vperm.xlu0 %312, %v264
        %v314 = vpop.permute.xlu0 %313
        %317 = vset.pattern.permute.xlu0 0
        %318 = vperm.xlu0 %317, %v265
        %v319 = vpop.permute.xlu0 %318
        %322 = vset.pattern.permute.xlu0 0
        %323 = vperm.xlu0 %322, %v266
        %v324 = vpop.permute.xlu0 %323
        %v326 = vmul.f32 %v279, %v289
        %v327 = vmul.f32 %v283, %v289
        %v328 = vmul.f32 %v279, %v294
        %v329 = vmul.f32 %v283, %v294
        %v330 = vmul.f32 %v279, %v299
        %v331 = vmul.f32 %v283, %v299
        %v332 = vmul.f32 %v279, %v304
        %v333 = vmul.f32 %v283, %v304
        %v334 = vmul.f32 %v279, %v309
        %v335 = vmul.f32 %v283, %v309
        %v336 = vmul.f32 %v279, %v314
        %v337 = vmul.f32 %v283, %v314
        %v338 = vmul.f32 %v279, %v319
        %v339 = vmul.f32 %v283, %v319
        %v340 = vmul.f32 %v279, %v324
        %v341 = vmul.f32 %v283, %v324
        %343 = vset.pattern.permute.xlu0 0
        %344 = vperm.xlu0 %343, %v267
        %v345 = vpop.permute.xlu0 %344
        %348 = vset.pattern.permute.xlu0 0
        %349 = vperm.xlu0 %348, %v268
        %v350 = vpop.permute.xlu0 %349
        %353 = vset.pattern.permute.xlu0 0
        %354 = vperm.xlu0 %353, %v269
        %v355 = vpop.permute.xlu0 %354
        %358 = vset.pattern.permute.xlu0 0
        %359 = vperm.xlu0 %358, %v270
        %v360 = vpop.permute.xlu0 %359
        %363 = vset.pattern.permute.xlu0 0
        %364 = vperm.xlu0 %363, %v271
        %v365 = vpop.permute.xlu0 %364
        %368 = vset.pattern.permute.xlu0 0
        %369 = vperm.xlu0 %368, %v272
        %v370 = vpop.permute.xlu0 %369
        %373 = vset.pattern.permute.xlu0 0
        %374 = vperm.xlu0 %373, %v273
        %v375 = vpop.permute.xlu0 %374
        %378 = vset.pattern.permute.xlu0 0
        %379 = vperm.xlu0 %378, %v274
        %v380 = vpop.permute.xlu0 %379
        %v382 = vadd.f32 %v326, %v345
        %v383 = vadd.f32 %v327, %v345
        %v384 = vadd.f32 %v328, %v350
        %v385 = vadd.f32 %v329, %v350
        %v386 = vadd.f32 %v330, %v355
        %v387 = vadd.f32 %v331, %v355
        %v388 = vadd.f32 %v332, %v360
        %v389 = vadd.f32 %v333, %v360
        %v390 = vadd.f32 %v334, %v365
        %v391 = vadd.f32 %v335, %v365
        %v392 = vadd.f32 %v336, %v370
        %v393 = vadd.f32 %v337, %v370
        %v394 = vadd.f32 %v338, %v375
        %v395 = vadd.f32 %v339, %v375
        %v396 = vadd.f32 %v340, %v380
        %v397 = vadd.f32 %v341, %v380
        %v398 = vand.u32 2147483647, %v382
        %vm399 = vcmp.le.f32.partialorder %v398, 0.7853982
        %vm400 = vcmp.lt.s32.totalorder %v382, 0
        %v401 = vand.u32 %v382, 2139095040
        %v402 = vshrl.u32 %v401, 23
        %v403 = vsub.s32 %v402, 127
        %v404 = vand.u32 2147483647, %v382
        %v405 = vand.u32 %v404, 8388607
        %v406 = vor.u32 %v405, 8388608
        %v407 = vsub.s32 0, %v406
        %v408 = vadd.s32 %v403, 1
        %vm409 = vcmp.gt.s32.totalorder %v408, 0
        %v410 = vsel %vm409, %v408, 0
        %v411 = vshrl.u32 %v410, 5
        %v412 = vand.u32 %v410, 31
        %v413 = vsub.s32 32, %v412
        %v414 = vshrl.u32 683565275, %v413
        %v415 = vshll.u32 683565275, %v412
        %v416 = vshrl.u32 2475754826, %v413
        %v417 = vor.u32 %v415, %v416
        %v418 = vshll.u32 2475754826, %v412
        %v419 = vshrl.u32 2131351028, %v413
        %v420 = vor.u32 %v418, %v419
        %v421 = vshll.u32 2131351028, %v412
        %v422 = vshrl.u32 2102212464, %v413
        %v423 = vor.u32 %v421, %v422
        %v424 = vshll.u32 2102212464, %v412
        %v425 = vshrl.u32 920167782, %v413
        %v426 = vor.u32 %v424, %v425
        %v427 = vshll.u32 920167782, %v412
        %v428 = vshrl.u32 1326507024, %v413
        %v429 = vor.u32 %v427, %v428
        %vm430 = vcmp.lt.s32.totalorder %v411, 1
        %vm431 = vcmp.lt.s32.totalorder %v411, 2
        %vm432 = vcmp.lt.s32.totalorder %v411, 3
        %vm433 = vcmp.lt.s32.totalorder %v411, 4
        %v434 = vsel %vm430, %v414, %v417
        %v435 = vsel %vm433, %v423, 2102212464
        %v436 = vsel %vm432, %v420, %v435
        %v437 = vsel %vm431, %v434, %v436
        %v438 = vsel %vm430, %v417, %v420
        %v439 = vsel %vm433, %v426, 920167782
        %v440 = vsel %vm432, %v423, %v439
        %v441 = vsel %vm431, %v438, %v440
        %v442 = vsel %vm430, %v420, %v423
        %v443 = vsel %vm433, %v429, 1326507024
        %v444 = vsel %vm432, %v426, %v443
        %v445 = vsel %vm431, %v442, %v444
        %v446 = vshll.u32 %v406, 8
        %v447 = vmul.u32.u64.compose %v446, %v445
        %v448 = vextract.low.u32 %v447
        %v449 = vextract.high.u32 %v447
        %v450 = vmul.u32.u64.compose %v446, %v441
        %v451 = vextract.low.u32 %v450
        %v452 = vextract.high.u32 %v450
        %v453 = vmul.u32 %v446, %v437
        %v454 = vadd.s32 %v449, %v451
        %vm455 = vc.u32 %v449, %v451
        %v456 = vadd.s32 %v452, 1
        %v457 = vsel %vm455, %v456, %v452
        %v458 = vadd.s32 %v453, %v457
        %v459 = vadd.s32 %v458, 536870912
        %v460 = vshrl.u32 %v459, 30
        %v461 = vshll.u32 %v460, 30
        %v462 = vsub.s32 %v458, %v461
        %vm463 = vcmp.lt.s32.totalorder %v462, 0
        %v464 = vsub.s32 0, %v462
        %v465 = vsel %vm463, %v464, %v462
        %v466 = vclz %v465
        %v467 = vsub.s32 %v466, 2
        %vm468 = vcmp.gt.s32.totalorder 0, %v467
        %v469 = vsel %vm468, 0, %v467
        %v470 = vsub.s32 32, %v469
        %v471 = vshll.u32 %v462, %v469
        %v472 = vshrl.u32 %v454, %v470
        %v473 = vor.u32 %v471, %v472
        %v474 = vsub.s32 4294967266, %v469
        %v475 = vadd.s32 %v474, 127
        %v476 = vshll.u32 %v475, 23
        %v477 = vor.u32 4788187, %v476
        %v478 = vand.u32 2147483647, %v477
        %v480 = vcvt.s32.f32 %v473
        %v481 = vmul.f32 %v480, %v478
        %v482 = vxor.u32 %v481, 2147483648
        %v483 = vsel %vm400, %v482, %v481
        %v484 = vsub.s32 4, %v460
        %v485 = vsel %vm400, %v484, %v460
        %v486 = vsel %vm399, %v382, %v483
        %v487 = vsel %vm399, 0, %v485
        %v488 = vcosq.f32.pop %v486
        %v489 = vsinq.f32.pop %v486
        %vm490 = vweird.f32 %v382
        %v491 = vadd.s32 %v487, 3
        %v492 = vand.u32 %v491, 3
        %vm493 = vcmp.lt.s32.totalorder %v492, 2
        %vm494 = vcmp.eq.s32.totalorder %v492, 0
        %v495 = vxor.u32 %v489, 2147483648
        %v496 = vsel %vm494, %v488, %v495
        %vm497 = vcmp.eq.s32.totalorder %v492, 2
        %v498 = vxor.u32 %v488, 2147483648
        %v499 = vsel %vm497, %v498, %v489
        %v500 = vsel %vm493, %v496, %v499
        %v501 = vsel %vm490, nan, %v500
        %v502 = vand.u32 2147483647, %v383
        %vm503 = vcmp.le.f32.partialorder %v502, 0.7853982
        %vm504 = vcmp.lt.s32.totalorder %v383, 0
        %v505 = vand.u32 %v383, 2139095040
        %v506 = vshrl.u32 %v505, 23
        %v507 = vsub.s32 %v506, 127
        %v508 = vand.u32 2147483647, %v383
        %v509 = vand.u32 %v508, 8388607
        %v510 = vor.u32 %v509, 8388608
        %v511 = vsub.s32 0, %v510
        %v512 = vadd.s32 %v507, 1
        %vm513 = vcmp.gt.s32.totalorder %v512, 0
        %v514 = vsel %vm513, %v512, 0
        %v515 = vshrl.u32 %v514, 5
        %v516 = vand.u32 %v514, 31
        %v517 = vsub.s32 32, %v516
        %v518 = vshrl.u32 683565275, %v517
        %v519 = vshll.u32 683565275, %v516
        %v520 = vshrl.u32 2475754826, %v517
        %v521 = vor.u32 %v519, %v520
        %v522 = vshll.u32 2475754826, %v516
        %v523 = vshrl.u32 2131351028, %v517
        %v524 = vor.u32 %v522, %v523
        %v525 = vshll.u32 2131351028, %v516
        %v526 = vshrl.u32 2102212464, %v517
        %v527 = vor.u32 %v525, %v526
        %v528 = vshll.u32 2102212464, %v516
        %v529 = vshrl.u32 920167782, %v517
        %v530 = vor.u32 %v528, %v529
        %v531 = vshll.u32 920167782, %v516
        %v532 = vshrl.u32 1326507024, %v517
        %v533 = vor.u32 %v531, %v532
        %vm534 = vcmp.lt.s32.totalorder %v515, 1
        %vm535 = vcmp.lt.s32.totalorder %v515, 2
        %vm536 = vcmp.lt.s32.totalorder %v515, 3
        %vm537 = vcmp.lt.s32.totalorder %v515, 4
        %v538 = vsel %vm534, %v518, %v521
        %v539 = vsel %vm537, %v527, 2102212464
        %v540 = vsel %vm536, %v524, %v539
        %v541 = vsel %vm535, %v538, %v540
        %v542 = vsel %vm534, %v521, %v524
        %v543 = vsel %vm537, %v530, 920167782
        %v544 = vsel %vm536, %v527, %v543
        %v545 = vsel %vm535, %v542, %v544
        %v546 = vsel %vm534, %v524, %v527
        %v547 = vsel %vm537, %v533, 1326507024
        %v548 = vsel %vm536, %v530, %v547
        %v549 = vsel %vm535, %v546, %v548
        %v550 = vshll.u32 %v510, 8
        %v551 = vmul.u32.u64.compose %v550, %v549
        %v552 = vextract.low.u32 %v551
        %v553 = vextract.high.u32 %v551
        %v554 = vmul.u32.u64.compose %v550, %v545
        %v555 = vextract.low.u32 %v554
        %v556 = vextract.high.u32 %v554
        %v557 = vmul.u32 %v550, %v541
        %v558 = vadd.s32 %v553, %v555
        %vm559 = vc.u32 %v553, %v555
        %v560 = vadd.s32 %v556, 1
        %v561 = vsel %vm559, %v560, %v556
        %v562 = vadd.s32 %v557, %v561
        %v563 = vadd.s32 %v562, 536870912
        %v564 = vshrl.u32 %v563, 30
        %v565 = vshll.u32 %v564, 30
        %v566 = vsub.s32 %v562, %v565
        %vm567 = vcmp.lt.s32.totalorder %v566, 0
        %v568 = vsub.s32 0, %v566
        %v569 = vsel %vm567, %v568, %v566
        %v570 = vclz %v569
        %v571 = vsub.s32 %v570, 2
        %vm572 = vcmp.gt.s32.totalorder 0, %v571
        %v573 = vsel %vm572, 0, %v571
        %v574 = vsub.s32 32, %v573
        %v575 = vshll.u32 %v566, %v573
        %v576 = vshrl.u32 %v558, %v574
        %v577 = vor.u32 %v575, %v576
        %v578 = vsub.s32 4294967266, %v573
        %v579 = vadd.s32 %v578, 127
        %v580 = vshll.u32 %v579, 23
        %v581 = vor.u32 4788187, %v580
        %v582 = vand.u32 2147483647, %v581
        %v584 = vcvt.s32.f32 %v577
        %v585 = vmul.f32 %v584, %v582
        %v586 = vxor.u32 %v585, 2147483648
        %v587 = vsel %vm504, %v586, %v585
        %v588 = vsub.s32 4, %v564
        %v589 = vsel %vm504, %v588, %v564
        %v590 = vsel %vm503, %v383, %v587
        %v591 = vsel %vm503, 0, %v589
        %v592 = vcosq.f32.pop %v590
        %v593 = vsinq.f32.pop %v590
        %vm594 = vweird.f32 %v383
        %v595 = vadd.s32 %v591, 3
        %v596 = vand.u32 %v595, 3
        %vm597 = vcmp.lt.s32.totalorder %v596, 2
        %vm598 = vcmp.eq.s32.totalorder %v596, 0
        %v599 = vxor.u32 %v593, 2147483648
        %v600 = vsel %vm598, %v592, %v599
        %vm601 = vcmp.eq.s32.totalorder %v596, 2
        %v602 = vxor.u32 %v592, 2147483648
        %v603 = vsel %vm601, %v602, %v593
        %v604 = vsel %vm597, %v600, %v603
        %v605 = vsel %vm594, nan, %v604
        %v606 = vand.u32 2147483647, %v384
        %vm607 = vcmp.le.f32.partialorder %v606, 0.7853982
        %vm608 = vcmp.lt.s32.totalorder %v384, 0
        %v609 = vand.u32 %v384, 2139095040
        %v610 = vshrl.u32 %v609, 23
        %v611 = vsub.s32 %v610, 127
        %v612 = vand.u32 2147483647, %v384
        %v613 = vand.u32 %v612, 8388607
        %v614 = vor.u32 %v613, 8388608
        %v615 = vsub.s32 0, %v614
        %v616 = vadd.s32 %v611, 1
        %vm617 = vcmp.gt.s32.totalorder %v616, 0
        %v618 = vsel %vm617, %v616, 0
        %v619 = vshrl.u32 %v618, 5
        %v620 = vand.u32 %v618, 31
        %v621 = vsub.s32 32, %v620
        %v622 = vshrl.u32 683565275, %v621
        %v623 = vshll.u32 683565275, %v620
        %v624 = vshrl.u32 2475754826, %v621
        %v625 = vor.u32 %v623, %v624
        %v626 = vshll.u32 2475754826, %v620
        %v627 = vshrl.u32 2131351028, %v621
        %v628 = vor.u32 %v626, %v627
        %v629 = vshll.u32 2131351028, %v620
        %v630 = vshrl.u32 2102212464, %v621
        %v631 = vor.u32 %v629, %v630
        %v632 = vshll.u32 2102212464, %v620
        %v633 = vshrl.u32 920167782, %v621
        %v634 = vor.u32 %v632, %v633
        %v635 = vshll.u32 920167782, %v620
        %v636 = vshrl.u32 1326507024, %v621
        %v637 = vor.u32 %v635, %v636
        %vm638 = vcmp.lt.s32.totalorder %v619, 1
        %vm639 = vcmp.lt.s32.totalorder %v619, 2
        %vm640 = vcmp.lt.s32.totalorder %v619, 3
        %vm641 = vcmp.lt.s32.totalorder %v619, 4
        %v642 = vsel %vm638, %v622, %v625
        %v643 = vsel %vm641, %v631, 2102212464
        %v644 = vsel %vm640, %v628, %v643
        %v645 = vsel %vm639, %v642, %v644
        %v646 = vsel %vm638, %v625, %v628
        %v647 = vsel %vm641, %v634, 920167782
        %v648 = vsel %vm640, %v631, %v647
        %v649 = vsel %vm639, %v646, %v648
        %v650 = vsel %vm638, %v628, %v631
        %v651 = vsel %vm641, %v637, 1326507024
        %v652 = vsel %vm640, %v634, %v651
        %v653 = vsel %vm639, %v650, %v652
        %v654 = vshll.u32 %v614, 8
        %v655 = vmul.u32.u64.compose %v654, %v653
        %v656 = vextract.low.u32 %v655
        %v657 = vextract.high.u32 %v655
        %v658 = vmul.u32.u64.compose %v654, %v649
        %v659 = vextract.low.u32 %v658
        %v660 = vextract.high.u32 %v658
        %v661 = vmul.u32 %v654, %v645
        %v662 = vadd.s32 %v657, %v659
        %vm663 = vc.u32 %v657, %v659
        %v664 = vadd.s32 %v660, 1
        %v665 = vsel %vm663, %v664, %v660
        %v666 = vadd.s32 %v661, %v665
        %v667 = vadd.s32 %v666, 536870912
        %v668 = vshrl.u32 %v667, 30
        %v669 = vshll.u32 %v668, 30
        %v670 = vsub.s32 %v666, %v669
        %vm671 = vcmp.lt.s32.totalorder %v670, 0
        %v672 = vsub.s32 0, %v670
        %v673 = vsel %vm671, %v672, %v670
        %v674 = vclz %v673
        %v675 = vsub.s32 %v674, 2
        %vm676 = vcmp.gt.s32.totalorder 0, %v675
        %v677 = vsel %vm676, 0, %v675
        %v678 = vsub.s32 32, %v677
        %v679 = vshll.u32 %v670, %v677
        %v680 = vshrl.u32 %v662, %v678
        %v681 = vor.u32 %v679, %v680
        %v682 = vsub.s32 4294967266, %v677
        %v683 = vadd.s32 %v682, 127
        %v684 = vshll.u32 %v683, 23
        %v685 = vor.u32 4788187, %v684
        %v686 = vand.u32 2147483647, %v685
        %v688 = vcvt.s32.f32 %v681
        %v689 = vmul.f32 %v688, %v686
        %v690 = vxor.u32 %v689, 2147483648
        %v691 = vsel %vm608, %v690, %v689
        %v692 = vsub.s32 4, %v668
        %v693 = vsel %vm608, %v692, %v668
        %v694 = vsel %vm607, %v384, %v691
        %v695 = vsel %vm607, 0, %v693
        %v696 = vcosq.f32.pop %v694
        %v697 = vsinq.f32.pop %v694
        %vm698 = vweird.f32 %v384
        %v699 = vadd.s32 %v695, 3
        %v700 = vand.u32 %v699, 3
        %vm701 = vcmp.lt.s32.totalorder %v700, 2
        %vm702 = vcmp.eq.s32.totalorder %v700, 0
        %v703 = vxor.u32 %v697, 2147483648
        %v704 = vsel %vm702, %v696, %v703
        %vm705 = vcmp.eq.s32.totalorder %v700, 2
        %v706 = vxor.u32 %v696, 2147483648
        %v707 = vsel %vm705, %v706, %v697
        %v708 = vsel %vm701, %v704, %v707
        %v709 = vsel %vm698, nan, %v708
        %v710 = vand.u32 2147483647, %v385
        %vm711 = vcmp.le.f32.partialorder %v710, 0.7853982
        %vm712 = vcmp.lt.s32.totalorder %v385, 0
        %v713 = vand.u32 %v385, 2139095040
        %v714 = vshrl.u32 %v713, 23
        %v715 = vsub.s32 %v714, 127
        %v716 = vand.u32 2147483647, %v385
        %v717 = vand.u32 %v716, 8388607
        %v718 = vor.u32 %v717, 8388608
        %v719 = vsub.s32 0, %v718
        %v720 = vadd.s32 %v715, 1
        %vm721 = vcmp.gt.s32.totalorder %v720, 0
        %v722 = vsel %vm721, %v720, 0
        %v723 = vshrl.u32 %v722, 5
        %v724 = vand.u32 %v722, 31
        %v725 = vsub.s32 32, %v724
        %v726 = vshrl.u32 683565275, %v725
        %v727 = vshll.u32 683565275, %v724
        %v728 = vshrl.u32 2475754826, %v725
        %v729 = vor.u32 %v727, %v728
        %v730 = vshll.u32 2475754826, %v724
        %v731 = vshrl.u32 2131351028, %v725
        %v732 = vor.u32 %v730, %v731
        %v733 = vshll.u32 2131351028, %v724
        %v734 = vshrl.u32 2102212464, %v725
        %v735 = vor.u32 %v733, %v734
        %v736 = vshll.u32 2102212464, %v724
        %v737 = vshrl.u32 920167782, %v725
        %v738 = vor.u32 %v736, %v737
        %v739 = vshll.u32 920167782, %v724
        %v740 = vshrl.u32 1326507024, %v725
        %v741 = vor.u32 %v739, %v740
        %vm742 = vcmp.lt.s32.totalorder %v723, 1
        %vm743 = vcmp.lt.s32.totalorder %v723, 2
        %vm744 = vcmp.lt.s32.totalorder %v723, 3
        %vm745 = vcmp.lt.s32.totalorder %v723, 4
        %v746 = vsel %vm742, %v726, %v729
        %v747 = vsel %vm745, %v735, 2102212464
        %v748 = vsel %vm744, %v732, %v747
        %v749 = vsel %vm743, %v746, %v748
        %v750 = vsel %vm742, %v729, %v732
        %v751 = vsel %vm745, %v738, 920167782
        %v752 = vsel %vm744, %v735, %v751
        %v753 = vsel %vm743, %v750, %v752
        %v754 = vsel %vm742, %v732, %v735
        %v755 = vsel %vm745, %v741, 1326507024
        %v756 = vsel %vm744, %v738, %v755
        %v757 = vsel %vm743, %v754, %v756
        %v758 = vshll.u32 %v718, 8
        %v759 = vmul.u32.u64.compose %v758, %v757
        %v760 = vextract.low.u32 %v759
        %v761 = vextract.high.u32 %v759
        %v762 = vmul.u32.u64.compose %v758, %v753
        %v763 = vextract.low.u32 %v762
        %v764 = vextract.high.u32 %v762
        %v765 = vmul.u32 %v758, %v749
        %v766 = vadd.s32 %v761, %v763
        %vm767 = vc.u32 %v761, %v763
        %v768 = vadd.s32 %v764, 1
        %v769 = vsel %vm767, %v768, %v764
        %v770 = vadd.s32 %v765, %v769
        %v771 = vadd.s32 %v770, 536870912
        %v772 = vshrl.u32 %v771, 30
        %v773 = vshll.u32 %v772, 30
        %v774 = vsub.s32 %v770, %v773
        %vm775 = vcmp.lt.s32.totalorder %v774, 0
        %v776 = vsub.s32 0, %v774
        %v777 = vsel %vm775, %v776, %v774
        %v778 = vclz %v777
        %v779 = vsub.s32 %v778, 2
        %vm780 = vcmp.gt.s32.totalorder 0, %v779
        %v781 = vsel %vm780, 0, %v779
        %v782 = vsub.s32 32, %v781
        %v783 = vshll.u32 %v774, %v781
        %v784 = vshrl.u32 %v766, %v782
        %v785 = vor.u32 %v783, %v784
        %v786 = vsub.s32 4294967266, %v781
        %v787 = vadd.s32 %v786, 127
        %v788 = vshll.u32 %v787, 23
        %v789 = vor.u32 4788187, %v788
        %v790 = vand.u32 2147483647, %v789
        %v792 = vcvt.s32.f32 %v785
        %v793 = vmul.f32 %v792, %v790
        %v794 = vxor.u32 %v793, 2147483648
        %v795 = vsel %vm712, %v794, %v793
        %v796 = vsub.s32 4, %v772
        %v797 = vsel %vm712, %v796, %v772
        %v798 = vsel %vm711, %v385, %v795
        %v799 = vsel %vm711, 0, %v797
        %v800 = vcosq.f32.pop %v798
        %v801 = vsinq.f32.pop %v798
        %vm802 = vweird.f32 %v385
        %v803 = vadd.s32 %v799, 3
        %v804 = vand.u32 %v803, 3
        %vm805 = vcmp.lt.s32.totalorder %v804, 2
        %vm806 = vcmp.eq.s32.totalorder %v804, 0
        %v807 = vxor.u32 %v801, 2147483648
        %v808 = vsel %vm806, %v800, %v807
        %vm809 = vcmp.eq.s32.totalorder %v804, 2
        %v810 = vxor.u32 %v800, 2147483648
        %v811 = vsel %vm809, %v810, %v801
        %v812 = vsel %vm805, %v808, %v811
        %v813 = vsel %vm802, nan, %v812
        %v814 = vand.u32 2147483647, %v386
        %vm815 = vcmp.le.f32.partialorder %v814, 0.7853982
        %vm816 = vcmp.lt.s32.totalorder %v386, 0
        %v817 = vand.u32 %v386, 2139095040
        %v818 = vshrl.u32 %v817, 23
        %v819 = vsub.s32 %v818, 127
        %v820 = vand.u32 2147483647, %v386
        %v821 = vand.u32 %v820, 8388607
        %v822 = vor.u32 %v821, 8388608
        %v823 = vsub.s32 0, %v822
        %v824 = vadd.s32 %v819, 1
        %vm825 = vcmp.gt.s32.totalorder %v824, 0
        %v826 = vsel %vm825, %v824, 0
        %v827 = vshrl.u32 %v826, 5
        %v828 = vand.u32 %v826, 31
        %v829 = vsub.s32 32, %v828
        %v830 = vshrl.u32 683565275, %v829
        %v831 = vshll.u32 683565275, %v828
        %v832 = vshrl.u32 2475754826, %v829
        %v833 = vor.u32 %v831, %v832
        %v834 = vshll.u32 2475754826, %v828
        %v835 = vshrl.u32 2131351028, %v829
        %v836 = vor.u32 %v834, %v835
        %v837 = vshll.u32 2131351028, %v828
        %v838 = vshrl.u32 2102212464, %v829
        %v839 = vor.u32 %v837, %v838
        %v840 = vshll.u32 2102212464, %v828
        %v841 = vshrl.u32 920167782, %v829
        %v842 = vor.u32 %v840, %v841
        %v843 = vshll.u32 920167782, %v828
        %v844 = vshrl.u32 1326507024, %v829
        %v845 = vor.u32 %v843, %v844
        %vm846 = vcmp.lt.s32.totalorder %v827, 1
        %vm847 = vcmp.lt.s32.totalorder %v827, 2
        %vm848 = vcmp.lt.s32.totalorder %v827, 3
        %vm849 = vcmp.lt.s32.totalorder %v827, 4
        %v850 = vsel %vm846, %v830, %v833
        %v851 = vsel %vm849, %v839, 2102212464
        %v852 = vsel %vm848, %v836, %v851
        %v853 = vsel %vm847, %v850, %v852
        %v854 = vsel %vm846, %v833, %v836
        %v855 = vsel %vm849, %v842, 920167782
        %v856 = vsel %vm848, %v839, %v855
        %v857 = vsel %vm847, %v854, %v856
        %v858 = vsel %vm846, %v836, %v839
        %v859 = vsel %vm849, %v845, 1326507024
        %v860 = vsel %vm848, %v842, %v859
        %v861 = vsel %vm847, %v858, %v860
        %v862 = vshll.u32 %v822, 8
        %v863 = vmul.u32.u64.compose %v862, %v861
        %v864 = vextract.low.u32 %v863
        %v865 = vextract.high.u32 %v863
        %v866 = vmul.u32.u64.compose %v862, %v857
        %v867 = vextract.low.u32 %v866
        %v868 = vextract.high.u32 %v866
        %v869 = vmul.u32 %v862, %v853
        %v870 = vadd.s32 %v865, %v867
        %vm871 = vc.u32 %v865, %v867
        %v872 = vadd.s32 %v868, 1
        %v873 = vsel %vm871, %v872, %v868
        %v874 = vadd.s32 %v869, %v873
        %v875 = vadd.s32 %v874, 536870912
        %v876 = vshrl.u32 %v875, 30
        %v877 = vshll.u32 %v876, 30
        %v878 = vsub.s32 %v874, %v877
        %vm879 = vcmp.lt.s32.totalorder %v878, 0
        %v880 = vsub.s32 0, %v878
        %v881 = vsel %vm879, %v880, %v878
        %v882 = vclz %v881
        %v883 = vsub.s32 %v882, 2
        %vm884 = vcmp.gt.s32.totalorder 0, %v883
        %v885 = vsel %vm884, 0, %v883
        %v886 = vsub.s32 32, %v885
        %v887 = vshll.u32 %v878, %v885
        %v888 = vshrl.u32 %v870, %v886
        %v889 = vor.u32 %v887, %v888
        %v890 = vsub.s32 4294967266, %v885
        %v891 = vadd.s32 %v890, 127
        %v892 = vshll.u32 %v891, 23
        %v893 = vor.u32 4788187, %v892
        %v894 = vand.u32 2147483647, %v893
        %v896 = vcvt.s32.f32 %v889
        %v897 = vmul.f32 %v896, %v894
        %v898 = vxor.u32 %v897, 2147483648
        %v899 = vsel %vm816, %v898, %v897
        %v900 = vsub.s32 4, %v876
        %v901 = vsel %vm816, %v900, %v876
        %v902 = vsel %vm815, %v386, %v899
        %v903 = vsel %vm815, 0, %v901
        %v904 = vcosq.f32.pop %v902
        %v905 = vsinq.f32.pop %v902
        %vm906 = vweird.f32 %v386
        %v907 = vadd.s32 %v903, 3
        %v908 = vand.u32 %v907, 3
        %vm909 = vcmp.lt.s32.totalorder %v908, 2
        %vm910 = vcmp.eq.s32.totalorder %v908, 0
        %v911 = vxor.u32 %v905, 2147483648
        %v912 = vsel %vm910, %v904, %v911
        %vm913 = vcmp.eq.s32.totalorder %v908, 2
        %v914 = vxor.u32 %v904, 2147483648
        %v915 = vsel %vm913, %v914, %v905
        %v916 = vsel %vm909, %v912, %v915
        %v917 = vsel %vm906, nan, %v916
        %v918 = vand.u32 2147483647, %v387
        %vm919 = vcmp.le.f32.partialorder %v918, 0.7853982
        %vm920 = vcmp.lt.s32.totalorder %v387, 0
        %v921 = vand.u32 %v387, 2139095040
        %v922 = vshrl.u32 %v921, 23
        %v923 = vsub.s32 %v922, 127
        %v924 = vand.u32 2147483647, %v387
        %v925 = vand.u32 %v924, 8388607
        %v926 = vor.u32 %v925, 8388608
        %v927 = vsub.s32 0, %v926
        %v928 = vadd.s32 %v923, 1
        %vm929 = vcmp.gt.s32.totalorder %v928, 0
        %v930 = vsel %vm929, %v928, 0
        %v931 = vshrl.u32 %v930, 5
        %v932 = vand.u32 %v930, 31
        %v933 = vsub.s32 32, %v932
        %v934 = vshrl.u32 683565275, %v933
        %v935 = vshll.u32 683565275, %v932
        %v936 = vshrl.u32 2475754826, %v933
        %v937 = vor.u32 %v935, %v936
        %v938 = vshll.u32 2475754826, %v932
        %v939 = vshrl.u32 2131351028, %v933
        %v940 = vor.u32 %v938, %v939
        %v941 = vshll.u32 2131351028, %v932
        %v942 = vshrl.u32 2102212464, %v933
        %v943 = vor.u32 %v941, %v942
        %v944 = vshll.u32 2102212464, %v932
        %v945 = vshrl.u32 920167782, %v933
        %v946 = vor.u32 %v944, %v945
        %v947 = vshll.u32 920167782, %v932
        %v948 = vshrl.u32 1326507024, %v933
        %v949 = vor.u32 %v947, %v948
        %vm950 = vcmp.lt.s32.totalorder %v931, 1
        %vm951 = vcmp.lt.s32.totalorder %v931, 2
        %vm952 = vcmp.lt.s32.totalorder %v931, 3
        %vm953 = vcmp.lt.s32.totalorder %v931, 4
        %v954 = vsel %vm950, %v934, %v937
        %v955 = vsel %vm953, %v943, 2102212464
        %v956 = vsel %vm952, %v940, %v955
        %v957 = vsel %vm951, %v954, %v956
        %v958 = vsel %vm950, %v937, %v940
        %v959 = vsel %vm953, %v946, 920167782
        %v960 = vsel %vm952, %v943, %v959
        %v961 = vsel %vm951, %v958, %v960
        %v962 = vsel %vm950, %v940, %v943
        %v963 = vsel %vm953, %v949, 1326507024
        %v964 = vsel %vm952, %v946, %v963
        %v965 = vsel %vm951, %v962, %v964
        %v966 = vshll.u32 %v926, 8
        %v967 = vmul.u32.u64.compose %v966, %v965
        %v968 = vextract.low.u32 %v967
        %v969 = vextract.high.u32 %v967
        %v970 = vmul.u32.u64.compose %v966, %v961
        %v971 = vextract.low.u32 %v970
        %v972 = vextract.high.u32 %v970
        %v973 = vmul.u32 %v966, %v957
        %v974 = vadd.s32 %v969, %v971
        %vm975 = vc.u32 %v969, %v971
        %v976 = vadd.s32 %v972, 1
        %v977 = vsel %vm975, %v976, %v972
        %v978 = vadd.s32 %v973, %v977
        %v979 = vadd.s32 %v978, 536870912
        %v980 = vshrl.u32 %v979, 30
        %v981 = vshll.u32 %v980, 30
        %v982 = vsub.s32 %v978, %v981
        %vm983 = vcmp.lt.s32.totalorder %v982, 0
        %v984 = vsub.s32 0, %v982
        %v985 = vsel %vm983, %v984, %v982
        %v986 = vclz %v985
        %v987 = vsub.s32 %v986, 2
        %vm988 = vcmp.gt.s32.totalorder 0, %v987
        %v989 = vsel %vm988, 0, %v987
        %v990 = vsub.s32 32, %v989
        %v991 = vshll.u32 %v982, %v989
        %v992 = vshrl.u32 %v974, %v990
        %v993 = vor.u32 %v991, %v992
        %v994 = vsub.s32 4294967266, %v989
        %v995 = vadd.s32 %v994, 127
        %v996 = vshll.u32 %v995, 23
        %v997 = vor.u32 4788187, %v996
        %v998 = vand.u32 2147483647, %v997
        %v1000 = vcvt.s32.f32 %v993
        %v1001 = vmul.f32 %v1000, %v998
        %v1002 = vxor.u32 %v1001, 2147483648
        %v1003 = vsel %vm920, %v1002, %v1001
        %v1004 = vsub.s32 4, %v980
        %v1005 = vsel %vm920, %v1004, %v980
        %v1006 = vsel %vm919, %v387, %v1003
        %v1007 = vsel %vm919, 0, %v1005
        %v1008 = vcosq.f32.pop %v1006
        %v1009 = vsinq.f32.pop %v1006
        %vm1010 = vweird.f32 %v387
        %v1011 = vadd.s32 %v1007, 3
        %v1012 = vand.u32 %v1011, 3
        %vm1013 = vcmp.lt.s32.totalorder %v1012, 2
        %vm1014 = vcmp.eq.s32.totalorder %v1012, 0
        %v1015 = vxor.u32 %v1009, 2147483648
        %v1016 = vsel %vm1014, %v1008, %v1015
        %vm1017 = vcmp.eq.s32.totalorder %v1012, 2
        %v1018 = vxor.u32 %v1008, 2147483648
        %v1019 = vsel %vm1017, %v1018, %v1009
        %v1020 = vsel %vm1013, %v1016, %v1019
        %v1021 = vsel %vm1010, nan, %v1020
        %v1022 = vand.u32 2147483647, %v388
        %vm1023 = vcmp.le.f32.partialorder %v1022, 0.7853982
        %vm1024 = vcmp.lt.s32.totalorder %v388, 0
        %v1025 = vand.u32 %v388, 2139095040
        %v1026 = vshrl.u32 %v1025, 23
        %v1027 = vsub.s32 %v1026, 127
        %v1028 = vand.u32 2147483647, %v388
        %v1029 = vand.u32 %v1028, 8388607
        %v1030 = vor.u32 %v1029, 8388608
        %v1031 = vsub.s32 0, %v1030
        %v1032 = vadd.s32 %v1027, 1
        %vm1033 = vcmp.gt.s32.totalorder %v1032, 0
        %v1034 = vsel %vm1033, %v1032, 0
        %v1035 = vshrl.u32 %v1034, 5
        %v1036 = vand.u32 %v1034, 31
        %v1037 = vsub.s32 32, %v1036
        %v1038 = vshrl.u32 683565275, %v1037
        %v1039 = vshll.u32 683565275, %v1036
        %v1040 = vshrl.u32 2475754826, %v1037
        %v1041 = vor.u32 %v1039, %v1040
        %v1042 = vshll.u32 2475754826, %v1036
        %v1043 = vshrl.u32 2131351028, %v1037
        %v1044 = vor.u32 %v1042, %v1043
        %v1045 = vshll.u32 2131351028, %v1036
        %v1046 = vshrl.u32 2102212464, %v1037
        %v1047 = vor.u32 %v1045, %v1046
        %v1048 = vshll.u32 2102212464, %v1036
        %v1049 = vshrl.u32 920167782, %v1037
        %v1050 = vor.u32 %v1048, %v1049
        %v1051 = vshll.u32 920167782, %v1036
        %v1052 = vshrl.u32 1326507024, %v1037
        %v1053 = vor.u32 %v1051, %v1052
        %vm1054 = vcmp.lt.s32.totalorder %v1035, 1
        %vm1055 = vcmp.lt.s32.totalorder %v1035, 2
        %vm1056 = vcmp.lt.s32.totalorder %v1035, 3
        %vm1057 = vcmp.lt.s32.totalorder %v1035, 4
        %v1058 = vsel %vm1054, %v1038, %v1041
        %v1059 = vsel %vm1057, %v1047, 2102212464
        %v1060 = vsel %vm1056, %v1044, %v1059
        %v1061 = vsel %vm1055, %v1058, %v1060
        %v1062 = vsel %vm1054, %v1041, %v1044
        %v1063 = vsel %vm1057, %v1050, 920167782
        %v1064 = vsel %vm1056, %v1047, %v1063
        %v1065 = vsel %vm1055, %v1062, %v1064
        %v1066 = vsel %vm1054, %v1044, %v1047
        %v1067 = vsel %vm1057, %v1053, 1326507024
        %v1068 = vsel %vm1056, %v1050, %v1067
        %v1069 = vsel %vm1055, %v1066, %v1068
        %v1070 = vshll.u32 %v1030, 8
        %v1071 = vmul.u32.u64.compose %v1070, %v1069
        %v1072 = vextract.low.u32 %v1071
        %v1073 = vextract.high.u32 %v1071
        %v1074 = vmul.u32.u64.compose %v1070, %v1065
        %v1075 = vextract.low.u32 %v1074
        %v1076 = vextract.high.u32 %v1074
        %v1077 = vmul.u32 %v1070, %v1061
        %v1078 = vadd.s32 %v1073, %v1075
        %vm1079 = vc.u32 %v1073, %v1075
        %v1080 = vadd.s32 %v1076, 1
        %v1081 = vsel %vm1079, %v1080, %v1076
        %v1082 = vadd.s32 %v1077, %v1081
        %v1083 = vadd.s32 %v1082, 536870912
        %v1084 = vshrl.u32 %v1083, 30
        %v1085 = vshll.u32 %v1084, 30
        %v1086 = vsub.s32 %v1082, %v1085
        %vm1087 = vcmp.lt.s32.totalorder %v1086, 0
        %v1088 = vsub.s32 0, %v1086
        %v1089 = vsel %vm1087, %v1088, %v1086
        %v1090 = vclz %v1089
        %v1091 = vsub.s32 %v1090, 2
        %vm1092 = vcmp.gt.s32.totalorder 0, %v1091
        %v1093 = vsel %vm1092, 0, %v1091
        %v1094 = vsub.s32 32, %v1093
        %v1095 = vshll.u32 %v1086, %v1093
        %v1096 = vshrl.u32 %v1078, %v1094
        %v1097 = vor.u32 %v1095, %v1096
        %v1098 = vsub.s32 4294967266, %v1093
        %v1099 = vadd.s32 %v1098, 127
        %v1100 = vshll.u32 %v1099, 23
        %v1101 = vor.u32 4788187, %v1100
        %v1102 = vand.u32 2147483647, %v1101
        %v1104 = vcvt.s32.f32 %v1097
        %v1105 = vmul.f32 %v1104, %v1102
        %v1106 = vxor.u32 %v1105, 2147483648
        %v1107 = vsel %vm1024, %v1106, %v1105
        %v1108 = vsub.s32 4, %v1084
        %v1109 = vsel %vm1024, %v1108, %v1084
        %v1110 = vsel %vm1023, %v388, %v1107
        %v1111 = vsel %vm1023, 0, %v1109
        %v1112 = vcosq.f32.pop %v1110
        %v1113 = vsinq.f32.pop %v1110
        %vm1114 = vweird.f32 %v388
        %v1115 = vadd.s32 %v1111, 3
        %v1116 = vand.u32 %v1115, 3
        %vm1117 = vcmp.lt.s32.totalorder %v1116, 2
        %vm1118 = vcmp.eq.s32.totalorder %v1116, 0
        %v1119 = vxor.u32 %v1113, 2147483648
        %v1120 = vsel %vm1118, %v1112, %v1119
        %vm1121 = vcmp.eq.s32.totalorder %v1116, 2
        %v1122 = vxor.u32 %v1112, 2147483648
        %v1123 = vsel %vm1121, %v1122, %v1113
        %v1124 = vsel %vm1117, %v1120, %v1123
        %v1125 = vsel %vm1114, nan, %v1124
        %v1126 = vand.u32 2147483647, %v389
        %vm1127 = vcmp.le.f32.partialorder %v1126, 0.7853982
        %vm1128 = vcmp.lt.s32.totalorder %v389, 0
        %v1129 = vand.u32 %v389, 2139095040
        %v1130 = vshrl.u32 %v1129, 23
        %v1131 = vsub.s32 %v1130, 127
        %v1132 = vand.u32 2147483647, %v389
        %v1133 = vand.u32 %v1132, 8388607
        %v1134 = vor.u32 %v1133, 8388608
        %v1135 = vsub.s32 0, %v1134
        %v1136 = vadd.s32 %v1131, 1
        %vm1137 = vcmp.gt.s32.totalorder %v1136, 0
        %v1138 = vsel %vm1137, %v1136, 0
        %v1139 = vshrl.u32 %v1138, 5
        %v1140 = vand.u32 %v1138, 31
        %v1141 = vsub.s32 32, %v1140
        %v1142 = vshrl.u32 683565275, %v1141
        %v1143 = vshll.u32 683565275, %v1140
        %v1144 = vshrl.u32 2475754826, %v1141
        %v1145 = vor.u32 %v1143, %v1144
        %v1146 = vshll.u32 2475754826, %v1140
        %v1147 = vshrl.u32 2131351028, %v1141
        %v1148 = vor.u32 %v1146, %v1147
        %v1149 = vshll.u32 2131351028, %v1140
        %v1150 = vshrl.u32 2102212464, %v1141
        %v1151 = vor.u32 %v1149, %v1150
        %v1152 = vshll.u32 2102212464, %v1140
        %v1153 = vshrl.u32 920167782, %v1141
        %v1154 = vor.u32 %v1152, %v1153
        %v1155 = vshll.u32 920167782, %v1140
        %v1156 = vshrl.u32 1326507024, %v1141
        %v1157 = vor.u32 %v1155, %v1156
        %vm1158 = vcmp.lt.s32.totalorder %v1139, 1
        %vm1159 = vcmp.lt.s32.totalorder %v1139, 2
        %vm1160 = vcmp.lt.s32.totalorder %v1139, 3
        %vm1161 = vcmp.lt.s32.totalorder %v1139, 4
        %v1162 = vsel %vm1158, %v1142, %v1145
        %v1163 = vsel %vm1161, %v1151, 2102212464
        %v1164 = vsel %vm1160, %v1148, %v1163
        %v1165 = vsel %vm1159, %v1162, %v1164
        %v1166 = vsel %vm1158, %v1145, %v1148
        %v1167 = vsel %vm1161, %v1154, 920167782
        %v1168 = vsel %vm1160, %v1151, %v1167
        %v1169 = vsel %vm1159, %v1166, %v1168
        %v1170 = vsel %vm1158, %v1148, %v1151
        %v1171 = vsel %vm1161, %v1157, 1326507024
        %v1172 = vsel %vm1160, %v1154, %v1171
        %v1173 = vsel %vm1159, %v1170, %v1172
        %v1174 = vshll.u32 %v1134, 8
        %v1175 = vmul.u32.u64.compose %v1174, %v1173
        %v1176 = vextract.low.u32 %v1175
        %v1177 = vextract.high.u32 %v1175
        %v1178 = vmul.u32.u64.compose %v1174, %v1169
        %v1179 = vextract.low.u32 %v1178
        %v1180 = vextract.high.u32 %v1178
        %v1181 = vmul.u32 %v1174, %v1165
        %v1182 = vadd.s32 %v1177, %v1179
        %vm1183 = vc.u32 %v1177, %v1179
        %v1184 = vadd.s32 %v1180, 1
        %v1185 = vsel %vm1183, %v1184, %v1180
        %v1186 = vadd.s32 %v1181, %v1185
        %v1187 = vadd.s32 %v1186, 536870912
        %v1188 = vshrl.u32 %v1187, 30
        %v1189 = vshll.u32 %v1188, 30
        %v1190 = vsub.s32 %v1186, %v1189
        %vm1191 = vcmp.lt.s32.totalorder %v1190, 0
        %v1192 = vsub.s32 0, %v1190
        %v1193 = vsel %vm1191, %v1192, %v1190
        %v1194 = vclz %v1193
        %v1195 = vsub.s32 %v1194, 2
        %vm1196 = vcmp.gt.s32.totalorder 0, %v1195
        %v1197 = vsel %vm1196, 0, %v1195
        %v1198 = vsub.s32 32, %v1197
        %v1199 = vshll.u32 %v1190, %v1197
        %v1200 = vshrl.u32 %v1182, %v1198
        %v1201 = vor.u32 %v1199, %v1200
        %v1202 = vsub.s32 4294967266, %v1197
        %v1203 = vadd.s32 %v1202, 127
        %v1204 = vshll.u32 %v1203, 23
        %v1205 = vor.u32 4788187, %v1204
        %v1206 = vand.u32 2147483647, %v1205
        %v1208 = vcvt.s32.f32 %v1201
        %v1209 = vmul.f32 %v1208, %v1206
        %v1210 = vxor.u32 %v1209, 2147483648
        %v1211 = vsel %vm1128, %v1210, %v1209
        %v1212 = vsub.s32 4, %v1188
        %v1213 = vsel %vm1128, %v1212, %v1188
        %v1214 = vsel %vm1127, %v389, %v1211
        %v1215 = vsel %vm1127, 0, %v1213
        %v1216 = vcosq.f32.pop %v1214
        %v1217 = vsinq.f32.pop %v1214
        %vm1218 = vweird.f32 %v389
        %v1219 = vadd.s32 %v1215, 3
        %v1220 = vand.u32 %v1219, 3
        %vm1221 = vcmp.lt.s32.totalorder %v1220, 2
        %vm1222 = vcmp.eq.s32.totalorder %v1220, 0
        %v1223 = vxor.u32 %v1217, 2147483648
        %v1224 = vsel %vm1222, %v1216, %v1223
        %vm1225 = vcmp.eq.s32.totalorder %v1220, 2
        %v1226 = vxor.u32 %v1216, 2147483648
        %v1227 = vsel %vm1225, %v1226, %v1217
        %v1228 = vsel %vm1221, %v1224, %v1227
        %v1229 = vsel %vm1218, nan, %v1228
        %v1230 = vand.u32 2147483647, %v390
        %vm1231 = vcmp.le.f32.partialorder %v1230, 0.7853982
        %vm1232 = vcmp.lt.s32.totalorder %v390, 0
        %v1233 = vand.u32 %v390, 2139095040
        %v1234 = vshrl.u32 %v1233, 23
        %v1235 = vsub.s32 %v1234, 127
        %v1236 = vand.u32 2147483647, %v390
        %v1237 = vand.u32 %v1236, 8388607
        %v1238 = vor.u32 %v1237, 8388608
        %v1239 = vsub.s32 0, %v1238
        %v1240 = vadd.s32 %v1235, 1
        %vm1241 = vcmp.gt.s32.totalorder %v1240, 0
        %v1242 = vsel %vm1241, %v1240, 0
        %v1243 = vshrl.u32 %v1242, 5
        %v1244 = vand.u32 %v1242, 31
        %v1245 = vsub.s32 32, %v1244
        %v1246 = vshrl.u32 683565275, %v1245
        %v1247 = vshll.u32 683565275, %v1244
        %v1248 = vshrl.u32 2475754826, %v1245
        %v1249 = vor.u32 %v1247, %v1248
        %v1250 = vshll.u32 2475754826, %v1244
        %v1251 = vshrl.u32 2131351028, %v1245
        %v1252 = vor.u32 %v1250, %v1251
        %v1253 = vshll.u32 2131351028, %v1244
        %v1254 = vshrl.u32 2102212464, %v1245
        %v1255 = vor.u32 %v1253, %v1254
        %v1256 = vshll.u32 2102212464, %v1244
        %v1257 = vshrl.u32 920167782, %v1245
        %v1258 = vor.u32 %v1256, %v1257
        %v1259 = vshll.u32 920167782, %v1244
        %v1260 = vshrl.u32 1326507024, %v1245
        %v1261 = vor.u32 %v1259, %v1260
        %vm1262 = vcmp.lt.s32.totalorder %v1243, 1
        %vm1263 = vcmp.lt.s32.totalorder %v1243, 2
        %vm1264 = vcmp.lt.s32.totalorder %v1243, 3
        %vm1265 = vcmp.lt.s32.totalorder %v1243, 4
        %v1266 = vsel %vm1262, %v1246, %v1249
        %v1267 = vsel %vm1265, %v1255, 2102212464
        %v1268 = vsel %vm1264, %v1252, %v1267
        %v1269 = vsel %vm1263, %v1266, %v1268
        %v1270 = vsel %vm1262, %v1249, %v1252
        %v1271 = vsel %vm1265, %v1258, 920167782
        %v1272 = vsel %vm1264, %v1255, %v1271
        %v1273 = vsel %vm1263, %v1270, %v1272
        %v1274 = vsel %vm1262, %v1252, %v1255
        %v1275 = vsel %vm1265, %v1261, 1326507024
        %v1276 = vsel %vm1264, %v1258, %v1275
        %v1277 = vsel %vm1263, %v1274, %v1276
        %v1278 = vshll.u32 %v1238, 8
        %v1279 = vmul.u32.u64.compose %v1278, %v1277
        %v1280 = vextract.low.u32 %v1279
        %v1281 = vextract.high.u32 %v1279
        %v1282 = vmul.u32.u64.compose %v1278, %v1273
        %v1283 = vextract.low.u32 %v1282
        %v1284 = vextract.high.u32 %v1282
        %v1285 = vmul.u32 %v1278, %v1269
        %v1286 = vadd.s32 %v1281, %v1283
        %vm1287 = vc.u32 %v1281, %v1283
        %v1288 = vadd.s32 %v1284, 1
        %v1289 = vsel %vm1287, %v1288, %v1284
        %v1290 = vadd.s32 %v1285, %v1289
        %v1291 = vadd.s32 %v1290, 536870912
        %v1292 = vshrl.u32 %v1291, 30
        %v1293 = vshll.u32 %v1292, 30
        %v1294 = vsub.s32 %v1290, %v1293
        %vm1295 = vcmp.lt.s32.totalorder %v1294, 0
        %v1296 = vsub.s32 0, %v1294
        %v1297 = vsel %vm1295, %v1296, %v1294
        %v1298 = vclz %v1297
        %v1299 = vsub.s32 %v1298, 2
        %vm1300 = vcmp.gt.s32.totalorder 0, %v1299
        %v1301 = vsel %vm1300, 0, %v1299
        %v1302 = vsub.s32 32, %v1301
        %v1303 = vshll.u32 %v1294, %v1301
        %v1304 = vshrl.u32 %v1286, %v1302
        %v1305 = vor.u32 %v1303, %v1304
        %v1306 = vsub.s32 4294967266, %v1301
        %v1307 = vadd.s32 %v1306, 127
        %v1308 = vshll.u32 %v1307, 23
        %v1309 = vor.u32 4788187, %v1308
        %v1310 = vand.u32 2147483647, %v1309
        %v1312 = vcvt.s32.f32 %v1305
        %v1313 = vmul.f32 %v1312, %v1310
        %v1314 = vxor.u32 %v1313, 2147483648
        %v1315 = vsel %vm1232, %v1314, %v1313
        %v1316 = vsub.s32 4, %v1292
        %v1317 = vsel %vm1232, %v1316, %v1292
        %v1318 = vsel %vm1231, %v390, %v1315
        %v1319 = vsel %vm1231, 0, %v1317
        %v1320 = vcosq.f32.pop %v1318
        %v1321 = vsinq.f32.pop %v1318
        %vm1322 = vweird.f32 %v390
        %v1323 = vadd.s32 %v1319, 3
        %v1324 = vand.u32 %v1323, 3
        %vm1325 = vcmp.lt.s32.totalorder %v1324, 2
        %vm1326 = vcmp.eq.s32.totalorder %v1324, 0
        %v1327 = vxor.u32 %v1321, 2147483648
        %v1328 = vsel %vm1326, %v1320, %v1327
        %vm1329 = vcmp.eq.s32.totalorder %v1324, 2
        %v1330 = vxor.u32 %v1320, 2147483648
        %v1331 = vsel %vm1329, %v1330, %v1321
        %v1332 = vsel %vm1325, %v1328, %v1331
        %v1333 = vsel %vm1322, nan, %v1332
        %v1334 = vand.u32 2147483647, %v391
        %vm1335 = vcmp.le.f32.partialorder %v1334, 0.7853982
        %vm1336 = vcmp.lt.s32.totalorder %v391, 0
        %v1337 = vand.u32 %v391, 2139095040
        %v1338 = vshrl.u32 %v1337, 23
        %v1339 = vsub.s32 %v1338, 127
        %v1340 = vand.u32 2147483647, %v391
        %v1341 = vand.u32 %v1340, 8388607
        %v1342 = vor.u32 %v1341, 8388608
        %v1343 = vsub.s32 0, %v1342
        %v1344 = vadd.s32 %v1339, 1
        %vm1345 = vcmp.gt.s32.totalorder %v1344, 0
        %v1346 = vsel %vm1345, %v1344, 0
        %v1347 = vshrl.u32 %v1346, 5
        %v1348 = vand.u32 %v1346, 31
        %v1349 = vsub.s32 32, %v1348
        %v1350 = vshrl.u32 683565275, %v1349
        %v1351 = vshll.u32 683565275, %v1348
        %v1352 = vshrl.u32 2475754826, %v1349
        %v1353 = vor.u32 %v1351, %v1352
        %v1354 = vshll.u32 2475754826, %v1348
        %v1355 = vshrl.u32 2131351028, %v1349
        %v1356 = vor.u32 %v1354, %v1355
        %v1357 = vshll.u32 2131351028, %v1348
        %v1358 = vshrl.u32 2102212464, %v1349
        %v1359 = vor.u32 %v1357, %v1358
        %v1360 = vshll.u32 2102212464, %v1348
        %v1361 = vshrl.u32 920167782, %v1349
        %v1362 = vor.u32 %v1360, %v1361
        %v1363 = vshll.u32 920167782, %v1348
        %v1364 = vshrl.u32 1326507024, %v1349
        %v1365 = vor.u32 %v1363, %v1364
        %vm1366 = vcmp.lt.s32.totalorder %v1347, 1
        %vm1367 = vcmp.lt.s32.totalorder %v1347, 2
        %vm1368 = vcmp.lt.s32.totalorder %v1347, 3
        %vm1369 = vcmp.lt.s32.totalorder %v1347, 4
        %v1370 = vsel %vm1366, %v1350, %v1353
        %v1371 = vsel %vm1369, %v1359, 2102212464
        %v1372 = vsel %vm1368, %v1356, %v1371
        %v1373 = vsel %vm1367, %v1370, %v1372
        %v1374 = vsel %vm1366, %v1353, %v1356
        %v1375 = vsel %vm1369, %v1362, 920167782
        %v1376 = vsel %vm1368, %v1359, %v1375
        %v1377 = vsel %vm1367, %v1374, %v1376
        %v1378 = vsel %vm1366, %v1356, %v1359
        %v1379 = vsel %vm1369, %v1365, 1326507024
        %v1380 = vsel %vm1368, %v1362, %v1379
        %v1381 = vsel %vm1367, %v1378, %v1380
        %v1382 = vshll.u32 %v1342, 8
        %v1383 = vmul.u32.u64.compose %v1382, %v1381
        %v1384 = vextract.low.u32 %v1383
        %v1385 = vextract.high.u32 %v1383
        %v1386 = vmul.u32.u64.compose %v1382, %v1377
        %v1387 = vextract.low.u32 %v1386
        %v1388 = vextract.high.u32 %v1386
        %v1389 = vmul.u32 %v1382, %v1373
        %v1390 = vadd.s32 %v1385, %v1387
        %vm1391 = vc.u32 %v1385, %v1387
        %v1392 = vadd.s32 %v1388, 1
        %v1393 = vsel %vm1391, %v1392, %v1388
        %v1394 = vadd.s32 %v1389, %v1393
        %v1395 = vadd.s32 %v1394, 536870912
        %v1396 = vshrl.u32 %v1395, 30
        %v1397 = vshll.u32 %v1396, 30
        %v1398 = vsub.s32 %v1394, %v1397
        %vm1399 = vcmp.lt.s32.totalorder %v1398, 0
        %v1400 = vsub.s32 0, %v1398
        %v1401 = vsel %vm1399, %v1400, %v1398
        %v1402 = vclz %v1401
        %v1403 = vsub.s32 %v1402, 2
        %vm1404 = vcmp.gt.s32.totalorder 0, %v1403
        %v1405 = vsel %vm1404, 0, %v1403
        %v1406 = vsub.s32 32, %v1405
        %v1407 = vshll.u32 %v1398, %v1405
        %v1408 = vshrl.u32 %v1390, %v1406
        %v1409 = vor.u32 %v1407, %v1408
        %v1410 = vsub.s32 4294967266, %v1405
        %v1411 = vadd.s32 %v1410, 127
        %v1412 = vshll.u32 %v1411, 23
        %v1413 = vor.u32 4788187, %v1412
        %v1414 = vand.u32 2147483647, %v1413
        %v1416 = vcvt.s32.f32 %v1409
        %v1417 = vmul.f32 %v1416, %v1414
        %v1418 = vxor.u32 %v1417, 2147483648
        %v1419 = vsel %vm1336, %v1418, %v1417
        %v1420 = vsub.s32 4, %v1396
        %v1421 = vsel %vm1336, %v1420, %v1396
        %v1422 = vsel %vm1335, %v391, %v1419
        %v1423 = vsel %vm1335, 0, %v1421
        %v1424 = vcosq.f32.pop %v1422
        %v1425 = vsinq.f32.pop %v1422
        %vm1426 = vweird.f32 %v391
        %v1427 = vadd.s32 %v1423, 3
        %v1428 = vand.u32 %v1427, 3
        %vm1429 = vcmp.lt.s32.totalorder %v1428, 2
        %vm1430 = vcmp.eq.s32.totalorder %v1428, 0
        %v1431 = vxor.u32 %v1425, 2147483648
        %v1432 = vsel %vm1430, %v1424, %v1431
        %vm1433 = vcmp.eq.s32.totalorder %v1428, 2
        %v1434 = vxor.u32 %v1424, 2147483648
        %v1435 = vsel %vm1433, %v1434, %v1425
        %v1436 = vsel %vm1429, %v1432, %v1435
        %v1437 = vsel %vm1426, nan, %v1436
        %v1438 = vand.u32 2147483647, %v392
        %vm1439 = vcmp.le.f32.partialorder %v1438, 0.7853982
        %vm1440 = vcmp.lt.s32.totalorder %v392, 0
        %v1441 = vand.u32 %v392, 2139095040
        %v1442 = vshrl.u32 %v1441, 23
        %v1443 = vsub.s32 %v1442, 127
        %v1444 = vand.u32 2147483647, %v392
        %v1445 = vand.u32 %v1444, 8388607
        %v1446 = vor.u32 %v1445, 8388608
        %v1447 = vsub.s32 0, %v1446
        %v1448 = vadd.s32 %v1443, 1
        %vm1449 = vcmp.gt.s32.totalorder %v1448, 0
        %v1450 = vsel %vm1449, %v1448, 0
        %v1451 = vshrl.u32 %v1450, 5
        %v1452 = vand.u32 %v1450, 31
        %v1453 = vsub.s32 32, %v1452
        %v1454 = vshrl.u32 683565275, %v1453
        %v1455 = vshll.u32 683565275, %v1452
        %v1456 = vshrl.u32 2475754826, %v1453
        %v1457 = vor.u32 %v1455, %v1456
        %v1458 = vshll.u32 2475754826, %v1452
        %v1459 = vshrl.u32 2131351028, %v1453
        %v1460 = vor.u32 %v1458, %v1459
        %v1461 = vshll.u32 2131351028, %v1452
        %v1462 = vshrl.u32 2102212464, %v1453
        %v1463 = vor.u32 %v1461, %v1462
        %v1464 = vshll.u32 2102212464, %v1452
        %v1465 = vshrl.u32 920167782, %v1453
        %v1466 = vor.u32 %v1464, %v1465
        %v1467 = vshll.u32 920167782, %v1452
        %v1468 = vshrl.u32 1326507024, %v1453
        %v1469 = vor.u32 %v1467, %v1468
        %vm1470 = vcmp.lt.s32.totalorder %v1451, 1
        %vm1471 = vcmp.lt.s32.totalorder %v1451, 2
        %vm1472 = vcmp.lt.s32.totalorder %v1451, 3
        %vm1473 = vcmp.lt.s32.totalorder %v1451, 4
        %v1474 = vsel %vm1470, %v1454, %v1457
        %v1475 = vsel %vm1473, %v1463, 2102212464
        %v1476 = vsel %vm1472, %v1460, %v1475
        %v1477 = vsel %vm1471, %v1474, %v1476
        %v1478 = vsel %vm1470, %v1457, %v1460
        %v1479 = vsel %vm1473, %v1466, 920167782
        %v1480 = vsel %vm1472, %v1463, %v1479
        %v1481 = vsel %vm1471, %v1478, %v1480
        %v1482 = vsel %vm1470, %v1460, %v1463
        %v1483 = vsel %vm1473, %v1469, 1326507024
        %v1484 = vsel %vm1472, %v1466, %v1483
        %v1485 = vsel %vm1471, %v1482, %v1484
        %v1486 = vshll.u32 %v1446, 8
        %v1487 = vmul.u32.u64.compose %v1486, %v1485
        %v1488 = vextract.low.u32 %v1487
        %v1489 = vextract.high.u32 %v1487
        %v1490 = vmul.u32.u64.compose %v1486, %v1481
        %v1491 = vextract.low.u32 %v1490
        %v1492 = vextract.high.u32 %v1490
        %v1493 = vmul.u32 %v1486, %v1477
        %v1494 = vadd.s32 %v1489, %v1491
        %vm1495 = vc.u32 %v1489, %v1491
        %v1496 = vadd.s32 %v1492, 1
        %v1497 = vsel %vm1495, %v1496, %v1492
        %v1498 = vadd.s32 %v1493, %v1497
        %v1499 = vadd.s32 %v1498, 536870912
        %v1500 = vshrl.u32 %v1499, 30
        %v1501 = vshll.u32 %v1500, 30
        %v1502 = vsub.s32 %v1498, %v1501
        %vm1503 = vcmp.lt.s32.totalorder %v1502, 0
        %v1504 = vsub.s32 0, %v1502
        %v1505 = vsel %vm1503, %v1504, %v1502
        %v1506 = vclz %v1505
        %v1507 = vsub.s32 %v1506, 2
        %vm1508 = vcmp.gt.s32.totalorder 0, %v1507
        %v1509 = vsel %vm1508, 0, %v1507
        %v1510 = vsub.s32 32, %v1509
        %v1511 = vshll.u32 %v1502, %v1509
        %v1512 = vshrl.u32 %v1494, %v1510
        %v1513 = vor.u32 %v1511, %v1512
        %v1514 = vsub.s32 4294967266, %v1509
        %v1515 = vadd.s32 %v1514, 127
        %v1516 = vshll.u32 %v1515, 23
        %v1517 = vor.u32 4788187, %v1516
        %v1518 = vand.u32 2147483647, %v1517
        %v1520 = vcvt.s32.f32 %v1513
        %v1521 = vmul.f32 %v1520, %v1518
        %v1522 = vxor.u32 %v1521, 2147483648
        %v1523 = vsel %vm1440, %v1522, %v1521
        %v1524 = vsub.s32 4, %v1500
        %v1525 = vsel %vm1440, %v1524, %v1500
        %v1526 = vsel %vm1439, %v392, %v1523
        %v1527 = vsel %vm1439, 0, %v1525
        %v1528 = vcosq.f32.pop %v1526
        %v1529 = vsinq.f32.pop %v1526
        %vm1530 = vweird.f32 %v392
        %v1531 = vadd.s32 %v1527, 3
        %v1532 = vand.u32 %v1531, 3
        %vm1533 = vcmp.lt.s32.totalorder %v1532, 2
        %vm1534 = vcmp.eq.s32.totalorder %v1532, 0
        %v1535 = vxor.u32 %v1529, 2147483648
        %v1536 = vsel %vm1534, %v1528, %v1535
        %vm1537 = vcmp.eq.s32.totalorder %v1532, 2
        %v1538 = vxor.u32 %v1528, 2147483648
        %v1539 = vsel %vm1537, %v1538, %v1529
        %v1540 = vsel %vm1533, %v1536, %v1539
        %v1541 = vsel %vm1530, nan, %v1540
        %v1542 = vand.u32 2147483647, %v393
        %vm1543 = vcmp.le.f32.partialorder %v1542, 0.7853982
        %vm1544 = vcmp.lt.s32.totalorder %v393, 0
        %v1545 = vand.u32 %v393, 2139095040
        %v1546 = vshrl.u32 %v1545, 23
        %v1547 = vsub.s32 %v1546, 127
        %v1548 = vand.u32 2147483647, %v393
        %v1549 = vand.u32 %v1548, 8388607
        %v1550 = vor.u32 %v1549, 8388608
        %v1551 = vsub.s32 0, %v1550
        %v1552 = vadd.s32 %v1547, 1
        %vm1553 = vcmp.gt.s32.totalorder %v1552, 0
        %v1554 = vsel %vm1553, %v1552, 0
        %v1555 = vshrl.u32 %v1554, 5
        %v1556 = vand.u32 %v1554, 31
        %v1557 = vsub.s32 32, %v1556
        %v1558 = vshrl.u32 683565275, %v1557
        %v1559 = vshll.u32 683565275, %v1556
        %v1560 = vshrl.u32 2475754826, %v1557
        %v1561 = vor.u32 %v1559, %v1560
        %v1562 = vshll.u32 2475754826, %v1556
        %v1563 = vshrl.u32 2131351028, %v1557
        %v1564 = vor.u32 %v1562, %v1563
        %v1565 = vshll.u32 2131351028, %v1556
        %v1566 = vshrl.u32 2102212464, %v1557
        %v1567 = vor.u32 %v1565, %v1566
        %v1568 = vshll.u32 2102212464, %v1556
        %v1569 = vshrl.u32 920167782, %v1557
        %v1570 = vor.u32 %v1568, %v1569
        %v1571 = vshll.u32 920167782, %v1556
        %v1572 = vshrl.u32 1326507024, %v1557
        %v1573 = vor.u32 %v1571, %v1572
        %vm1574 = vcmp.lt.s32.totalorder %v1555, 1
        %vm1575 = vcmp.lt.s32.totalorder %v1555, 2
        %vm1576 = vcmp.lt.s32.totalorder %v1555, 3
        %vm1577 = vcmp.lt.s32.totalorder %v1555, 4
        %v1578 = vsel %vm1574, %v1558, %v1561
        %v1579 = vsel %vm1577, %v1567, 2102212464
        %v1580 = vsel %vm1576, %v1564, %v1579
        %v1581 = vsel %vm1575, %v1578, %v1580
        %v1582 = vsel %vm1574, %v1561, %v1564
        %v1583 = vsel %vm1577, %v1570, 920167782
        %v1584 = vsel %vm1576, %v1567, %v1583
        %v1585 = vsel %vm1575, %v1582, %v1584
        %v1586 = vsel %vm1574, %v1564, %v1567
        %v1587 = vsel %vm1577, %v1573, 1326507024
        %v1588 = vsel %vm1576, %v1570, %v1587
        %v1589 = vsel %vm1575, %v1586, %v1588
        %v1590 = vshll.u32 %v1550, 8
        %v1591 = vmul.u32.u64.compose %v1590, %v1589
        %v1592 = vextract.low.u32 %v1591
        %v1593 = vextract.high.u32 %v1591
        %v1594 = vmul.u32.u64.compose %v1590, %v1585
        %v1595 = vextract.low.u32 %v1594
        %v1596 = vextract.high.u32 %v1594
        %v1597 = vmul.u32 %v1590, %v1581
        %v1598 = vadd.s32 %v1593, %v1595
        %vm1599 = vc.u32 %v1593, %v1595
        %v1600 = vadd.s32 %v1596, 1
        %v1601 = vsel %vm1599, %v1600, %v1596
        %v1602 = vadd.s32 %v1597, %v1601
        %v1603 = vadd.s32 %v1602, 536870912
        %v1604 = vshrl.u32 %v1603, 30
        %v1605 = vshll.u32 %v1604, 30
        %v1606 = vsub.s32 %v1602, %v1605
        %vm1607 = vcmp.lt.s32.totalorder %v1606, 0
        %v1608 = vsub.s32 0, %v1606
        %v1609 = vsel %vm1607, %v1608, %v1606
        %v1610 = vclz %v1609
        %v1611 = vsub.s32 %v1610, 2
        %vm1612 = vcmp.gt.s32.totalorder 0, %v1611
        %v1613 = vsel %vm1612, 0, %v1611
        %v1614 = vsub.s32 32, %v1613
        %v1615 = vshll.u32 %v1606, %v1613
        %v1616 = vshrl.u32 %v1598, %v1614
        %v1617 = vor.u32 %v1615, %v1616
        %v1618 = vsub.s32 4294967266, %v1613
        %v1619 = vadd.s32 %v1618, 127
        %v1620 = vshll.u32 %v1619, 23
        %v1621 = vor.u32 4788187, %v1620
        %v1622 = vand.u32 2147483647, %v1621
        %v1624 = vcvt.s32.f32 %v1617
        %v1625 = vmul.f32 %v1624, %v1622
        %v1626 = vxor.u32 %v1625, 2147483648
        %v1627 = vsel %vm1544, %v1626, %v1625
        %v1628 = vsub.s32 4, %v1604
        %v1629 = vsel %vm1544, %v1628, %v1604
        %v1630 = vsel %vm1543, %v393, %v1627
        %v1631 = vsel %vm1543, 0, %v1629
        %v1632 = vcosq.f32.pop %v1630
        %v1633 = vsinq.f32.pop %v1630
        %vm1634 = vweird.f32 %v393
        %v1635 = vadd.s32 %v1631, 3
        %v1636 = vand.u32 %v1635, 3
        %vm1637 = vcmp.lt.s32.totalorder %v1636, 2
        %vm1638 = vcmp.eq.s32.totalorder %v1636, 0
        %v1639 = vxor.u32 %v1633, 2147483648
        %v1640 = vsel %vm1638, %v1632, %v1639
        %vm1641 = vcmp.eq.s32.totalorder %v1636, 2
        %v1642 = vxor.u32 %v1632, 2147483648
        %v1643 = vsel %vm1641, %v1642, %v1633
        %v1644 = vsel %vm1637, %v1640, %v1643
        %v1645 = vsel %vm1634, nan, %v1644
        %v1646 = vand.u32 2147483647, %v394
        %vm1647 = vcmp.le.f32.partialorder %v1646, 0.7853982
        %vm1648 = vcmp.lt.s32.totalorder %v394, 0
        %v1649 = vand.u32 %v394, 2139095040
        %v1650 = vshrl.u32 %v1649, 23
        %v1651 = vsub.s32 %v1650, 127
        %v1652 = vand.u32 2147483647, %v394
        %v1653 = vand.u32 %v1652, 8388607
        %v1654 = vor.u32 %v1653, 8388608
        %v1655 = vsub.s32 0, %v1654
        %v1656 = vadd.s32 %v1651, 1
        %vm1657 = vcmp.gt.s32.totalorder %v1656, 0
        %v1658 = vsel %vm1657, %v1656, 0
        %v1659 = vshrl.u32 %v1658, 5
        %v1660 = vand.u32 %v1658, 31
        %v1661 = vsub.s32 32, %v1660
        %v1662 = vshrl.u32 683565275, %v1661
        %v1663 = vshll.u32 683565275, %v1660
        %v1664 = vshrl.u32 2475754826, %v1661
        %v1665 = vor.u32 %v1663, %v1664
        %v1666 = vshll.u32 2475754826, %v1660
        %v1667 = vshrl.u32 2131351028, %v1661
        %v1668 = vor.u32 %v1666, %v1667
        %v1669 = vshll.u32 2131351028, %v1660
        %v1670 = vshrl.u32 2102212464, %v1661
        %v1671 = vor.u32 %v1669, %v1670
        %v1672 = vshll.u32 2102212464, %v1660
        %v1673 = vshrl.u32 920167782, %v1661
        %v1674 = vor.u32 %v1672, %v1673
        %v1675 = vshll.u32 920167782, %v1660
        %v1676 = vshrl.u32 1326507024, %v1661
        %v1677 = vor.u32 %v1675, %v1676
        %vm1678 = vcmp.lt.s32.totalorder %v1659, 1
        %vm1679 = vcmp.lt.s32.totalorder %v1659, 2
        %vm1680 = vcmp.lt.s32.totalorder %v1659, 3
        %vm1681 = vcmp.lt.s32.totalorder %v1659, 4
        %v1682 = vsel %vm1678, %v1662, %v1665
        %v1683 = vsel %vm1681, %v1671, 2102212464
        %v1684 = vsel %vm1680, %v1668, %v1683
        %v1685 = vsel %vm1679, %v1682, %v1684
        %v1686 = vsel %vm1678, %v1665, %v1668
        %v1687 = vsel %vm1681, %v1674, 920167782
        %v1688 = vsel %vm1680, %v1671, %v1687
        %v1689 = vsel %vm1679, %v1686, %v1688
        %v1690 = vsel %vm1678, %v1668, %v1671
        %v1691 = vsel %vm1681, %v1677, 1326507024
        %v1692 = vsel %vm1680, %v1674, %v1691
        %v1693 = vsel %vm1679, %v1690, %v1692
        %v1694 = vshll.u32 %v1654, 8
        %v1695 = vmul.u32.u64.compose %v1694, %v1693
        %v1696 = vextract.low.u32 %v1695
        %v1697 = vextract.high.u32 %v1695
        %v1698 = vmul.u32.u64.compose %v1694, %v1689
        %v1699 = vextract.low.u32 %v1698
        %v1700 = vextract.high.u32 %v1698
        %v1701 = vmul.u32 %v1694, %v1685
        %v1702 = vadd.s32 %v1697, %v1699
        %vm1703 = vc.u32 %v1697, %v1699
        %v1704 = vadd.s32 %v1700, 1
        %v1705 = vsel %vm1703, %v1704, %v1700
        %v1706 = vadd.s32 %v1701, %v1705
        %v1707 = vadd.s32 %v1706, 536870912
        %v1708 = vshrl.u32 %v1707, 30
        %v1709 = vshll.u32 %v1708, 30
        %v1710 = vsub.s32 %v1706, %v1709
        %vm1711 = vcmp.lt.s32.totalorder %v1710, 0
        %v1712 = vsub.s32 0, %v1710
        %v1713 = vsel %vm1711, %v1712, %v1710
        %v1714 = vclz %v1713
        %v1715 = vsub.s32 %v1714, 2
        %vm1716 = vcmp.gt.s32.totalorder 0, %v1715
        %v1717 = vsel %vm1716, 0, %v1715
        %v1718 = vsub.s32 32, %v1717
        %v1719 = vshll.u32 %v1710, %v1717
        %v1720 = vshrl.u32 %v1702, %v1718
        %v1721 = vor.u32 %v1719, %v1720
        %v1722 = vsub.s32 4294967266, %v1717
        %v1723 = vadd.s32 %v1722, 127
        %v1724 = vshll.u32 %v1723, 23
        %v1725 = vor.u32 4788187, %v1724
        %v1726 = vand.u32 2147483647, %v1725
        %v1728 = vcvt.s32.f32 %v1721
        %v1729 = vmul.f32 %v1728, %v1726
        %v1730 = vxor.u32 %v1729, 2147483648
        %v1731 = vsel %vm1648, %v1730, %v1729
        %v1732 = vsub.s32 4, %v1708
        %v1733 = vsel %vm1648, %v1732, %v1708
        %v1734 = vsel %vm1647, %v394, %v1731
        %v1735 = vsel %vm1647, 0, %v1733
        %v1736 = vcosq.f32.pop %v1734
        %v1737 = vsinq.f32.pop %v1734
        %vm1738 = vweird.f32 %v394
        %v1739 = vadd.s32 %v1735, 3
        %v1740 = vand.u32 %v1739, 3
        %vm1741 = vcmp.lt.s32.totalorder %v1740, 2
        %vm1742 = vcmp.eq.s32.totalorder %v1740, 0
        %v1743 = vxor.u32 %v1737, 2147483648
        %v1744 = vsel %vm1742, %v1736, %v1743
        %vm1745 = vcmp.eq.s32.totalorder %v1740, 2
        %v1746 = vxor.u32 %v1736, 2147483648
        %v1747 = vsel %vm1745, %v1746, %v1737
        %v1748 = vsel %vm1741, %v1744, %v1747
        %v1749 = vsel %vm1738, nan, %v1748
        %v1750 = vand.u32 2147483647, %v395
        %vm1751 = vcmp.le.f32.partialorder %v1750, 0.7853982
        %vm1752 = vcmp.lt.s32.totalorder %v395, 0
        %v1753 = vand.u32 %v395, 2139095040
        %v1754 = vshrl.u32 %v1753, 23
        %v1755 = vsub.s32 %v1754, 127
        %v1756 = vand.u32 2147483647, %v395
        %v1757 = vand.u32 %v1756, 8388607
        %v1758 = vor.u32 %v1757, 8388608
        %v1759 = vsub.s32 0, %v1758
        %v1760 = vadd.s32 %v1755, 1
        %vm1761 = vcmp.gt.s32.totalorder %v1760, 0
        %v1762 = vsel %vm1761, %v1760, 0
        %v1763 = vshrl.u32 %v1762, 5
        %v1764 = vand.u32 %v1762, 31
        %v1765 = vsub.s32 32, %v1764
        %v1766 = vshrl.u32 683565275, %v1765
        %v1767 = vshll.u32 683565275, %v1764
        %v1768 = vshrl.u32 2475754826, %v1765
        %v1769 = vor.u32 %v1767, %v1768
        %v1770 = vshll.u32 2475754826, %v1764
        %v1771 = vshrl.u32 2131351028, %v1765
        %v1772 = vor.u32 %v1770, %v1771
        %v1773 = vshll.u32 2131351028, %v1764
        %v1774 = vshrl.u32 2102212464, %v1765
        %v1775 = vor.u32 %v1773, %v1774
        %v1776 = vshll.u32 2102212464, %v1764
        %v1777 = vshrl.u32 920167782, %v1765
        %v1778 = vor.u32 %v1776, %v1777
        %v1779 = vshll.u32 920167782, %v1764
        %v1780 = vshrl.u32 1326507024, %v1765
        %v1781 = vor.u32 %v1779, %v1780
        %vm1782 = vcmp.lt.s32.totalorder %v1763, 1
        %vm1783 = vcmp.lt.s32.totalorder %v1763, 2
        %vm1784 = vcmp.lt.s32.totalorder %v1763, 3
        %vm1785 = vcmp.lt.s32.totalorder %v1763, 4
        %v1786 = vsel %vm1782, %v1766, %v1769
        %v1787 = vsel %vm1785, %v1775, 2102212464
        %v1788 = vsel %vm1784, %v1772, %v1787
        %v1789 = vsel %vm1783, %v1786, %v1788
        %v1790 = vsel %vm1782, %v1769, %v1772
        %v1791 = vsel %vm1785, %v1778, 920167782
        %v1792 = vsel %vm1784, %v1775, %v1791
        %v1793 = vsel %vm1783, %v1790, %v1792
        %v1794 = vsel %vm1782, %v1772, %v1775
        %v1795 = vsel %vm1785, %v1781, 1326507024
        %v1796 = vsel %vm1784, %v1778, %v1795
        %v1797 = vsel %vm1783, %v1794, %v1796
        %v1798 = vshll.u32 %v1758, 8
        %v1799 = vmul.u32.u64.compose %v1798, %v1797
        %v1800 = vextract.low.u32 %v1799
        %v1801 = vextract.high.u32 %v1799
        %v1802 = vmul.u32.u64.compose %v1798, %v1793
        %v1803 = vextract.low.u32 %v1802
        %v1804 = vextract.high.u32 %v1802
        %v1805 = vmul.u32 %v1798, %v1789
        %v1806 = vadd.s32 %v1801, %v1803
        %vm1807 = vc.u32 %v1801, %v1803
        %v1808 = vadd.s32 %v1804, 1
        %v1809 = vsel %vm1807, %v1808, %v1804
        %v1810 = vadd.s32 %v1805, %v1809
        %v1811 = vadd.s32 %v1810, 536870912
        %v1812 = vshrl.u32 %v1811, 30
        %v1813 = vshll.u32 %v1812, 30
        %v1814 = vsub.s32 %v1810, %v1813
        %vm1815 = vcmp.lt.s32.totalorder %v1814, 0
        %v1816 = vsub.s32 0, %v1814
        %v1817 = vsel %vm1815, %v1816, %v1814
        %v1818 = vclz %v1817
        %v1819 = vsub.s32 %v1818, 2
        %vm1820 = vcmp.gt.s32.totalorder 0, %v1819
        %v1821 = vsel %vm1820, 0, %v1819
        %v1822 = vsub.s32 32, %v1821
        %v1823 = vshll.u32 %v1814, %v1821
        %v1824 = vshrl.u32 %v1806, %v1822
        %v1825 = vor.u32 %v1823, %v1824
        %v1826 = vsub.s32 4294967266, %v1821
        %v1827 = vadd.s32 %v1826, 127
        %v1828 = vshll.u32 %v1827, 23
        %v1829 = vor.u32 4788187, %v1828
        %v1830 = vand.u32 2147483647, %v1829
        %v1832 = vcvt.s32.f32 %v1825
        %v1833 = vmul.f32 %v1832, %v1830
        %v1834 = vxor.u32 %v1833, 2147483648
        %v1835 = vsel %vm1752, %v1834, %v1833
        %v1836 = vsub.s32 4, %v1812
        %v1837 = vsel %vm1752, %v1836, %v1812
        %v1838 = vsel %vm1751, %v395, %v1835
        %v1839 = vsel %vm1751, 0, %v1837
        %v1840 = vcosq.f32.pop %v1838
        %v1841 = vsinq.f32.pop %v1838
        %vm1842 = vweird.f32 %v395
        %v1843 = vadd.s32 %v1839, 3
        %v1844 = vand.u32 %v1843, 3
        %vm1845 = vcmp.lt.s32.totalorder %v1844, 2
        %vm1846 = vcmp.eq.s32.totalorder %v1844, 0
        %v1847 = vxor.u32 %v1841, 2147483648
        %v1848 = vsel %vm1846, %v1840, %v1847
        %vm1849 = vcmp.eq.s32.totalorder %v1844, 2
        %v1850 = vxor.u32 %v1840, 2147483648
        %v1851 = vsel %vm1849, %v1850, %v1841
        %v1852 = vsel %vm1845, %v1848, %v1851
        %v1853 = vsel %vm1842, nan, %v1852
        %v1854 = vand.u32 2147483647, %v396
        %vm1855 = vcmp.le.f32.partialorder %v1854, 0.7853982
        %vm1856 = vcmp.lt.s32.totalorder %v396, 0
        %v1857 = vand.u32 %v396, 2139095040
        %v1858 = vshrl.u32 %v1857, 23
        %v1859 = vsub.s32 %v1858, 127
        %v1860 = vand.u32 2147483647, %v396
        %v1861 = vand.u32 %v1860, 8388607
        %v1862 = vor.u32 %v1861, 8388608
        %v1863 = vsub.s32 0, %v1862
        %v1864 = vadd.s32 %v1859, 1
        %vm1865 = vcmp.gt.s32.totalorder %v1864, 0
        %v1866 = vsel %vm1865, %v1864, 0
        %v1867 = vshrl.u32 %v1866, 5
        %v1868 = vand.u32 %v1866, 31
        %v1869 = vsub.s32 32, %v1868
        %v1870 = vshrl.u32 683565275, %v1869
        %v1871 = vshll.u32 683565275, %v1868
        %v1872 = vshrl.u32 2475754826, %v1869
        %v1873 = vor.u32 %v1871, %v1872
        %v1874 = vshll.u32 2475754826, %v1868
        %v1875 = vshrl.u32 2131351028, %v1869
        %v1876 = vor.u32 %v1874, %v1875
        %v1877 = vshll.u32 2131351028, %v1868
        %v1878 = vshrl.u32 2102212464, %v1869
        %v1879 = vor.u32 %v1877, %v1878
        %v1880 = vshll.u32 2102212464, %v1868
        %v1881 = vshrl.u32 920167782, %v1869
        %v1882 = vor.u32 %v1880, %v1881
        %v1883 = vshll.u32 920167782, %v1868
        %v1884 = vshrl.u32 1326507024, %v1869
        %v1885 = vor.u32 %v1883, %v1884
        %vm1886 = vcmp.lt.s32.totalorder %v1867, 1
        %vm1887 = vcmp.lt.s32.totalorder %v1867, 2
        %vm1888 = vcmp.lt.s32.totalorder %v1867, 3
        %vm1889 = vcmp.lt.s32.totalorder %v1867, 4
        %v1890 = vsel %vm1886, %v1870, %v1873
        %v1891 = vsel %vm1889, %v1879, 2102212464
        %v1892 = vsel %vm1888, %v1876, %v1891
        %v1893 = vsel %vm1887, %v1890, %v1892
        %v1894 = vsel %vm1886, %v1873, %v1876
        %v1895 = vsel %vm1889, %v1882, 920167782
        %v1896 = vsel %vm1888, %v1879, %v1895
        %v1897 = vsel %vm1887, %v1894, %v1896
        %v1898 = vsel %vm1886, %v1876, %v1879
        %v1899 = vsel %vm1889, %v1885, 1326507024
        %v1900 = vsel %vm1888, %v1882, %v1899
        %v1901 = vsel %vm1887, %v1898, %v1900
        %v1902 = vshll.u32 %v1862, 8
        %v1903 = vmul.u32.u64.compose %v1902, %v1901
        %v1904 = vextract.low.u32 %v1903
        %v1905 = vextract.high.u32 %v1903
        %v1906 = vmul.u32.u64.compose %v1902, %v1897
        %v1907 = vextract.low.u32 %v1906
        %v1908 = vextract.high.u32 %v1906
        %v1909 = vmul.u32 %v1902, %v1893
        %v1910 = vadd.s32 %v1905, %v1907
        %vm1911 = vc.u32 %v1905, %v1907
        %v1912 = vadd.s32 %v1908, 1
        %v1913 = vsel %vm1911, %v1912, %v1908
        %v1914 = vadd.s32 %v1909, %v1913
        %v1915 = vadd.s32 %v1914, 536870912
        %v1916 = vshrl.u32 %v1915, 30
        %v1917 = vshll.u32 %v1916, 30
        %v1918 = vsub.s32 %v1914, %v1917
        %vm1919 = vcmp.lt.s32.totalorder %v1918, 0
        %v1920 = vsub.s32 0, %v1918
        %v1921 = vsel %vm1919, %v1920, %v1918
        %v1922 = vclz %v1921
        %v1923 = vsub.s32 %v1922, 2
        %vm1924 = vcmp.gt.s32.totalorder 0, %v1923
        %v1925 = vsel %vm1924, 0, %v1923
        %v1926 = vsub.s32 32, %v1925
        %v1927 = vshll.u32 %v1918, %v1925
        %v1928 = vshrl.u32 %v1910, %v1926
        %v1929 = vor.u32 %v1927, %v1928
        %v1930 = vsub.s32 4294967266, %v1925
        %v1931 = vadd.s32 %v1930, 127
        %v1932 = vshll.u32 %v1931, 23
        %v1933 = vor.u32 4788187, %v1932
        %v1934 = vand.u32 2147483647, %v1933
        %v1936 = vcvt.s32.f32 %v1929
        %v1937 = vmul.f32 %v1936, %v1934
        %v1938 = vxor.u32 %v1937, 2147483648
        %v1939 = vsel %vm1856, %v1938, %v1937
        %v1940 = vsub.s32 4, %v1916
        %v1941 = vsel %vm1856, %v1940, %v1916
        %v1942 = vsel %vm1855, %v396, %v1939
        %v1943 = vsel %vm1855, 0, %v1941
        %v1944 = vcosq.f32.pop %v1942
        %v1945 = vsinq.f32.pop %v1942
        %vm1946 = vweird.f32 %v396
        %v1947 = vadd.s32 %v1943, 3
        %v1948 = vand.u32 %v1947, 3
        %vm1949 = vcmp.lt.s32.totalorder %v1948, 2
        %vm1950 = vcmp.eq.s32.totalorder %v1948, 0
        %v1951 = vxor.u32 %v1945, 2147483648
        %v1952 = vsel %vm1950, %v1944, %v1951
        %vm1953 = vcmp.eq.s32.totalorder %v1948, 2
        %v1954 = vxor.u32 %v1944, 2147483648
        %v1955 = vsel %vm1953, %v1954, %v1945
        %v1956 = vsel %vm1949, %v1952, %v1955
        %v1957 = vsel %vm1946, nan, %v1956
        %v1958 = vand.u32 2147483647, %v397
        %vm1959 = vcmp.le.f32.partialorder %v1958, 0.7853982
        %vm1960 = vcmp.lt.s32.totalorder %v397, 0
        %v1961 = vand.u32 %v397, 2139095040
        %v1962 = vshrl.u32 %v1961, 23
        %v1963 = vsub.s32 %v1962, 127
        %v1964 = vand.u32 2147483647, %v397
        %v1965 = vand.u32 %v1964, 8388607
        %v1966 = vor.u32 %v1965, 8388608
        %v1967 = vsub.s32 0, %v1966
        %v1968 = vadd.s32 %v1963, 1
        %vm1969 = vcmp.gt.s32.totalorder %v1968, 0
        %v1970 = vsel %vm1969, %v1968, 0
        %v1971 = vshrl.u32 %v1970, 5
        %v1972 = vand.u32 %v1970, 31
        %v1973 = vsub.s32 32, %v1972
        %v1974 = vshrl.u32 683565275, %v1973
        %v1975 = vshll.u32 683565275, %v1972
        %v1976 = vshrl.u32 2475754826, %v1973
        %v1977 = vor.u32 %v1975, %v1976
        %v1978 = vshll.u32 2475754826, %v1972
        %v1979 = vshrl.u32 2131351028, %v1973
        %v1980 = vor.u32 %v1978, %v1979
        %v1981 = vshll.u32 2131351028, %v1972
        %v1982 = vshrl.u32 2102212464, %v1973
        %v1983 = vor.u32 %v1981, %v1982
        %v1984 = vshll.u32 2102212464, %v1972
        %v1985 = vshrl.u32 920167782, %v1973
        %v1986 = vor.u32 %v1984, %v1985
        %v1987 = vshll.u32 920167782, %v1972
        %v1988 = vshrl.u32 1326507024, %v1973
        %v1989 = vor.u32 %v1987, %v1988
        %vm1990 = vcmp.lt.s32.totalorder %v1971, 1
        %vm1991 = vcmp.lt.s32.totalorder %v1971, 2
        %vm1992 = vcmp.lt.s32.totalorder %v1971, 3
        %vm1993 = vcmp.lt.s32.totalorder %v1971, 4
        %v1994 = vsel %vm1990, %v1974, %v1977
        %v1995 = vsel %vm1993, %v1983, 2102212464
        %v1996 = vsel %vm1992, %v1980, %v1995
        %v1997 = vsel %vm1991, %v1994, %v1996
        %v1998 = vsel %vm1990, %v1977, %v1980
        %v1999 = vsel %vm1993, %v1986, 920167782
        %v2000 = vsel %vm1992, %v1983, %v1999
        %v2001 = vsel %vm1991, %v1998, %v2000
        %v2002 = vsel %vm1990, %v1980, %v1983
        %v2003 = vsel %vm1993, %v1989, 1326507024
        %v2004 = vsel %vm1992, %v1986, %v2003
        %v2005 = vsel %vm1991, %v2002, %v2004
        %v2006 = vshll.u32 %v1966, 8
        %v2007 = vmul.u32.u64.compose %v2006, %v2005
        %v2008 = vextract.low.u32 %v2007
        %v2009 = vextract.high.u32 %v2007
        %v2010 = vmul.u32.u64.compose %v2006, %v2001
        %v2011 = vextract.low.u32 %v2010
        %v2012 = vextract.high.u32 %v2010
        %v2013 = vmul.u32 %v2006, %v1997
        %v2014 = vadd.s32 %v2009, %v2011
        %vm2015 = vc.u32 %v2009, %v2011
        %v2016 = vadd.s32 %v2012, 1
        %v2017 = vsel %vm2015, %v2016, %v2012
        %v2018 = vadd.s32 %v2013, %v2017
        %v2019 = vadd.s32 %v2018, 536870912
        %v2020 = vshrl.u32 %v2019, 30
        %v2021 = vshll.u32 %v2020, 30
        %v2022 = vsub.s32 %v2018, %v2021
        %vm2023 = vcmp.lt.s32.totalorder %v2022, 0
        %v2024 = vsub.s32 0, %v2022
        %v2025 = vsel %vm2023, %v2024, %v2022
        %v2026 = vclz %v2025
        %v2027 = vsub.s32 %v2026, 2
        %vm2028 = vcmp.gt.s32.totalorder 0, %v2027
        %v2029 = vsel %vm2028, 0, %v2027
        %v2030 = vsub.s32 32, %v2029
        %v2031 = vshll.u32 %v2022, %v2029
        %v2032 = vshrl.u32 %v2014, %v2030
        %v2033 = vor.u32 %v2031, %v2032
        %v2034 = vsub.s32 4294967266, %v2029
        %v2035 = vadd.s32 %v2034, 127
        %v2036 = vshll.u32 %v2035, 23
        %v2037 = vor.u32 4788187, %v2036
        %v2038 = vand.u32 2147483647, %v2037
        %v2040 = vcvt.s32.f32 %v2033
        %v2041 = vmul.f32 %v2040, %v2038
        %v2042 = vxor.u32 %v2041, 2147483648
        %v2043 = vsel %vm1960, %v2042, %v2041
        %v2044 = vsub.s32 4, %v2020
        %v2045 = vsel %vm1960, %v2044, %v2020
        %v2046 = vsel %vm1959, %v397, %v2043
        %v2047 = vsel %vm1959, 0, %v2045
        %v2048 = vcosq.f32.pop %v2046
        %v2049 = vsinq.f32.pop %v2046
        %vm2050 = vweird.f32 %v397
        %v2051 = vadd.s32 %v2047, 3
        %v2052 = vand.u32 %v2051, 3
        %vm2053 = vcmp.lt.s32.totalorder %v2052, 2
        %vm2054 = vcmp.eq.s32.totalorder %v2052, 0
        %v2055 = vxor.u32 %v2049, 2147483648
        %v2056 = vsel %vm2054, %v2048, %v2055
        %vm2057 = vcmp.eq.s32.totalorder %v2052, 2
        %v2058 = vxor.u32 %v2048, 2147483648
        %v2059 = vsel %vm2057, %v2058, %v2049
        %v2060 = vsel %vm2053, %v2056, %v2059
        %v2061 = vsel %vm2050, nan, %v2060
        %2062 = vst [vmem:[%s237] sm:$0xff] %v501
        %2063 = vst [vmem:[%s237 + $0x8] sm:$0xff] %v605
        %2064 = vst [vmem:[%s237 + $0x10] sm:$0xff] %v709
        %2065 = vst [vmem:[%s237 + $0x18] sm:$0xff] %v813
        %2066 = vst [vmem:[%s237 + $0x20] sm:$0xff] %v917
        %2067 = vst [vmem:[%s237 + $0x28] sm:$0xff] %v1021
        %2068 = vst [vmem:[%s237 + $0x30] sm:$0xff] %v1125
        %2069 = vst [vmem:[%s237 + $0x38] sm:$0xff] %v1229
        %2070 = vst [vmem:[%s237 + $0x40] sm:$0xff] %v1333
        %2071 = vst [vmem:[%s237 + $0x48] sm:$0xff] %v1437
        %2072 = vst [vmem:[%s237 + $0x50] sm:$0xff] %v1541
        %2073 = vst [vmem:[%s237 + $0x58] sm:$0xff] %v1645
        %2074 = vst [vmem:[%s237 + $0x60] sm:$0xff] %v1749
        %2075 = vst [vmem:[%s237 + $0x68] sm:$0xff] %v1853
        %2076 = vst [vmem:[%s237 + $0x70] sm:$0xff] %v1957
        %2077 = vst [vmem:[%s237 + $0x78] sm:$0xff] %v2061
        %v2079 = vlaneseq
        %v2080 = vshrl.u32 %v2079, 7
        %v2081 = vsub.s32 0, %v2080
        %v2082 = vrot.slane %v258, %v2081
        %v2083 = vlaneseq
        %v2084 = vshrl.u32 %v2083, 7
        %v2085 = vsub.s32 1, %v2084
        %v2086 = vrot.slane %v258, %v2085
        %v2089 = vmul.f32 %v2082, %v289
        %v2090 = vmul.f32 %v2086, %v289
        %v2091 = vmul.f32 %v2082, %v294
        %v2092 = vmul.f32 %v2086, %v294
        %v2093 = vmul.f32 %v2082, %v299
        %v2094 = vmul.f32 %v2086, %v299
        %v2095 = vmul.f32 %v2082, %v304
        %v2096 = vmul.f32 %v2086, %v304
        %v2097 = vmul.f32 %v2082, %v309
        %v2098 = vmul.f32 %v2086, %v309
        %v2099 = vmul.f32 %v2082, %v314
        %v2100 = vmul.f32 %v2086, %v314
        %v2101 = vmul.f32 %v2082, %v319
        %v2102 = vmul.f32 %v2086, %v319
        %v2103 = vmul.f32 %v2082, %v324
        %v2104 = vmul.f32 %v2086, %v324
        %v2105 = vadd.f32 %v2089, %v345
        %v2106 = vadd.f32 %v2090, %v345
        %v2107 = vadd.f32 %v2091, %v350
        %v2108 = vadd.f32 %v2092, %v350
        %v2109 = vadd.f32 %v2093, %v355
        %v2110 = vadd.f32 %v2094, %v355
        %v2111 = vadd.f32 %v2095, %v360
        %v2112 = vadd.f32 %v2096, %v360
        %v2113 = vadd.f32 %v2097, %v365
        %v2114 = vadd.f32 %v2098, %v365
        %v2115 = vadd.f32 %v2099, %v370
        %v2116 = vadd.f32 %v2100, %v370
        %v2117 = vadd.f32 %v2101, %v375
        %v2118 = vadd.f32 %v2102, %v375
        %v2119 = vadd.f32 %v2103, %v380
        %v2120 = vadd.f32 %v2104, %v380
        %v2121 = vand.u32 2147483647, %v2105
        %vm2122 = vcmp.le.f32.partialorder %v2121, 0.7853982
        %vm2123 = vcmp.lt.s32.totalorder %v2105, 0
        %v2124 = vand.u32 %v2105, 2139095040
        %v2125 = vshrl.u32 %v2124, 23
        %v2126 = vsub.s32 %v2125, 127
        %v2127 = vand.u32 2147483647, %v2105
        %v2128 = vand.u32 %v2127, 8388607
        %v2129 = vor.u32 %v2128, 8388608
        %v2130 = vsub.s32 0, %v2129
        %v2131 = vadd.s32 %v2126, 1
        %vm2132 = vcmp.gt.s32.totalorder %v2131, 0
        %v2133 = vsel %vm2132, %v2131, 0
        %v2134 = vshrl.u32 %v2133, 5
        %v2135 = vand.u32 %v2133, 31
        %v2136 = vsub.s32 32, %v2135
        %v2137 = vshrl.u32 683565275, %v2136
        %v2138 = vshll.u32 683565275, %v2135
        %v2139 = vshrl.u32 2475754826, %v2136
        %v2140 = vor.u32 %v2138, %v2139
        %v2141 = vshll.u32 2475754826, %v2135
        %v2142 = vshrl.u32 2131351028, %v2136
        %v2143 = vor.u32 %v2141, %v2142
        %v2144 = vshll.u32 2131351028, %v2135
        %v2145 = vshrl.u32 2102212464, %v2136
        %v2146 = vor.u32 %v2144, %v2145
        %v2147 = vshll.u32 2102212464, %v2135
        %v2148 = vshrl.u32 920167782, %v2136
        %v2149 = vor.u32 %v2147, %v2148
        %v2150 = vshll.u32 920167782, %v2135
        %v2151 = vshrl.u32 1326507024, %v2136
        %v2152 = vor.u32 %v2150, %v2151
        %vm2153 = vcmp.lt.s32.totalorder %v2134, 1
        %vm2154 = vcmp.lt.s32.totalorder %v2134, 2
        %vm2155 = vcmp.lt.s32.totalorder %v2134, 3
        %vm2156 = vcmp.lt.s32.totalorder %v2134, 4
        %v2157 = vsel %vm2153, %v2137, %v2140
        %v2158 = vsel %vm2156, %v2146, 2102212464
        %v2159 = vsel %vm2155, %v2143, %v2158
        %v2160 = vsel %vm2154, %v2157, %v2159
        %v2161 = vsel %vm2153, %v2140, %v2143
        %v2162 = vsel %vm2156, %v2149, 920167782
        %v2163 = vsel %vm2155, %v2146, %v2162
        %v2164 = vsel %vm2154, %v2161, %v2163
        %v2165 = vsel %vm2153, %v2143, %v2146
        %v2166 = vsel %vm2156, %v2152, 1326507024
        %v2167 = vsel %vm2155, %v2149, %v2166
        %v2168 = vsel %vm2154, %v2165, %v2167
        %v2169 = vshll.u32 %v2129, 8
        %v2170 = vmul.u32.u64.compose %v2169, %v2168
        %v2171 = vextract.low.u32 %v2170
        %v2172 = vextract.high.u32 %v2170
        %v2173 = vmul.u32.u64.compose %v2169, %v2164
        %v2174 = vextract.low.u32 %v2173
        %v2175 = vextract.high.u32 %v2173
        %v2176 = vmul.u32 %v2169, %v2160
        %v2177 = vadd.s32 %v2172, %v2174
        %vm2178 = vc.u32 %v2172, %v2174
        %v2179 = vadd.s32 %v2175, 1
        %v2180 = vsel %vm2178, %v2179, %v2175
        %v2181 = vadd.s32 %v2176, %v2180
        %v2182 = vadd.s32 %v2181, 536870912
        %v2183 = vshrl.u32 %v2182, 30
        %v2184 = vshll.u32 %v2183, 30
        %v2185 = vsub.s32 %v2181, %v2184
        %vm2186 = vcmp.lt.s32.totalorder %v2185, 0
        %v2187 = vsub.s32 0, %v2185
        %v2188 = vsel %vm2186, %v2187, %v2185
        %v2189 = vclz %v2188
        %v2190 = vsub.s32 %v2189, 2
        %vm2191 = vcmp.gt.s32.totalorder 0, %v2190
        %v2192 = vsel %vm2191, 0, %v2190
        %v2193 = vsub.s32 32, %v2192
        %v2194 = vshll.u32 %v2185, %v2192
        %v2195 = vshrl.u32 %v2177, %v2193
        %v2196 = vor.u32 %v2194, %v2195
        %v2197 = vsub.s32 4294967266, %v2192
        %v2198 = vadd.s32 %v2197, 127
        %v2199 = vshll.u32 %v2198, 23
        %v2200 = vor.u32 4788187, %v2199
        %v2201 = vand.u32 2147483647, %v2200
        %v2203 = vcvt.s32.f32 %v2196
        %v2204 = vmul.f32 %v2203, %v2201
        %v2205 = vxor.u32 %v2204, 2147483648
        %v2206 = vsel %vm2123, %v2205, %v2204
        %v2207 = vsub.s32 4, %v2183
        %v2208 = vsel %vm2123, %v2207, %v2183
        %v2209 = vsel %vm2122, %v2105, %v2206
        %v2210 = vsel %vm2122, 0, %v2208
        %v2211 = vcosq.f32.pop %v2209
        %v2212 = vsinq.f32.pop %v2209
        %vm2213 = vweird.f32 %v2105
        %v2214 = vadd.s32 %v2210, 3
        %v2215 = vand.u32 %v2214, 3
        %vm2216 = vcmp.lt.s32.totalorder %v2215, 2
        %vm2217 = vcmp.eq.s32.totalorder %v2215, 0
        %v2218 = vxor.u32 %v2212, 2147483648
        %v2219 = vsel %vm2217, %v2211, %v2218
        %vm2220 = vcmp.eq.s32.totalorder %v2215, 2
        %v2221 = vxor.u32 %v2211, 2147483648
        %v2222 = vsel %vm2220, %v2221, %v2212
        %v2223 = vsel %vm2216, %v2219, %v2222
        %v2224 = vsel %vm2213, nan, %v2223
        %v2225 = vand.u32 2147483647, %v2106
        %vm2226 = vcmp.le.f32.partialorder %v2225, 0.7853982
        %vm2227 = vcmp.lt.s32.totalorder %v2106, 0
        %v2228 = vand.u32 %v2106, 2139095040
        %v2229 = vshrl.u32 %v2228, 23
        %v2230 = vsub.s32 %v2229, 127
        %v2231 = vand.u32 2147483647, %v2106
        %v2232 = vand.u32 %v2231, 8388607
        %v2233 = vor.u32 %v2232, 8388608
        %v2234 = vsub.s32 0, %v2233
        %v2235 = vadd.s32 %v2230, 1
        %vm2236 = vcmp.gt.s32.totalorder %v2235, 0
        %v2237 = vsel %vm2236, %v2235, 0
        %v2238 = vshrl.u32 %v2237, 5
        %v2239 = vand.u32 %v2237, 31
        %v2240 = vsub.s32 32, %v2239
        %v2241 = vshrl.u32 683565275, %v2240
        %v2242 = vshll.u32 683565275, %v2239
        %v2243 = vshrl.u32 2475754826, %v2240
        %v2244 = vor.u32 %v2242, %v2243
        %v2245 = vshll.u32 2475754826, %v2239
        %v2246 = vshrl.u32 2131351028, %v2240
        %v2247 = vor.u32 %v2245, %v2246
        %v2248 = vshll.u32 2131351028, %v2239
        %v2249 = vshrl.u32 2102212464, %v2240
        %v2250 = vor.u32 %v2248, %v2249
        %v2251 = vshll.u32 2102212464, %v2239
        %v2252 = vshrl.u32 920167782, %v2240
        %v2253 = vor.u32 %v2251, %v2252
        %v2254 = vshll.u32 920167782, %v2239
        %v2255 = vshrl.u32 1326507024, %v2240
        %v2256 = vor.u32 %v2254, %v2255
        %vm2257 = vcmp.lt.s32.totalorder %v2238, 1
        %vm2258 = vcmp.lt.s32.totalorder %v2238, 2
        %vm2259 = vcmp.lt.s32.totalorder %v2238, 3
        %vm2260 = vcmp.lt.s32.totalorder %v2238, 4
        %v2261 = vsel %vm2257, %v2241, %v2244
        %v2262 = vsel %vm2260, %v2250, 2102212464
        %v2263 = vsel %vm2259, %v2247, %v2262
        %v2264 = vsel %vm2258, %v2261, %v2263
        %v2265 = vsel %vm2257, %v2244, %v2247
        %v2266 = vsel %vm2260, %v2253, 920167782
        %v2267 = vsel %vm2259, %v2250, %v2266
        %v2268 = vsel %vm2258, %v2265, %v2267
        %v2269 = vsel %vm2257, %v2247, %v2250
        %v2270 = vsel %vm2260, %v2256, 1326507024
        %v2271 = vsel %vm2259, %v2253, %v2270
        %v2272 = vsel %vm2258, %v2269, %v2271
        %v2273 = vshll.u32 %v2233, 8
        %v2274 = vmul.u32.u64.compose %v2273, %v2272
        %v2275 = vextract.low.u32 %v2274
        %v2276 = vextract.high.u32 %v2274
        %v2277 = vmul.u32.u64.compose %v2273, %v2268
        %v2278 = vextract.low.u32 %v2277
        %v2279 = vextract.high.u32 %v2277
        %v2280 = vmul.u32 %v2273, %v2264
        %v2281 = vadd.s32 %v2276, %v2278
        %vm2282 = vc.u32 %v2276, %v2278
        %v2283 = vadd.s32 %v2279, 1
        %v2284 = vsel %vm2282, %v2283, %v2279
        %v2285 = vadd.s32 %v2280, %v2284
        %v2286 = vadd.s32 %v2285, 536870912
        %v2287 = vshrl.u32 %v2286, 30
        %v2288 = vshll.u32 %v2287, 30
        %v2289 = vsub.s32 %v2285, %v2288
        %vm2290 = vcmp.lt.s32.totalorder %v2289, 0
        %v2291 = vsub.s32 0, %v2289
        %v2292 = vsel %vm2290, %v2291, %v2289
        %v2293 = vclz %v2292
        %v2294 = vsub.s32 %v2293, 2
        %vm2295 = vcmp.gt.s32.totalorder 0, %v2294
        %v2296 = vsel %vm2295, 0, %v2294
        %v2297 = vsub.s32 32, %v2296
        %v2298 = vshll.u32 %v2289, %v2296
        %v2299 = vshrl.u32 %v2281, %v2297
        %v2300 = vor.u32 %v2298, %v2299
        %v2301 = vsub.s32 4294967266, %v2296
        %v2302 = vadd.s32 %v2301, 127
        %v2303 = vshll.u32 %v2302, 23
        %v2304 = vor.u32 4788187, %v2303
        %v2305 = vand.u32 2147483647, %v2304
        %v2307 = vcvt.s32.f32 %v2300
        %v2308 = vmul.f32 %v2307, %v2305
        %v2309 = vxor.u32 %v2308, 2147483648
        %v2310 = vsel %vm2227, %v2309, %v2308
        %v2311 = vsub.s32 4, %v2287
        %v2312 = vsel %vm2227, %v2311, %v2287
        %v2313 = vsel %vm2226, %v2106, %v2310
        %v2314 = vsel %vm2226, 0, %v2312
        %v2315 = vcosq.f32.pop %v2313
        %v2316 = vsinq.f32.pop %v2313
        %vm2317 = vweird.f32 %v2106
        %v2318 = vadd.s32 %v2314, 3
        %v2319 = vand.u32 %v2318, 3
        %vm2320 = vcmp.lt.s32.totalorder %v2319, 2
        %vm2321 = vcmp.eq.s32.totalorder %v2319, 0
        %v2322 = vxor.u32 %v2316, 2147483648
        %v2323 = vsel %vm2321, %v2315, %v2322
        %vm2324 = vcmp.eq.s32.totalorder %v2319, 2
        %v2325 = vxor.u32 %v2315, 2147483648
        %v2326 = vsel %vm2324, %v2325, %v2316
        %v2327 = vsel %vm2320, %v2323, %v2326
        %v2328 = vsel %vm2317, nan, %v2327
        %v2329 = vand.u32 2147483647, %v2107
        %vm2330 = vcmp.le.f32.partialorder %v2329, 0.7853982
        %vm2331 = vcmp.lt.s32.totalorder %v2107, 0
        %v2332 = vand.u32 %v2107, 2139095040
        %v2333 = vshrl.u32 %v2332, 23
        %v2334 = vsub.s32 %v2333, 127
        %v2335 = vand.u32 2147483647, %v2107
        %v2336 = vand.u32 %v2335, 8388607
        %v2337 = vor.u32 %v2336, 8388608
        %v2338 = vsub.s32 0, %v2337
        %v2339 = vadd.s32 %v2334, 1
        %vm2340 = vcmp.gt.s32.totalorder %v2339, 0
        %v2341 = vsel %vm2340, %v2339, 0
        %v2342 = vshrl.u32 %v2341, 5
        %v2343 = vand.u32 %v2341, 31
        %v2344 = vsub.s32 32, %v2343
        %v2345 = vshrl.u32 683565275, %v2344
        %v2346 = vshll.u32 683565275, %v2343
        %v2347 = vshrl.u32 2475754826, %v2344
        %v2348 = vor.u32 %v2346, %v2347
        %v2349 = vshll.u32 2475754826, %v2343
        %v2350 = vshrl.u32 2131351028, %v2344
        %v2351 = vor.u32 %v2349, %v2350
        %v2352 = vshll.u32 2131351028, %v2343
        %v2353 = vshrl.u32 2102212464, %v2344
        %v2354 = vor.u32 %v2352, %v2353
        %v2355 = vshll.u32 2102212464, %v2343
        %v2356 = vshrl.u32 920167782, %v2344
        %v2357 = vor.u32 %v2355, %v2356
        %v2358 = vshll.u32 920167782, %v2343
        %v2359 = vshrl.u32 1326507024, %v2344
        %v2360 = vor.u32 %v2358, %v2359
        %vm2361 = vcmp.lt.s32.totalorder %v2342, 1
        %vm2362 = vcmp.lt.s32.totalorder %v2342, 2
        %vm2363 = vcmp.lt.s32.totalorder %v2342, 3
        %vm2364 = vcmp.lt.s32.totalorder %v2342, 4
        %v2365 = vsel %vm2361, %v2345, %v2348
        %v2366 = vsel %vm2364, %v2354, 2102212464
        %v2367 = vsel %vm2363, %v2351, %v2366
        %v2368 = vsel %vm2362, %v2365, %v2367
        %v2369 = vsel %vm2361, %v2348, %v2351
        %v2370 = vsel %vm2364, %v2357, 920167782
        %v2371 = vsel %vm2363, %v2354, %v2370
        %v2372 = vsel %vm2362, %v2369, %v2371
        %v2373 = vsel %vm2361, %v2351, %v2354
        %v2374 = vsel %vm2364, %v2360, 1326507024
        %v2375 = vsel %vm2363, %v2357, %v2374
        %v2376 = vsel %vm2362, %v2373, %v2375
        %v2377 = vshll.u32 %v2337, 8
        %v2378 = vmul.u32.u64.compose %v2377, %v2376
        %v2379 = vextract.low.u32 %v2378
        %v2380 = vextract.high.u32 %v2378
        %v2381 = vmul.u32.u64.compose %v2377, %v2372
        %v2382 = vextract.low.u32 %v2381
        %v2383 = vextract.high.u32 %v2381
        %v2384 = vmul.u32 %v2377, %v2368
        %v2385 = vadd.s32 %v2380, %v2382
        %vm2386 = vc.u32 %v2380, %v2382
        %v2387 = vadd.s32 %v2383, 1
        %v2388 = vsel %vm2386, %v2387, %v2383
        %v2389 = vadd.s32 %v2384, %v2388
        %v2390 = vadd.s32 %v2389, 536870912
        %v2391 = vshrl.u32 %v2390, 30
        %v2392 = vshll.u32 %v2391, 30
        %v2393 = vsub.s32 %v2389, %v2392
        %vm2394 = vcmp.lt.s32.totalorder %v2393, 0
        %v2395 = vsub.s32 0, %v2393
        %v2396 = vsel %vm2394, %v2395, %v2393
        %v2397 = vclz %v2396
        %v2398 = vsub.s32 %v2397, 2
        %vm2399 = vcmp.gt.s32.totalorder 0, %v2398
        %v2400 = vsel %vm2399, 0, %v2398
        %v2401 = vsub.s32 32, %v2400
        %v2402 = vshll.u32 %v2393, %v2400
        %v2403 = vshrl.u32 %v2385, %v2401
        %v2404 = vor.u32 %v2402, %v2403
        %v2405 = vsub.s32 4294967266, %v2400
        %v2406 = vadd.s32 %v2405, 127
        %v2407 = vshll.u32 %v2406, 23
        %v2408 = vor.u32 4788187, %v2407
        %v2409 = vand.u32 2147483647, %v2408
        %v2411 = vcvt.s32.f32 %v2404
        %v2412 = vmul.f32 %v2411, %v2409
        %v2413 = vxor.u32 %v2412, 2147483648
        %v2414 = vsel %vm2331, %v2413, %v2412
        %v2415 = vsub.s32 4, %v2391
        %v2416 = vsel %vm2331, %v2415, %v2391
        %v2417 = vsel %vm2330, %v2107, %v2414
        %v2418 = vsel %vm2330, 0, %v2416
        %v2419 = vcosq.f32.pop %v2417
        %v2420 = vsinq.f32.pop %v2417
        %vm2421 = vweird.f32 %v2107
        %v2422 = vadd.s32 %v2418, 3
        %v2423 = vand.u32 %v2422, 3
        %vm2424 = vcmp.lt.s32.totalorder %v2423, 2
        %vm2425 = vcmp.eq.s32.totalorder %v2423, 0
        %v2426 = vxor.u32 %v2420, 2147483648
        %v2427 = vsel %vm2425, %v2419, %v2426
        %vm2428 = vcmp.eq.s32.totalorder %v2423, 2
        %v2429 = vxor.u32 %v2419, 2147483648
        %v2430 = vsel %vm2428, %v2429, %v2420
        %v2431 = vsel %vm2424, %v2427, %v2430
        %v2432 = vsel %vm2421, nan, %v2431
        %v2433 = vand.u32 2147483647, %v2108
        %vm2434 = vcmp.le.f32.partialorder %v2433, 0.7853982
        %vm2435 = vcmp.lt.s32.totalorder %v2108, 0
        %v2436 = vand.u32 %v2108, 2139095040
        %v2437 = vshrl.u32 %v2436, 23
        %v2438 = vsub.s32 %v2437, 127
        %v2439 = vand.u32 2147483647, %v2108
        %v2440 = vand.u32 %v2439, 8388607
        %v2441 = vor.u32 %v2440, 8388608
        %v2442 = vsub.s32 0, %v2441
        %v2443 = vadd.s32 %v2438, 1
        %vm2444 = vcmp.gt.s32.totalorder %v2443, 0
        %v2445 = vsel %vm2444, %v2443, 0
        %v2446 = vshrl.u32 %v2445, 5
        %v2447 = vand.u32 %v2445, 31
        %v2448 = vsub.s32 32, %v2447
        %v2449 = vshrl.u32 683565275, %v2448
        %v2450 = vshll.u32 683565275, %v2447
        %v2451 = vshrl.u32 2475754826, %v2448
        %v2452 = vor.u32 %v2450, %v2451
        %v2453 = vshll.u32 2475754826, %v2447
        %v2454 = vshrl.u32 2131351028, %v2448
        %v2455 = vor.u32 %v2453, %v2454
        %v2456 = vshll.u32 2131351028, %v2447
        %v2457 = vshrl.u32 2102212464, %v2448
        %v2458 = vor.u32 %v2456, %v2457
        %v2459 = vshll.u32 2102212464, %v2447
        %v2460 = vshrl.u32 920167782, %v2448
        %v2461 = vor.u32 %v2459, %v2460
        %v2462 = vshll.u32 920167782, %v2447
        %v2463 = vshrl.u32 1326507024, %v2448
        %v2464 = vor.u32 %v2462, %v2463
        %vm2465 = vcmp.lt.s32.totalorder %v2446, 1
        %vm2466 = vcmp.lt.s32.totalorder %v2446, 2
        %vm2467 = vcmp.lt.s32.totalorder %v2446, 3
        %vm2468 = vcmp.lt.s32.totalorder %v2446, 4
        %v2469 = vsel %vm2465, %v2449, %v2452
        %v2470 = vsel %vm2468, %v2458, 2102212464
        %v2471 = vsel %vm2467, %v2455, %v2470
        %v2472 = vsel %vm2466, %v2469, %v2471
        %v2473 = vsel %vm2465, %v2452, %v2455
        %v2474 = vsel %vm2468, %v2461, 920167782
        %v2475 = vsel %vm2467, %v2458, %v2474
        %v2476 = vsel %vm2466, %v2473, %v2475
        %v2477 = vsel %vm2465, %v2455, %v2458
        %v2478 = vsel %vm2468, %v2464, 1326507024
        %v2479 = vsel %vm2467, %v2461, %v2478
        %v2480 = vsel %vm2466, %v2477, %v2479
        %v2481 = vshll.u32 %v2441, 8
        %v2482 = vmul.u32.u64.compose %v2481, %v2480
        %v2483 = vextract.low.u32 %v2482
        %v2484 = vextract.high.u32 %v2482
        %v2485 = vmul.u32.u64.compose %v2481, %v2476
        %v2486 = vextract.low.u32 %v2485
        %v2487 = vextract.high.u32 %v2485
        %v2488 = vmul.u32 %v2481, %v2472
        %v2489 = vadd.s32 %v2484, %v2486
        %vm2490 = vc.u32 %v2484, %v2486
        %v2491 = vadd.s32 %v2487, 1
        %v2492 = vsel %vm2490, %v2491, %v2487
        %v2493 = vadd.s32 %v2488, %v2492
        %v2494 = vadd.s32 %v2493, 536870912
        %v2495 = vshrl.u32 %v2494, 30
        %v2496 = vshll.u32 %v2495, 30
        %v2497 = vsub.s32 %v2493, %v2496
        %vm2498 = vcmp.lt.s32.totalorder %v2497, 0
        %v2499 = vsub.s32 0, %v2497
        %v2500 = vsel %vm2498, %v2499, %v2497
        %v2501 = vclz %v2500
        %v2502 = vsub.s32 %v2501, 2
        %vm2503 = vcmp.gt.s32.totalorder 0, %v2502
        %v2504 = vsel %vm2503, 0, %v2502
        %v2505 = vsub.s32 32, %v2504
        %v2506 = vshll.u32 %v2497, %v2504
        %v2507 = vshrl.u32 %v2489, %v2505
        %v2508 = vor.u32 %v2506, %v2507
        %v2509 = vsub.s32 4294967266, %v2504
        %v2510 = vadd.s32 %v2509, 127
        %v2511 = vshll.u32 %v2510, 23
        %v2512 = vor.u32 4788187, %v2511
        %v2513 = vand.u32 2147483647, %v2512
        %v2515 = vcvt.s32.f32 %v2508
        %v2516 = vmul.f32 %v2515, %v2513
        %v2517 = vxor.u32 %v2516, 2147483648
        %v2518 = vsel %vm2435, %v2517, %v2516
        %v2519 = vsub.s32 4, %v2495
        %v2520 = vsel %vm2435, %v2519, %v2495
        %v2521 = vsel %vm2434, %v2108, %v2518
        %v2522 = vsel %vm2434, 0, %v2520
        %v2523 = vcosq.f32.pop %v2521
        %v2524 = vsinq.f32.pop %v2521
        %vm2525 = vweird.f32 %v2108
        %v2526 = vadd.s32 %v2522, 3
        %v2527 = vand.u32 %v2526, 3
        %vm2528 = vcmp.lt.s32.totalorder %v2527, 2
        %vm2529 = vcmp.eq.s32.totalorder %v2527, 0
        %v2530 = vxor.u32 %v2524, 2147483648
        %v2531 = vsel %vm2529, %v2523, %v2530
        %vm2532 = vcmp.eq.s32.totalorder %v2527, 2
        %v2533 = vxor.u32 %v2523, 2147483648
        %v2534 = vsel %vm2532, %v2533, %v2524
        %v2535 = vsel %vm2528, %v2531, %v2534
        %v2536 = vsel %vm2525, nan, %v2535
        %v2537 = vand.u32 2147483647, %v2109
        %vm2538 = vcmp.le.f32.partialorder %v2537, 0.7853982
        %vm2539 = vcmp.lt.s32.totalorder %v2109, 0
        %v2540 = vand.u32 %v2109, 2139095040
        %v2541 = vshrl.u32 %v2540, 23
        %v2542 = vsub.s32 %v2541, 127
        %v2543 = vand.u32 2147483647, %v2109
        %v2544 = vand.u32 %v2543, 8388607
        %v2545 = vor.u32 %v2544, 8388608
        %v2546 = vsub.s32 0, %v2545
        %v2547 = vadd.s32 %v2542, 1
        %vm2548 = vcmp.gt.s32.totalorder %v2547, 0
        %v2549 = vsel %vm2548, %v2547, 0
        %v2550 = vshrl.u32 %v2549, 5
        %v2551 = vand.u32 %v2549, 31
        %v2552 = vsub.s32 32, %v2551
        %v2553 = vshrl.u32 683565275, %v2552
        %v2554 = vshll.u32 683565275, %v2551
        %v2555 = vshrl.u32 2475754826, %v2552
        %v2556 = vor.u32 %v2554, %v2555
        %v2557 = vshll.u32 2475754826, %v2551
        %v2558 = vshrl.u32 2131351028, %v2552
        %v2559 = vor.u32 %v2557, %v2558
        %v2560 = vshll.u32 2131351028, %v2551
        %v2561 = vshrl.u32 2102212464, %v2552
        %v2562 = vor.u32 %v2560, %v2561
        %v2563 = vshll.u32 2102212464, %v2551
        %v2564 = vshrl.u32 920167782, %v2552
        %v2565 = vor.u32 %v2563, %v2564
        %v2566 = vshll.u32 920167782, %v2551
        %v2567 = vshrl.u32 1326507024, %v2552
        %v2568 = vor.u32 %v2566, %v2567
        %vm2569 = vcmp.lt.s32.totalorder %v2550, 1
        %vm2570 = vcmp.lt.s32.totalorder %v2550, 2
        %vm2571 = vcmp.lt.s32.totalorder %v2550, 3
        %vm2572 = vcmp.lt.s32.totalorder %v2550, 4
        %v2573 = vsel %vm2569, %v2553, %v2556
        %v2574 = vsel %vm2572, %v2562, 2102212464
        %v2575 = vsel %vm2571, %v2559, %v2574
        %v2576 = vsel %vm2570, %v2573, %v2575
        %v2577 = vsel %vm2569, %v2556, %v2559
        %v2578 = vsel %vm2572, %v2565, 920167782
        %v2579 = vsel %vm2571, %v2562, %v2578
        %v2580 = vsel %vm2570, %v2577, %v2579
        %v2581 = vsel %vm2569, %v2559, %v2562
        %v2582 = vsel %vm2572, %v2568, 1326507024
        %v2583 = vsel %vm2571, %v2565, %v2582
        %v2584 = vsel %vm2570, %v2581, %v2583
        %v2585 = vshll.u32 %v2545, 8
        %v2586 = vmul.u32.u64.compose %v2585, %v2584
        %v2587 = vextract.low.u32 %v2586
        %v2588 = vextract.high.u32 %v2586
        %v2589 = vmul.u32.u64.compose %v2585, %v2580
        %v2590 = vextract.low.u32 %v2589
        %v2591 = vextract.high.u32 %v2589
        %v2592 = vmul.u32 %v2585, %v2576
        %v2593 = vadd.s32 %v2588, %v2590
        %vm2594 = vc.u32 %v2588, %v2590
        %v2595 = vadd.s32 %v2591, 1
        %v2596 = vsel %vm2594, %v2595, %v2591
        %v2597 = vadd.s32 %v2592, %v2596
        %v2598 = vadd.s32 %v2597, 536870912
        %v2599 = vshrl.u32 %v2598, 30
        %v2600 = vshll.u32 %v2599, 30
        %v2601 = vsub.s32 %v2597, %v2600
        %vm2602 = vcmp.lt.s32.totalorder %v2601, 0
        %v2603 = vsub.s32 0, %v2601
        %v2604 = vsel %vm2602, %v2603, %v2601
        %v2605 = vclz %v2604
        %v2606 = vsub.s32 %v2605, 2
        %vm2607 = vcmp.gt.s32.totalorder 0, %v2606
        %v2608 = vsel %vm2607, 0, %v2606
        %v2609 = vsub.s32 32, %v2608
        %v2610 = vshll.u32 %v2601, %v2608
        %v2611 = vshrl.u32 %v2593, %v2609
        %v2612 = vor.u32 %v2610, %v2611
        %v2613 = vsub.s32 4294967266, %v2608
        %v2614 = vadd.s32 %v2613, 127
        %v2615 = vshll.u32 %v2614, 23
        %v2616 = vor.u32 4788187, %v2615
        %v2617 = vand.u32 2147483647, %v2616
        %v2619 = vcvt.s32.f32 %v2612
        %v2620 = vmul.f32 %v2619, %v2617
        %v2621 = vxor.u32 %v2620, 2147483648
        %v2622 = vsel %vm2539, %v2621, %v2620
        %v2623 = vsub.s32 4, %v2599
        %v2624 = vsel %vm2539, %v2623, %v2599
        %v2625 = vsel %vm2538, %v2109, %v2622
        %v2626 = vsel %vm2538, 0, %v2624
        %v2627 = vcosq.f32.pop %v2625
        %v2628 = vsinq.f32.pop %v2625
        %vm2629 = vweird.f32 %v2109
        %v2630 = vadd.s32 %v2626, 3
        %v2631 = vand.u32 %v2630, 3
        %vm2632 = vcmp.lt.s32.totalorder %v2631, 2
        %vm2633 = vcmp.eq.s32.totalorder %v2631, 0
        %v2634 = vxor.u32 %v2628, 2147483648
        %v2635 = vsel %vm2633, %v2627, %v2634
        %vm2636 = vcmp.eq.s32.totalorder %v2631, 2
        %v2637 = vxor.u32 %v2627, 2147483648
        %v2638 = vsel %vm2636, %v2637, %v2628
        %v2639 = vsel %vm2632, %v2635, %v2638
        %v2640 = vsel %vm2629, nan, %v2639
        %v2641 = vand.u32 2147483647, %v2110
        %vm2642 = vcmp.le.f32.partialorder %v2641, 0.7853982
        %vm2643 = vcmp.lt.s32.totalorder %v2110, 0
        %v2644 = vand.u32 %v2110, 2139095040
        %v2645 = vshrl.u32 %v2644, 23
        %v2646 = vsub.s32 %v2645, 127
        %v2647 = vand.u32 2147483647, %v2110
        %v2648 = vand.u32 %v2647, 8388607
        %v2649 = vor.u32 %v2648, 8388608
        %v2650 = vsub.s32 0, %v2649
        %v2651 = vadd.s32 %v2646, 1
        %vm2652 = vcmp.gt.s32.totalorder %v2651, 0
        %v2653 = vsel %vm2652, %v2651, 0
        %v2654 = vshrl.u32 %v2653, 5
        %v2655 = vand.u32 %v2653, 31
        %v2656 = vsub.s32 32, %v2655
        %v2657 = vshrl.u32 683565275, %v2656
        %v2658 = vshll.u32 683565275, %v2655
        %v2659 = vshrl.u32 2475754826, %v2656
        %v2660 = vor.u32 %v2658, %v2659
        %v2661 = vshll.u32 2475754826, %v2655
        %v2662 = vshrl.u32 2131351028, %v2656
        %v2663 = vor.u32 %v2661, %v2662
        %v2664 = vshll.u32 2131351028, %v2655
        %v2665 = vshrl.u32 2102212464, %v2656
        %v2666 = vor.u32 %v2664, %v2665
        %v2667 = vshll.u32 2102212464, %v2655
        %v2668 = vshrl.u32 920167782, %v2656
        %v2669 = vor.u32 %v2667, %v2668
        %v2670 = vshll.u32 920167782, %v2655
        %v2671 = vshrl.u32 1326507024, %v2656
        %v2672 = vor.u32 %v2670, %v2671
        %vm2673 = vcmp.lt.s32.totalorder %v2654, 1
        %vm2674 = vcmp.lt.s32.totalorder %v2654, 2
        %vm2675 = vcmp.lt.s32.totalorder %v2654, 3
        %vm2676 = vcmp.lt.s32.totalorder %v2654, 4
        %v2677 = vsel %vm2673, %v2657, %v2660
        %v2678 = vsel %vm2676, %v2666, 2102212464
        %v2679 = vsel %vm2675, %v2663, %v2678
        %v2680 = vsel %vm2674, %v2677, %v2679
        %v2681 = vsel %vm2673, %v2660, %v2663
        %v2682 = vsel %vm2676, %v2669, 920167782
        %v2683 = vsel %vm2675, %v2666, %v2682
        %v2684 = vsel %vm2674, %v2681, %v2683
        %v2685 = vsel %vm2673, %v2663, %v2666
        %v2686 = vsel %vm2676, %v2672, 1326507024
        %v2687 = vsel %vm2675, %v2669, %v2686
        %v2688 = vsel %vm2674, %v2685, %v2687
        %v2689 = vshll.u32 %v2649, 8
        %v2690 = vmul.u32.u64.compose %v2689, %v2688
        %v2691 = vextract.low.u32 %v2690
        %v2692 = vextract.high.u32 %v2690
        %v2693 = vmul.u32.u64.compose %v2689, %v2684
        %v2694 = vextract.low.u32 %v2693
        %v2695 = vextract.high.u32 %v2693
        %v2696 = vmul.u32 %v2689, %v2680
        %v2697 = vadd.s32 %v2692, %v2694
        %vm2698 = vc.u32 %v2692, %v2694
        %v2699 = vadd.s32 %v2695, 1
        %v2700 = vsel %vm2698, %v2699, %v2695
        %v2701 = vadd.s32 %v2696, %v2700
        %v2702 = vadd.s32 %v2701, 536870912
        %v2703 = vshrl.u32 %v2702, 30
        %v2704 = vshll.u32 %v2703, 30
        %v2705 = vsub.s32 %v2701, %v2704
        %vm2706 = vcmp.lt.s32.totalorder %v2705, 0
        %v2707 = vsub.s32 0, %v2705
        %v2708 = vsel %vm2706, %v2707, %v2705
        %v2709 = vclz %v2708
        %v2710 = vsub.s32 %v2709, 2
        %vm2711 = vcmp.gt.s32.totalorder 0, %v2710
        %v2712 = vsel %vm2711, 0, %v2710
        %v2713 = vsub.s32 32, %v2712
        %v2714 = vshll.u32 %v2705, %v2712
        %v2715 = vshrl.u32 %v2697, %v2713
        %v2716 = vor.u32 %v2714, %v2715
        %v2717 = vsub.s32 4294967266, %v2712
        %v2718 = vadd.s32 %v2717, 127
        %v2719 = vshll.u32 %v2718, 23
        %v2720 = vor.u32 4788187, %v2719
        %v2721 = vand.u32 2147483647, %v2720
        %v2723 = vcvt.s32.f32 %v2716
        %v2724 = vmul.f32 %v2723, %v2721
        %v2725 = vxor.u32 %v2724, 2147483648
        %v2726 = vsel %vm2643, %v2725, %v2724
        %v2727 = vsub.s32 4, %v2703
        %v2728 = vsel %vm2643, %v2727, %v2703
        %v2729 = vsel %vm2642, %v2110, %v2726
        %v2730 = vsel %vm2642, 0, %v2728
        %v2731 = vcosq.f32.pop %v2729
        %v2732 = vsinq.f32.pop %v2729
        %vm2733 = vweird.f32 %v2110
        %v2734 = vadd.s32 %v2730, 3
        %v2735 = vand.u32 %v2734, 3
        %vm2736 = vcmp.lt.s32.totalorder %v2735, 2
        %vm2737 = vcmp.eq.s32.totalorder %v2735, 0
        %v2738 = vxor.u32 %v2732, 2147483648
        %v2739 = vsel %vm2737, %v2731, %v2738
        %vm2740 = vcmp.eq.s32.totalorder %v2735, 2
        %v2741 = vxor.u32 %v2731, 2147483648
        %v2742 = vsel %vm2740, %v2741, %v2732
        %v2743 = vsel %vm2736, %v2739, %v2742
        %v2744 = vsel %vm2733, nan, %v2743
        %v2745 = vand.u32 2147483647, %v2111
        %vm2746 = vcmp.le.f32.partialorder %v2745, 0.7853982
        %vm2747 = vcmp.lt.s32.totalorder %v2111, 0
        %v2748 = vand.u32 %v2111, 2139095040
        %v2749 = vshrl.u32 %v2748, 23
        %v2750 = vsub.s32 %v2749, 127
        %v2751 = vand.u32 2147483647, %v2111
        %v2752 = vand.u32 %v2751, 8388607
        %v2753 = vor.u32 %v2752, 8388608
        %v2754 = vsub.s32 0, %v2753
        %v2755 = vadd.s32 %v2750, 1
        %vm2756 = vcmp.gt.s32.totalorder %v2755, 0
        %v2757 = vsel %vm2756, %v2755, 0
        %v2758 = vshrl.u32 %v2757, 5
        %v2759 = vand.u32 %v2757, 31
        %v2760 = vsub.s32 32, %v2759
        %v2761 = vshrl.u32 683565275, %v2760
        %v2762 = vshll.u32 683565275, %v2759
        %v2763 = vshrl.u32 2475754826, %v2760
        %v2764 = vor.u32 %v2762, %v2763
        %v2765 = vshll.u32 2475754826, %v2759
        %v2766 = vshrl.u32 2131351028, %v2760
        %v2767 = vor.u32 %v2765, %v2766
        %v2768 = vshll.u32 2131351028, %v2759
        %v2769 = vshrl.u32 2102212464, %v2760
        %v2770 = vor.u32 %v2768, %v2769
        %v2771 = vshll.u32 2102212464, %v2759
        %v2772 = vshrl.u32 920167782, %v2760
        %v2773 = vor.u32 %v2771, %v2772
        %v2774 = vshll.u32 920167782, %v2759
        %v2775 = vshrl.u32 1326507024, %v2760
        %v2776 = vor.u32 %v2774, %v2775
        %vm2777 = vcmp.lt.s32.totalorder %v2758, 1
        %vm2778 = vcmp.lt.s32.totalorder %v2758, 2
        %vm2779 = vcmp.lt.s32.totalorder %v2758, 3
        %vm2780 = vcmp.lt.s32.totalorder %v2758, 4
        %v2781 = vsel %vm2777, %v2761, %v2764
        %v2782 = vsel %vm2780, %v2770, 2102212464
        %v2783 = vsel %vm2779, %v2767, %v2782
        %v2784 = vsel %vm2778, %v2781, %v2783
        %v2785 = vsel %vm2777, %v2764, %v2767
        %v2786 = vsel %vm2780, %v2773, 920167782
        %v2787 = vsel %vm2779, %v2770, %v2786
        %v2788 = vsel %vm2778, %v2785, %v2787
        %v2789 = vsel %vm2777, %v2767, %v2770
        %v2790 = vsel %vm2780, %v2776, 1326507024
        %v2791 = vsel %vm2779, %v2773, %v2790
        %v2792 = vsel %vm2778, %v2789, %v2791
        %v2793 = vshll.u32 %v2753, 8
        %v2794 = vmul.u32.u64.compose %v2793, %v2792
        %v2795 = vextract.low.u32 %v2794
        %v2796 = vextract.high.u32 %v2794
        %v2797 = vmul.u32.u64.compose %v2793, %v2788
        %v2798 = vextract.low.u32 %v2797
        %v2799 = vextract.high.u32 %v2797
        %v2800 = vmul.u32 %v2793, %v2784
        %v2801 = vadd.s32 %v2796, %v2798
        %vm2802 = vc.u32 %v2796, %v2798
        %v2803 = vadd.s32 %v2799, 1
        %v2804 = vsel %vm2802, %v2803, %v2799
        %v2805 = vadd.s32 %v2800, %v2804
        %v2806 = vadd.s32 %v2805, 536870912
        %v2807 = vshrl.u32 %v2806, 30
        %v2808 = vshll.u32 %v2807, 30
        %v2809 = vsub.s32 %v2805, %v2808
        %vm2810 = vcmp.lt.s32.totalorder %v2809, 0
        %v2811 = vsub.s32 0, %v2809
        %v2812 = vsel %vm2810, %v2811, %v2809
        %v2813 = vclz %v2812
        %v2814 = vsub.s32 %v2813, 2
        %vm2815 = vcmp.gt.s32.totalorder 0, %v2814
        %v2816 = vsel %vm2815, 0, %v2814
        %v2817 = vsub.s32 32, %v2816
        %v2818 = vshll.u32 %v2809, %v2816
        %v2819 = vshrl.u32 %v2801, %v2817
        %v2820 = vor.u32 %v2818, %v2819
        %v2821 = vsub.s32 4294967266, %v2816
        %v2822 = vadd.s32 %v2821, 127
        %v2823 = vshll.u32 %v2822, 23
        %v2824 = vor.u32 4788187, %v2823
        %v2825 = vand.u32 2147483647, %v2824
        %v2827 = vcvt.s32.f32 %v2820
        %v2828 = vmul.f32 %v2827, %v2825
        %v2829 = vxor.u32 %v2828, 2147483648
        %v2830 = vsel %vm2747, %v2829, %v2828
        %v2831 = vsub.s32 4, %v2807
        %v2832 = vsel %vm2747, %v2831, %v2807
        %v2833 = vsel %vm2746, %v2111, %v2830
        %v2834 = vsel %vm2746, 0, %v2832
        %v2835 = vcosq.f32.pop %v2833
        %v2836 = vsinq.f32.pop %v2833
        %vm2837 = vweird.f32 %v2111
        %v2838 = vadd.s32 %v2834, 3
        %v2839 = vand.u32 %v2838, 3
        %vm2840 = vcmp.lt.s32.totalorder %v2839, 2
        %vm2841 = vcmp.eq.s32.totalorder %v2839, 0
        %v2842 = vxor.u32 %v2836, 2147483648
        %v2843 = vsel %vm2841, %v2835, %v2842
        %vm2844 = vcmp.eq.s32.totalorder %v2839, 2
        %v2845 = vxor.u32 %v2835, 2147483648
        %v2846 = vsel %vm2844, %v2845, %v2836
        %v2847 = vsel %vm2840, %v2843, %v2846
        %v2848 = vsel %vm2837, nan, %v2847
        %v2849 = vand.u32 2147483647, %v2112
        %vm2850 = vcmp.le.f32.partialorder %v2849, 0.7853982
        %vm2851 = vcmp.lt.s32.totalorder %v2112, 0
        %v2852 = vand.u32 %v2112, 2139095040
        %v2853 = vshrl.u32 %v2852, 23
        %v2854 = vsub.s32 %v2853, 127
        %v2855 = vand.u32 2147483647, %v2112
        %v2856 = vand.u32 %v2855, 8388607
        %v2857 = vor.u32 %v2856, 8388608
        %v2858 = vsub.s32 0, %v2857
        %v2859 = vadd.s32 %v2854, 1
        %vm2860 = vcmp.gt.s32.totalorder %v2859, 0
        %v2861 = vsel %vm2860, %v2859, 0
        %v2862 = vshrl.u32 %v2861, 5
        %v2863 = vand.u32 %v2861, 31
        %v2864 = vsub.s32 32, %v2863
        %v2865 = vshrl.u32 683565275, %v2864
        %v2866 = vshll.u32 683565275, %v2863
        %v2867 = vshrl.u32 2475754826, %v2864
        %v2868 = vor.u32 %v2866, %v2867
        %v2869 = vshll.u32 2475754826, %v2863
        %v2870 = vshrl.u32 2131351028, %v2864
        %v2871 = vor.u32 %v2869, %v2870
        %v2872 = vshll.u32 2131351028, %v2863
        %v2873 = vshrl.u32 2102212464, %v2864
        %v2874 = vor.u32 %v2872, %v2873
        %v2875 = vshll.u32 2102212464, %v2863
        %v2876 = vshrl.u32 920167782, %v2864
        %v2877 = vor.u32 %v2875, %v2876
        %v2878 = vshll.u32 920167782, %v2863
        %v2879 = vshrl.u32 1326507024, %v2864
        %v2880 = vor.u32 %v2878, %v2879
        %vm2881 = vcmp.lt.s32.totalorder %v2862, 1
        %vm2882 = vcmp.lt.s32.totalorder %v2862, 2
        %vm2883 = vcmp.lt.s32.totalorder %v2862, 3
        %vm2884 = vcmp.lt.s32.totalorder %v2862, 4
        %v2885 = vsel %vm2881, %v2865, %v2868
        %v2886 = vsel %vm2884, %v2874, 2102212464
        %v2887 = vsel %vm2883, %v2871, %v2886
        %v2888 = vsel %vm2882, %v2885, %v2887
        %v2889 = vsel %vm2881, %v2868, %v2871
        %v2890 = vsel %vm2884, %v2877, 920167782
        %v2891 = vsel %vm2883, %v2874, %v2890
        %v2892 = vsel %vm2882, %v2889, %v2891
        %v2893 = vsel %vm2881, %v2871, %v2874
        %v2894 = vsel %vm2884, %v2880, 1326507024
        %v2895 = vsel %vm2883, %v2877, %v2894
        %v2896 = vsel %vm2882, %v2893, %v2895
        %v2897 = vshll.u32 %v2857, 8
        %v2898 = vmul.u32.u64.compose %v2897, %v2896
        %v2899 = vextract.low.u32 %v2898
        %v2900 = vextract.high.u32 %v2898
        %v2901 = vmul.u32.u64.compose %v2897, %v2892
        %v2902 = vextract.low.u32 %v2901
        %v2903 = vextract.high.u32 %v2901
        %v2904 = vmul.u32 %v2897, %v2888
        %v2905 = vadd.s32 %v2900, %v2902
        %vm2906 = vc.u32 %v2900, %v2902
        %v2907 = vadd.s32 %v2903, 1
        %v2908 = vsel %vm2906, %v2907, %v2903
        %v2909 = vadd.s32 %v2904, %v2908
        %v2910 = vadd.s32 %v2909, 536870912
        %v2911 = vshrl.u32 %v2910, 30
        %v2912 = vshll.u32 %v2911, 30
        %v2913 = vsub.s32 %v2909, %v2912
        %vm2914 = vcmp.lt.s32.totalorder %v2913, 0
        %v2915 = vsub.s32 0, %v2913
        %v2916 = vsel %vm2914, %v2915, %v2913
        %v2917 = vclz %v2916
        %v2918 = vsub.s32 %v2917, 2
        %vm2919 = vcmp.gt.s32.totalorder 0, %v2918
        %v2920 = vsel %vm2919, 0, %v2918
        %v2921 = vsub.s32 32, %v2920
        %v2922 = vshll.u32 %v2913, %v2920
        %v2923 = vshrl.u32 %v2905, %v2921
        %v2924 = vor.u32 %v2922, %v2923
        %v2925 = vsub.s32 4294967266, %v2920
        %v2926 = vadd.s32 %v2925, 127
        %v2927 = vshll.u32 %v2926, 23
        %v2928 = vor.u32 4788187, %v2927
        %v2929 = vand.u32 2147483647, %v2928
        %v2931 = vcvt.s32.f32 %v2924
        %v2932 = vmul.f32 %v2931, %v2929
        %v2933 = vxor.u32 %v2932, 2147483648
        %v2934 = vsel %vm2851, %v2933, %v2932
        %v2935 = vsub.s32 4, %v2911
        %v2936 = vsel %vm2851, %v2935, %v2911
        %v2937 = vsel %vm2850, %v2112, %v2934
        %v2938 = vsel %vm2850, 0, %v2936
        %v2939 = vcosq.f32.pop %v2937
        %v2940 = vsinq.f32.pop %v2937
        %vm2941 = vweird.f32 %v2112
        %v2942 = vadd.s32 %v2938, 3
        %v2943 = vand.u32 %v2942, 3
        %vm2944 = vcmp.lt.s32.totalorder %v2943, 2
        %vm2945 = vcmp.eq.s32.totalorder %v2943, 0
        %v2946 = vxor.u32 %v2940, 2147483648
        %v2947 = vsel %vm2945, %v2939, %v2946
        %vm2948 = vcmp.eq.s32.totalorder %v2943, 2
        %v2949 = vxor.u32 %v2939, 2147483648
        %v2950 = vsel %vm2948, %v2949, %v2940
        %v2951 = vsel %vm2944, %v2947, %v2950
        %v2952 = vsel %vm2941, nan, %v2951
        %v2953 = vand.u32 2147483647, %v2113
        %vm2954 = vcmp.le.f32.partialorder %v2953, 0.7853982
        %vm2955 = vcmp.lt.s32.totalorder %v2113, 0
        %v2956 = vand.u32 %v2113, 2139095040
        %v2957 = vshrl.u32 %v2956, 23
        %v2958 = vsub.s32 %v2957, 127
        %v2959 = vand.u32 2147483647, %v2113
        %v2960 = vand.u32 %v2959, 8388607
        %v2961 = vor.u32 %v2960, 8388608
        %v2962 = vsub.s32 0, %v2961
        %v2963 = vadd.s32 %v2958, 1
        %vm2964 = vcmp.gt.s32.totalorder %v2963, 0
        %v2965 = vsel %vm2964, %v2963, 0
        %v2966 = vshrl.u32 %v2965, 5
        %v2967 = vand.u32 %v2965, 31
        %v2968 = vsub.s32 32, %v2967
        %v2969 = vshrl.u32 683565275, %v2968
        %v2970 = vshll.u32 683565275, %v2967
        %v2971 = vshrl.u32 2475754826, %v2968
        %v2972 = vor.u32 %v2970, %v2971
        %v2973 = vshll.u32 2475754826, %v2967
        %v2974 = vshrl.u32 2131351028, %v2968
        %v2975 = vor.u32 %v2973, %v2974
        %v2976 = vshll.u32 2131351028, %v2967
        %v2977 = vshrl.u32 2102212464, %v2968
        %v2978 = vor.u32 %v2976, %v2977
        %v2979 = vshll.u32 2102212464, %v2967
        %v2980 = vshrl.u32 920167782, %v2968
        %v2981 = vor.u32 %v2979, %v2980
        %v2982 = vshll.u32 920167782, %v2967
        %v2983 = vshrl.u32 1326507024, %v2968
        %v2984 = vor.u32 %v2982, %v2983
        %vm2985 = vcmp.lt.s32.totalorder %v2966, 1
        %vm2986 = vcmp.lt.s32.totalorder %v2966, 2
        %vm2987 = vcmp.lt.s32.totalorder %v2966, 3
        %vm2988 = vcmp.lt.s32.totalorder %v2966, 4
        %v2989 = vsel %vm2985, %v2969, %v2972
        %v2990 = vsel %vm2988, %v2978, 2102212464
        %v2991 = vsel %vm2987, %v2975, %v2990
        %v2992 = vsel %vm2986, %v2989, %v2991
        %v2993 = vsel %vm2985, %v2972, %v2975
        %v2994 = vsel %vm2988, %v2981, 920167782
        %v2995 = vsel %vm2987, %v2978, %v2994
        %v2996 = vsel %vm2986, %v2993, %v2995
        %v2997 = vsel %vm2985, %v2975, %v2978
        %v2998 = vsel %vm2988, %v2984, 1326507024
        %v2999 = vsel %vm2987, %v2981, %v2998
        %v3000 = vsel %vm2986, %v2997, %v2999
        %v3001 = vshll.u32 %v2961, 8
        %v3002 = vmul.u32.u64.compose %v3001, %v3000
        %v3003 = vextract.low.u32 %v3002
        %v3004 = vextract.high.u32 %v3002
        %v3005 = vmul.u32.u64.compose %v3001, %v2996
        %v3006 = vextract.low.u32 %v3005
        %v3007 = vextract.high.u32 %v3005
        %v3008 = vmul.u32 %v3001, %v2992
        %v3009 = vadd.s32 %v3004, %v3006
        %vm3010 = vc.u32 %v3004, %v3006
        %v3011 = vadd.s32 %v3007, 1
        %v3012 = vsel %vm3010, %v3011, %v3007
        %v3013 = vadd.s32 %v3008, %v3012
        %v3014 = vadd.s32 %v3013, 536870912
        %v3015 = vshrl.u32 %v3014, 30
        %v3016 = vshll.u32 %v3015, 30
        %v3017 = vsub.s32 %v3013, %v3016
        %vm3018 = vcmp.lt.s32.totalorder %v3017, 0
        %v3019 = vsub.s32 0, %v3017
        %v3020 = vsel %vm3018, %v3019, %v3017
        %v3021 = vclz %v3020
        %v3022 = vsub.s32 %v3021, 2
        %vm3023 = vcmp.gt.s32.totalorder 0, %v3022
        %v3024 = vsel %vm3023, 0, %v3022
        %v3025 = vsub.s32 32, %v3024
        %v3026 = vshll.u32 %v3017, %v3024
        %v3027 = vshrl.u32 %v3009, %v3025
        %v3028 = vor.u32 %v3026, %v3027
        %v3029 = vsub.s32 4294967266, %v3024
        %v3030 = vadd.s32 %v3029, 127
        %v3031 = vshll.u32 %v3030, 23
        %v3032 = vor.u32 4788187, %v3031
        %v3033 = vand.u32 2147483647, %v3032
        %v3035 = vcvt.s32.f32 %v3028
        %v3036 = vmul.f32 %v3035, %v3033
        %v3037 = vxor.u32 %v3036, 2147483648
        %v3038 = vsel %vm2955, %v3037, %v3036
        %v3039 = vsub.s32 4, %v3015
        %v3040 = vsel %vm2955, %v3039, %v3015
        %v3041 = vsel %vm2954, %v2113, %v3038
        %v3042 = vsel %vm2954, 0, %v3040
        %v3043 = vcosq.f32.pop %v3041
        %v3044 = vsinq.f32.pop %v3041
        %vm3045 = vweird.f32 %v2113
        %v3046 = vadd.s32 %v3042, 3
        %v3047 = vand.u32 %v3046, 3
        %vm3048 = vcmp.lt.s32.totalorder %v3047, 2
        %vm3049 = vcmp.eq.s32.totalorder %v3047, 0
        %v3050 = vxor.u32 %v3044, 2147483648
        %v3051 = vsel %vm3049, %v3043, %v3050
        %vm3052 = vcmp.eq.s32.totalorder %v3047, 2
        %v3053 = vxor.u32 %v3043, 2147483648
        %v3054 = vsel %vm3052, %v3053, %v3044
        %v3055 = vsel %vm3048, %v3051, %v3054
        %v3056 = vsel %vm3045, nan, %v3055
        %v3057 = vand.u32 2147483647, %v2114
        %vm3058 = vcmp.le.f32.partialorder %v3057, 0.7853982
        %vm3059 = vcmp.lt.s32.totalorder %v2114, 0
        %v3060 = vand.u32 %v2114, 2139095040
        %v3061 = vshrl.u32 %v3060, 23
        %v3062 = vsub.s32 %v3061, 127
        %v3063 = vand.u32 2147483647, %v2114
        %v3064 = vand.u32 %v3063, 8388607
        %v3065 = vor.u32 %v3064, 8388608
        %v3066 = vsub.s32 0, %v3065
        %v3067 = vadd.s32 %v3062, 1
        %vm3068 = vcmp.gt.s32.totalorder %v3067, 0
        %v3069 = vsel %vm3068, %v3067, 0
        %v3070 = vshrl.u32 %v3069, 5
        %v3071 = vand.u32 %v3069, 31
        %v3072 = vsub.s32 32, %v3071
        %v3073 = vshrl.u32 683565275, %v3072
        %v3074 = vshll.u32 683565275, %v3071
        %v3075 = vshrl.u32 2475754826, %v3072
        %v3076 = vor.u32 %v3074, %v3075
        %v3077 = vshll.u32 2475754826, %v3071
        %v3078 = vshrl.u32 2131351028, %v3072
        %v3079 = vor.u32 %v3077, %v3078
        %v3080 = vshll.u32 2131351028, %v3071
        %v3081 = vshrl.u32 2102212464, %v3072
        %v3082 = vor.u32 %v3080, %v3081
        %v3083 = vshll.u32 2102212464, %v3071
        %v3084 = vshrl.u32 920167782, %v3072
        %v3085 = vor.u32 %v3083, %v3084
        %v3086 = vshll.u32 920167782, %v3071
        %v3087 = vshrl.u32 1326507024, %v3072
        %v3088 = vor.u32 %v3086, %v3087
        %vm3089 = vcmp.lt.s32.totalorder %v3070, 1
        %vm3090 = vcmp.lt.s32.totalorder %v3070, 2
        %vm3091 = vcmp.lt.s32.totalorder %v3070, 3
        %vm3092 = vcmp.lt.s32.totalorder %v3070, 4
        %v3093 = vsel %vm3089, %v3073, %v3076
        %v3094 = vsel %vm3092, %v3082, 2102212464
        %v3095 = vsel %vm3091, %v3079, %v3094
        %v3096 = vsel %vm3090, %v3093, %v3095
        %v3097 = vsel %vm3089, %v3076, %v3079
        %v3098 = vsel %vm3092, %v3085, 920167782
        %v3099 = vsel %vm3091, %v3082, %v3098
        %v3100 = vsel %vm3090, %v3097, %v3099
        %v3101 = vsel %vm3089, %v3079, %v3082
        %v3102 = vsel %vm3092, %v3088, 1326507024
        %v3103 = vsel %vm3091, %v3085, %v3102
        %v3104 = vsel %vm3090, %v3101, %v3103
        %v3105 = vshll.u32 %v3065, 8
        %v3106 = vmul.u32.u64.compose %v3105, %v3104
        %v3107 = vextract.low.u32 %v3106
        %v3108 = vextract.high.u32 %v3106
        %v3109 = vmul.u32.u64.compose %v3105, %v3100
        %v3110 = vextract.low.u32 %v3109
        %v3111 = vextract.high.u32 %v3109
        %v3112 = vmul.u32 %v3105, %v3096
        %v3113 = vadd.s32 %v3108, %v3110
        %vm3114 = vc.u32 %v3108, %v3110
        %v3115 = vadd.s32 %v3111, 1
        %v3116 = vsel %vm3114, %v3115, %v3111
        %v3117 = vadd.s32 %v3112, %v3116
        %v3118 = vadd.s32 %v3117, 536870912
        %v3119 = vshrl.u32 %v3118, 30
        %v3120 = vshll.u32 %v3119, 30
        %v3121 = vsub.s32 %v3117, %v3120
        %vm3122 = vcmp.lt.s32.totalorder %v3121, 0
        %v3123 = vsub.s32 0, %v3121
        %v3124 = vsel %vm3122, %v3123, %v3121
        %v3125 = vclz %v3124
        %v3126 = vsub.s32 %v3125, 2
        %vm3127 = vcmp.gt.s32.totalorder 0, %v3126
        %v3128 = vsel %vm3127, 0, %v3126
        %v3129 = vsub.s32 32, %v3128
        %v3130 = vshll.u32 %v3121, %v3128
        %v3131 = vshrl.u32 %v3113, %v3129
        %v3132 = vor.u32 %v3130, %v3131
        %v3133 = vsub.s32 4294967266, %v3128
        %v3134 = vadd.s32 %v3133, 127
        %v3135 = vshll.u32 %v3134, 23
        %v3136 = vor.u32 4788187, %v3135
        %v3137 = vand.u32 2147483647, %v3136
        %v3139 = vcvt.s32.f32 %v3132
        %v3140 = vmul.f32 %v3139, %v3137
        %v3141 = vxor.u32 %v3140, 2147483648
        %v3142 = vsel %vm3059, %v3141, %v3140
        %v3143 = vsub.s32 4, %v3119
        %v3144 = vsel %vm3059, %v3143, %v3119
        %v3145 = vsel %vm3058, %v2114, %v3142
        %v3146 = vsel %vm3058, 0, %v3144
        %v3147 = vcosq.f32.pop %v3145
        %v3148 = vsinq.f32.pop %v3145
        %vm3149 = vweird.f32 %v2114
        %v3150 = vadd.s32 %v3146, 3
        %v3151 = vand.u32 %v3150, 3
        %vm3152 = vcmp.lt.s32.totalorder %v3151, 2
        %vm3153 = vcmp.eq.s32.totalorder %v3151, 0
        %v3154 = vxor.u32 %v3148, 2147483648
        %v3155 = vsel %vm3153, %v3147, %v3154
        %vm3156 = vcmp.eq.s32.totalorder %v3151, 2
        %v3157 = vxor.u32 %v3147, 2147483648
        %v3158 = vsel %vm3156, %v3157, %v3148
        %v3159 = vsel %vm3152, %v3155, %v3158
        %v3160 = vsel %vm3149, nan, %v3159
        %v3161 = vand.u32 2147483647, %v2115
        %vm3162 = vcmp.le.f32.partialorder %v3161, 0.7853982
        %vm3163 = vcmp.lt.s32.totalorder %v2115, 0
        %v3164 = vand.u32 %v2115, 2139095040
        %v3165 = vshrl.u32 %v3164, 23
        %v3166 = vsub.s32 %v3165, 127
        %v3167 = vand.u32 2147483647, %v2115
        %v3168 = vand.u32 %v3167, 8388607
        %v3169 = vor.u32 %v3168, 8388608
        %v3170 = vsub.s32 0, %v3169
        %v3171 = vadd.s32 %v3166, 1
        %vm3172 = vcmp.gt.s32.totalorder %v3171, 0
        %v3173 = vsel %vm3172, %v3171, 0
        %v3174 = vshrl.u32 %v3173, 5
        %v3175 = vand.u32 %v3173, 31
        %v3176 = vsub.s32 32, %v3175
        %v3177 = vshrl.u32 683565275, %v3176
        %v3178 = vshll.u32 683565275, %v3175
        %v3179 = vshrl.u32 2475754826, %v3176
        %v3180 = vor.u32 %v3178, %v3179
        %v3181 = vshll.u32 2475754826, %v3175
        %v3182 = vshrl.u32 2131351028, %v3176
        %v3183 = vor.u32 %v3181, %v3182
        %v3184 = vshll.u32 2131351028, %v3175
        %v3185 = vshrl.u32 2102212464, %v3176
        %v3186 = vor.u32 %v3184, %v3185
        %v3187 = vshll.u32 2102212464, %v3175
        %v3188 = vshrl.u32 920167782, %v3176
        %v3189 = vor.u32 %v3187, %v3188
        %v3190 = vshll.u32 920167782, %v3175
        %v3191 = vshrl.u32 1326507024, %v3176
        %v3192 = vor.u32 %v3190, %v3191
        %vm3193 = vcmp.lt.s32.totalorder %v3174, 1
        %vm3194 = vcmp.lt.s32.totalorder %v3174, 2
        %vm3195 = vcmp.lt.s32.totalorder %v3174, 3
        %vm3196 = vcmp.lt.s32.totalorder %v3174, 4
        %v3197 = vsel %vm3193, %v3177, %v3180
        %v3198 = vsel %vm3196, %v3186, 2102212464
        %v3199 = vsel %vm3195, %v3183, %v3198
        %v3200 = vsel %vm3194, %v3197, %v3199
        %v3201 = vsel %vm3193, %v3180, %v3183
        %v3202 = vsel %vm3196, %v3189, 920167782
        %v3203 = vsel %vm3195, %v3186, %v3202
        %v3204 = vsel %vm3194, %v3201, %v3203
        %v3205 = vsel %vm3193, %v3183, %v3186
        %v3206 = vsel %vm3196, %v3192, 1326507024
        %v3207 = vsel %vm3195, %v3189, %v3206
        %v3208 = vsel %vm3194, %v3205, %v3207
        %v3209 = vshll.u32 %v3169, 8
        %v3210 = vmul.u32.u64.compose %v3209, %v3208
        %v3211 = vextract.low.u32 %v3210
        %v3212 = vextract.high.u32 %v3210
        %v3213 = vmul.u32.u64.compose %v3209, %v3204
        %v3214 = vextract.low.u32 %v3213
        %v3215 = vextract.high.u32 %v3213
        %v3216 = vmul.u32 %v3209, %v3200
        %v3217 = vadd.s32 %v3212, %v3214
        %vm3218 = vc.u32 %v3212, %v3214
        %v3219 = vadd.s32 %v3215, 1
        %v3220 = vsel %vm3218, %v3219, %v3215
        %v3221 = vadd.s32 %v3216, %v3220
        %v3222 = vadd.s32 %v3221, 536870912
        %v3223 = vshrl.u32 %v3222, 30
        %v3224 = vshll.u32 %v3223, 30
        %v3225 = vsub.s32 %v3221, %v3224
        %vm3226 = vcmp.lt.s32.totalorder %v3225, 0
        %v3227 = vsub.s32 0, %v3225
        %v3228 = vsel %vm3226, %v3227, %v3225
        %v3229 = vclz %v3228
        %v3230 = vsub.s32 %v3229, 2
        %vm3231 = vcmp.gt.s32.totalorder 0, %v3230
        %v3232 = vsel %vm3231, 0, %v3230
        %v3233 = vsub.s32 32, %v3232
        %v3234 = vshll.u32 %v3225, %v3232
        %v3235 = vshrl.u32 %v3217, %v3233
        %v3236 = vor.u32 %v3234, %v3235
        %v3237 = vsub.s32 4294967266, %v3232
        %v3238 = vadd.s32 %v3237, 127
        %v3239 = vshll.u32 %v3238, 23
        %v3240 = vor.u32 4788187, %v3239
        %v3241 = vand.u32 2147483647, %v3240
        %v3243 = vcvt.s32.f32 %v3236
        %v3244 = vmul.f32 %v3243, %v3241
        %v3245 = vxor.u32 %v3244, 2147483648
        %v3246 = vsel %vm3163, %v3245, %v3244
        %v3247 = vsub.s32 4, %v3223
        %v3248 = vsel %vm3163, %v3247, %v3223
        %v3249 = vsel %vm3162, %v2115, %v3246
        %v3250 = vsel %vm3162, 0, %v3248
        %v3251 = vcosq.f32.pop %v3249
        %v3252 = vsinq.f32.pop %v3249
        %vm3253 = vweird.f32 %v2115
        %v3254 = vadd.s32 %v3250, 3
        %v3255 = vand.u32 %v3254, 3
        %vm3256 = vcmp.lt.s32.totalorder %v3255, 2
        %vm3257 = vcmp.eq.s32.totalorder %v3255, 0
        %v3258 = vxor.u32 %v3252, 2147483648
        %v3259 = vsel %vm3257, %v3251, %v3258
        %vm3260 = vcmp.eq.s32.totalorder %v3255, 2
        %v3261 = vxor.u32 %v3251, 2147483648
        %v3262 = vsel %vm3260, %v3261, %v3252
        %v3263 = vsel %vm3256, %v3259, %v3262
        %v3264 = vsel %vm3253, nan, %v3263
        %v3265 = vand.u32 2147483647, %v2116
        %vm3266 = vcmp.le.f32.partialorder %v3265, 0.7853982
        %vm3267 = vcmp.lt.s32.totalorder %v2116, 0
        %v3268 = vand.u32 %v2116, 2139095040
        %v3269 = vshrl.u32 %v3268, 23
        %v3270 = vsub.s32 %v3269, 127
        %v3271 = vand.u32 2147483647, %v2116
        %v3272 = vand.u32 %v3271, 8388607
        %v3273 = vor.u32 %v3272, 8388608
        %v3274 = vsub.s32 0, %v3273
        %v3275 = vadd.s32 %v3270, 1
        %vm3276 = vcmp.gt.s32.totalorder %v3275, 0
        %v3277 = vsel %vm3276, %v3275, 0
        %v3278 = vshrl.u32 %v3277, 5
        %v3279 = vand.u32 %v3277, 31
        %v3280 = vsub.s32 32, %v3279
        %v3281 = vshrl.u32 683565275, %v3280
        %v3282 = vshll.u32 683565275, %v3279
        %v3283 = vshrl.u32 2475754826, %v3280
        %v3284 = vor.u32 %v3282, %v3283
        %v3285 = vshll.u32 2475754826, %v3279
        %v3286 = vshrl.u32 2131351028, %v3280
        %v3287 = vor.u32 %v3285, %v3286
        %v3288 = vshll.u32 2131351028, %v3279
        %v3289 = vshrl.u32 2102212464, %v3280
        %v3290 = vor.u32 %v3288, %v3289
        %v3291 = vshll.u32 2102212464, %v3279
        %v3292 = vshrl.u32 920167782, %v3280
        %v3293 = vor.u32 %v3291, %v3292
        %v3294 = vshll.u32 920167782, %v3279
        %v3295 = vshrl.u32 1326507024, %v3280
        %v3296 = vor.u32 %v3294, %v3295
        %vm3297 = vcmp.lt.s32.totalorder %v3278, 1
        %vm3298 = vcmp.lt.s32.totalorder %v3278, 2
        %vm3299 = vcmp.lt.s32.totalorder %v3278, 3
        %vm3300 = vcmp.lt.s32.totalorder %v3278, 4
        %v3301 = vsel %vm3297, %v3281, %v3284
        %v3302 = vsel %vm3300, %v3290, 2102212464
        %v3303 = vsel %vm3299, %v3287, %v3302
        %v3304 = vsel %vm3298, %v3301, %v3303
        %v3305 = vsel %vm3297, %v3284, %v3287
        %v3306 = vsel %vm3300, %v3293, 920167782
        %v3307 = vsel %vm3299, %v3290, %v3306
        %v3308 = vsel %vm3298, %v3305, %v3307
        %v3309 = vsel %vm3297, %v3287, %v3290
        %v3310 = vsel %vm3300, %v3296, 1326507024
        %v3311 = vsel %vm3299, %v3293, %v3310
        %v3312 = vsel %vm3298, %v3309, %v3311
        %v3313 = vshll.u32 %v3273, 8
        %v3314 = vmul.u32.u64.compose %v3313, %v3312
        %v3315 = vextract.low.u32 %v3314
        %v3316 = vextract.high.u32 %v3314
        %v3317 = vmul.u32.u64.compose %v3313, %v3308
        %v3318 = vextract.low.u32 %v3317
        %v3319 = vextract.high.u32 %v3317
        %v3320 = vmul.u32 %v3313, %v3304
        %v3321 = vadd.s32 %v3316, %v3318
        %vm3322 = vc.u32 %v3316, %v3318
        %v3323 = vadd.s32 %v3319, 1
        %v3324 = vsel %vm3322, %v3323, %v3319
        %v3325 = vadd.s32 %v3320, %v3324
        %v3326 = vadd.s32 %v3325, 536870912
        %v3327 = vshrl.u32 %v3326, 30
        %v3328 = vshll.u32 %v3327, 30
        %v3329 = vsub.s32 %v3325, %v3328
        %vm3330 = vcmp.lt.s32.totalorder %v3329, 0
        %v3331 = vsub.s32 0, %v3329
        %v3332 = vsel %vm3330, %v3331, %v3329
        %v3333 = vclz %v3332
        %v3334 = vsub.s32 %v3333, 2
        %vm3335 = vcmp.gt.s32.totalorder 0, %v3334
        %v3336 = vsel %vm3335, 0, %v3334
        %v3337 = vsub.s32 32, %v3336
        %v3338 = vshll.u32 %v3329, %v3336
        %v3339 = vshrl.u32 %v3321, %v3337
        %v3340 = vor.u32 %v3338, %v3339
        %v3341 = vsub.s32 4294967266, %v3336
        %v3342 = vadd.s32 %v3341, 127
        %v3343 = vshll.u32 %v3342, 23
        %v3344 = vor.u32 4788187, %v3343
        %v3345 = vand.u32 2147483647, %v3344
        %v3347 = vcvt.s32.f32 %v3340
        %v3348 = vmul.f32 %v3347, %v3345
        %v3349 = vxor.u32 %v3348, 2147483648
        %v3350 = vsel %vm3267, %v3349, %v3348
        %v3351 = vsub.s32 4, %v3327
        %v3352 = vsel %vm3267, %v3351, %v3327
        %v3353 = vsel %vm3266, %v2116, %v3350
        %v3354 = vsel %vm3266, 0, %v3352
        %v3355 = vcosq.f32.pop %v3353
        %v3356 = vsinq.f32.pop %v3353
        %vm3357 = vweird.f32 %v2116
        %v3358 = vadd.s32 %v3354, 3
        %v3359 = vand.u32 %v3358, 3
        %vm3360 = vcmp.lt.s32.totalorder %v3359, 2
        %vm3361 = vcmp.eq.s32.totalorder %v3359, 0
        %v3362 = vxor.u32 %v3356, 2147483648
        %v3363 = vsel %vm3361, %v3355, %v3362
        %vm3364 = vcmp.eq.s32.totalorder %v3359, 2
        %v3365 = vxor.u32 %v3355, 2147483648
        %v3366 = vsel %vm3364, %v3365, %v3356
        %v3367 = vsel %vm3360, %v3363, %v3366
        %v3368 = vsel %vm3357, nan, %v3367
        %v3369 = vand.u32 2147483647, %v2117
        %vm3370 = vcmp.le.f32.partialorder %v3369, 0.7853982
        %vm3371 = vcmp.lt.s32.totalorder %v2117, 0
        %v3372 = vand.u32 %v2117, 2139095040
        %v3373 = vshrl.u32 %v3372, 23
        %v3374 = vsub.s32 %v3373, 127
        %v3375 = vand.u32 2147483647, %v2117
        %v3376 = vand.u32 %v3375, 8388607
        %v3377 = vor.u32 %v3376, 8388608
        %v3378 = vsub.s32 0, %v3377
        %v3379 = vadd.s32 %v3374, 1
        %vm3380 = vcmp.gt.s32.totalorder %v3379, 0
        %v3381 = vsel %vm3380, %v3379, 0
        %v3382 = vshrl.u32 %v3381, 5
        %v3383 = vand.u32 %v3381, 31
        %v3384 = vsub.s32 32, %v3383
        %v3385 = vshrl.u32 683565275, %v3384
        %v3386 = vshll.u32 683565275, %v3383
        %v3387 = vshrl.u32 2475754826, %v3384
        %v3388 = vor.u32 %v3386, %v3387
        %v3389 = vshll.u32 2475754826, %v3383
        %v3390 = vshrl.u32 2131351028, %v3384
        %v3391 = vor.u32 %v3389, %v3390
        %v3392 = vshll.u32 2131351028, %v3383
        %v3393 = vshrl.u32 2102212464, %v3384
        %v3394 = vor.u32 %v3392, %v3393
        %v3395 = vshll.u32 2102212464, %v3383
        %v3396 = vshrl.u32 920167782, %v3384
        %v3397 = vor.u32 %v3395, %v3396
        %v3398 = vshll.u32 920167782, %v3383
        %v3399 = vshrl.u32 1326507024, %v3384
        %v3400 = vor.u32 %v3398, %v3399
        %vm3401 = vcmp.lt.s32.totalorder %v3382, 1
        %vm3402 = vcmp.lt.s32.totalorder %v3382, 2
        %vm3403 = vcmp.lt.s32.totalorder %v3382, 3
        %vm3404 = vcmp.lt.s32.totalorder %v3382, 4
        %v3405 = vsel %vm3401, %v3385, %v3388
        %v3406 = vsel %vm3404, %v3394, 2102212464
        %v3407 = vsel %vm3403, %v3391, %v3406
        %v3408 = vsel %vm3402, %v3405, %v3407
        %v3409 = vsel %vm3401, %v3388, %v3391
        %v3410 = vsel %vm3404, %v3397, 920167782
        %v3411 = vsel %vm3403, %v3394, %v3410
        %v3412 = vsel %vm3402, %v3409, %v3411
        %v3413 = vsel %vm3401, %v3391, %v3394
        %v3414 = vsel %vm3404, %v3400, 1326507024
        %v3415 = vsel %vm3403, %v3397, %v3414
        %v3416 = vsel %vm3402, %v3413, %v3415
        %v3417 = vshll.u32 %v3377, 8
        %v3418 = vmul.u32.u64.compose %v3417, %v3416
        %v3419 = vextract.low.u32 %v3418
        %v3420 = vextract.high.u32 %v3418
        %v3421 = vmul.u32.u64.compose %v3417, %v3412
        %v3422 = vextract.low.u32 %v3421
        %v3423 = vextract.high.u32 %v3421
        %v3424 = vmul.u32 %v3417, %v3408
        %v3425 = vadd.s32 %v3420, %v3422
        %vm3426 = vc.u32 %v3420, %v3422
        %v3427 = vadd.s32 %v3423, 1
        %v3428 = vsel %vm3426, %v3427, %v3423
        %v3429 = vadd.s32 %v3424, %v3428
        %v3430 = vadd.s32 %v3429, 536870912
        %v3431 = vshrl.u32 %v3430, 30
        %v3432 = vshll.u32 %v3431, 30
        %v3433 = vsub.s32 %v3429, %v3432
        %vm3434 = vcmp.lt.s32.totalorder %v3433, 0
        %v3435 = vsub.s32 0, %v3433
        %v3436 = vsel %vm3434, %v3435, %v3433
        %v3437 = vclz %v3436
        %v3438 = vsub.s32 %v3437, 2
        %vm3439 = vcmp.gt.s32.totalorder 0, %v3438
        %v3440 = vsel %vm3439, 0, %v3438
        %v3441 = vsub.s32 32, %v3440
        %v3442 = vshll.u32 %v3433, %v3440
        %v3443 = vshrl.u32 %v3425, %v3441
        %v3444 = vor.u32 %v3442, %v3443
        %v3445 = vsub.s32 4294967266, %v3440
        %v3446 = vadd.s32 %v3445, 127
        %v3447 = vshll.u32 %v3446, 23
        %v3448 = vor.u32 4788187, %v3447
        %v3449 = vand.u32 2147483647, %v3448
        %v3451 = vcvt.s32.f32 %v3444
        %v3452 = vmul.f32 %v3451, %v3449
        %v3453 = vxor.u32 %v3452, 2147483648
        %v3454 = vsel %vm3371, %v3453, %v3452
        %v3455 = vsub.s32 4, %v3431
        %v3456 = vsel %vm3371, %v3455, %v3431
        %v3457 = vsel %vm3370, %v2117, %v3454
        %v3458 = vsel %vm3370, 0, %v3456
        %v3459 = vcosq.f32.pop %v3457
        %v3460 = vsinq.f32.pop %v3457
        %vm3461 = vweird.f32 %v2117
        %v3462 = vadd.s32 %v3458, 3
        %v3463 = vand.u32 %v3462, 3
        %vm3464 = vcmp.lt.s32.totalorder %v3463, 2
        %vm3465 = vcmp.eq.s32.totalorder %v3463, 0
        %v3466 = vxor.u32 %v3460, 2147483648
        %v3467 = vsel %vm3465, %v3459, %v3466
        %vm3468 = vcmp.eq.s32.totalorder %v3463, 2
        %v3469 = vxor.u32 %v3459, 2147483648
        %v3470 = vsel %vm3468, %v3469, %v3460
        %v3471 = vsel %vm3464, %v3467, %v3470
        %v3472 = vsel %vm3461, nan, %v3471
        %v3473 = vand.u32 2147483647, %v2118
        %vm3474 = vcmp.le.f32.partialorder %v3473, 0.7853982
        %vm3475 = vcmp.lt.s32.totalorder %v2118, 0
        %v3476 = vand.u32 %v2118, 2139095040
        %v3477 = vshrl.u32 %v3476, 23
        %v3478 = vsub.s32 %v3477, 127
        %v3479 = vand.u32 2147483647, %v2118
        %v3480 = vand.u32 %v3479, 8388607
        %v3481 = vor.u32 %v3480, 8388608
        %v3482 = vsub.s32 0, %v3481
        %v3483 = vadd.s32 %v3478, 1
        %vm3484 = vcmp.gt.s32.totalorder %v3483, 0
        %v3485 = vsel %vm3484, %v3483, 0
        %v3486 = vshrl.u32 %v3485, 5
        %v3487 = vand.u32 %v3485, 31
        %v3488 = vsub.s32 32, %v3487
        %v3489 = vshrl.u32 683565275, %v3488
        %v3490 = vshll.u32 683565275, %v3487
        %v3491 = vshrl.u32 2475754826, %v3488
        %v3492 = vor.u32 %v3490, %v3491
        %v3493 = vshll.u32 2475754826, %v3487
        %v3494 = vshrl.u32 2131351028, %v3488
        %v3495 = vor.u32 %v3493, %v3494
        %v3496 = vshll.u32 2131351028, %v3487
        %v3497 = vshrl.u32 2102212464, %v3488
        %v3498 = vor.u32 %v3496, %v3497
        %v3499 = vshll.u32 2102212464, %v3487
        %v3500 = vshrl.u32 920167782, %v3488
        %v3501 = vor.u32 %v3499, %v3500
        %v3502 = vshll.u32 920167782, %v3487
        %v3503 = vshrl.u32 1326507024, %v3488
        %v3504 = vor.u32 %v3502, %v3503
        %vm3505 = vcmp.lt.s32.totalorder %v3486, 1
        %vm3506 = vcmp.lt.s32.totalorder %v3486, 2
        %vm3507 = vcmp.lt.s32.totalorder %v3486, 3
        %vm3508 = vcmp.lt.s32.totalorder %v3486, 4
        %v3509 = vsel %vm3505, %v3489, %v3492
        %v3510 = vsel %vm3508, %v3498, 2102212464
        %v3511 = vsel %vm3507, %v3495, %v3510
        %v3512 = vsel %vm3506, %v3509, %v3511
        %v3513 = vsel %vm3505, %v3492, %v3495
        %v3514 = vsel %vm3508, %v3501, 920167782
        %v3515 = vsel %vm3507, %v3498, %v3514
        %v3516 = vsel %vm3506, %v3513, %v3515
        %v3517 = vsel %vm3505, %v3495, %v3498
        %v3518 = vsel %vm3508, %v3504, 1326507024
        %v3519 = vsel %vm3507, %v3501, %v3518
        %v3520 = vsel %vm3506, %v3517, %v3519
        %v3521 = vshll.u32 %v3481, 8
        %v3522 = vmul.u32.u64.compose %v3521, %v3520
        %v3523 = vextract.low.u32 %v3522
        %v3524 = vextract.high.u32 %v3522
        %v3525 = vmul.u32.u64.compose %v3521, %v3516
        %v3526 = vextract.low.u32 %v3525
        %v3527 = vextract.high.u32 %v3525
        %v3528 = vmul.u32 %v3521, %v3512
        %v3529 = vadd.s32 %v3524, %v3526
        %vm3530 = vc.u32 %v3524, %v3526
        %v3531 = vadd.s32 %v3527, 1
        %v3532 = vsel %vm3530, %v3531, %v3527
        %v3533 = vadd.s32 %v3528, %v3532
        %v3534 = vadd.s32 %v3533, 536870912
        %v3535 = vshrl.u32 %v3534, 30
        %v3536 = vshll.u32 %v3535, 30
        %v3537 = vsub.s32 %v3533, %v3536
        %vm3538 = vcmp.lt.s32.totalorder %v3537, 0
        %v3539 = vsub.s32 0, %v3537
        %v3540 = vsel %vm3538, %v3539, %v3537
        %v3541 = vclz %v3540
        %v3542 = vsub.s32 %v3541, 2
        %vm3543 = vcmp.gt.s32.totalorder 0, %v3542
        %v3544 = vsel %vm3543, 0, %v3542
        %v3545 = vsub.s32 32, %v3544
        %v3546 = vshll.u32 %v3537, %v3544
        %v3547 = vshrl.u32 %v3529, %v3545
        %v3548 = vor.u32 %v3546, %v3547
        %v3549 = vsub.s32 4294967266, %v3544
        %v3550 = vadd.s32 %v3549, 127
        %v3551 = vshll.u32 %v3550, 23
        %v3552 = vor.u32 4788187, %v3551
        %v3553 = vand.u32 2147483647, %v3552
        %v3555 = vcvt.s32.f32 %v3548
        %v3556 = vmul.f32 %v3555, %v3553
        %v3557 = vxor.u32 %v3556, 2147483648
        %v3558 = vsel %vm3475, %v3557, %v3556
        %v3559 = vsub.s32 4, %v3535
        %v3560 = vsel %vm3475, %v3559, %v3535
        %v3561 = vsel %vm3474, %v2118, %v3558
        %v3562 = vsel %vm3474, 0, %v3560
        %v3563 = vcosq.f32.pop %v3561
        %v3564 = vsinq.f32.pop %v3561
        %vm3565 = vweird.f32 %v2118
        %v3566 = vadd.s32 %v3562, 3
        %v3567 = vand.u32 %v3566, 3
        %vm3568 = vcmp.lt.s32.totalorder %v3567, 2
        %vm3569 = vcmp.eq.s32.totalorder %v3567, 0
        %v3570 = vxor.u32 %v3564, 2147483648
        %v3571 = vsel %vm3569, %v3563, %v3570
        %vm3572 = vcmp.eq.s32.totalorder %v3567, 2
        %v3573 = vxor.u32 %v3563, 2147483648
        %v3574 = vsel %vm3572, %v3573, %v3564
        %v3575 = vsel %vm3568, %v3571, %v3574
        %v3576 = vsel %vm3565, nan, %v3575
        %v3577 = vand.u32 2147483647, %v2119
        %vm3578 = vcmp.le.f32.partialorder %v3577, 0.7853982
        %vm3579 = vcmp.lt.s32.totalorder %v2119, 0
        %v3580 = vand.u32 %v2119, 2139095040
        %v3581 = vshrl.u32 %v3580, 23
        %v3582 = vsub.s32 %v3581, 127
        %v3583 = vand.u32 2147483647, %v2119
        %v3584 = vand.u32 %v3583, 8388607
        %v3585 = vor.u32 %v3584, 8388608
        %v3586 = vsub.s32 0, %v3585
        %v3587 = vadd.s32 %v3582, 1
        %vm3588 = vcmp.gt.s32.totalorder %v3587, 0
        %v3589 = vsel %vm3588, %v3587, 0
        %v3590 = vshrl.u32 %v3589, 5
        %v3591 = vand.u32 %v3589, 31
        %v3592 = vsub.s32 32, %v3591
        %v3593 = vshrl.u32 683565275, %v3592
        %v3594 = vshll.u32 683565275, %v3591
        %v3595 = vshrl.u32 2475754826, %v3592
        %v3596 = vor.u32 %v3594, %v3595
        %v3597 = vshll.u32 2475754826, %v3591
        %v3598 = vshrl.u32 2131351028, %v3592
        %v3599 = vor.u32 %v3597, %v3598
        %v3600 = vshll.u32 2131351028, %v3591
        %v3601 = vshrl.u32 2102212464, %v3592
        %v3602 = vor.u32 %v3600, %v3601
        %v3603 = vshll.u32 2102212464, %v3591
        %v3604 = vshrl.u32 920167782, %v3592
        %v3605 = vor.u32 %v3603, %v3604
        %v3606 = vshll.u32 920167782, %v3591
        %v3607 = vshrl.u32 1326507024, %v3592
        %v3608 = vor.u32 %v3606, %v3607
        %vm3609 = vcmp.lt.s32.totalorder %v3590, 1
        %vm3610 = vcmp.lt.s32.totalorder %v3590, 2
        %vm3611 = vcmp.lt.s32.totalorder %v3590, 3
        %vm3612 = vcmp.lt.s32.totalorder %v3590, 4
        %v3613 = vsel %vm3609, %v3593, %v3596
        %v3614 = vsel %vm3612, %v3602, 2102212464
        %v3615 = vsel %vm3611, %v3599, %v3614
        %v3616 = vsel %vm3610, %v3613, %v3615
        %v3617 = vsel %vm3609, %v3596, %v3599
        %v3618 = vsel %vm3612, %v3605, 920167782
        %v3619 = vsel %vm3611, %v3602, %v3618
        %v3620 = vsel %vm3610, %v3617, %v3619
        %v3621 = vsel %vm3609, %v3599, %v3602
        %v3622 = vsel %vm3612, %v3608, 1326507024
        %v3623 = vsel %vm3611, %v3605, %v3622
        %v3624 = vsel %vm3610, %v3621, %v3623
        %v3625 = vshll.u32 %v3585, 8
        %v3626 = vmul.u32.u64.compose %v3625, %v3624
        %v3627 = vextract.low.u32 %v3626
        %v3628 = vextract.high.u32 %v3626
        %v3629 = vmul.u32.u64.compose %v3625, %v3620
        %v3630 = vextract.low.u32 %v3629
        %v3631 = vextract.high.u32 %v3629
        %v3632 = vmul.u32 %v3625, %v3616
        %v3633 = vadd.s32 %v3628, %v3630
        %vm3634 = vc.u32 %v3628, %v3630
        %v3635 = vadd.s32 %v3631, 1
        %v3636 = vsel %vm3634, %v3635, %v3631
        %v3637 = vadd.s32 %v3632, %v3636
        %v3638 = vadd.s32 %v3637, 536870912
        %v3639 = vshrl.u32 %v3638, 30
        %v3640 = vshll.u32 %v3639, 30
        %v3641 = vsub.s32 %v3637, %v3640
        %vm3642 = vcmp.lt.s32.totalorder %v3641, 0
        %v3643 = vsub.s32 0, %v3641
        %v3644 = vsel %vm3642, %v3643, %v3641
        %v3645 = vclz %v3644
        %v3646 = vsub.s32 %v3645, 2
        %vm3647 = vcmp.gt.s32.totalorder 0, %v3646
        %v3648 = vsel %vm3647, 0, %v3646
        %v3649 = vsub.s32 32, %v3648
        %v3650 = vshll.u32 %v3641, %v3648
        %v3651 = vshrl.u32 %v3633, %v3649
        %v3652 = vor.u32 %v3650, %v3651
        %v3653 = vsub.s32 4294967266, %v3648
        %v3654 = vadd.s32 %v3653, 127
        %v3655 = vshll.u32 %v3654, 23
        %v3656 = vor.u32 4788187, %v3655
        %v3657 = vand.u32 2147483647, %v3656
        %v3659 = vcvt.s32.f32 %v3652
        %v3660 = vmul.f32 %v3659, %v3657
        %v3661 = vxor.u32 %v3660, 2147483648
        %v3662 = vsel %vm3579, %v3661, %v3660
        %v3663 = vsub.s32 4, %v3639
        %v3664 = vsel %vm3579, %v3663, %v3639
        %v3665 = vsel %vm3578, %v2119, %v3662
        %v3666 = vsel %vm3578, 0, %v3664
        %v3667 = vcosq.f32.pop %v3665
        %v3668 = vsinq.f32.pop %v3665
        %vm3669 = vweird.f32 %v2119
        %v3670 = vadd.s32 %v3666, 3
        %v3671 = vand.u32 %v3670, 3
        %vm3672 = vcmp.lt.s32.totalorder %v3671, 2
        %vm3673 = vcmp.eq.s32.totalorder %v3671, 0
        %v3674 = vxor.u32 %v3668, 2147483648
        %v3675 = vsel %vm3673, %v3667, %v3674
        %vm3676 = vcmp.eq.s32.totalorder %v3671, 2
        %v3677 = vxor.u32 %v3667, 2147483648
        %v3678 = vsel %vm3676, %v3677, %v3668
        %v3679 = vsel %vm3672, %v3675, %v3678
        %v3680 = vsel %vm3669, nan, %v3679
        %v3681 = vand.u32 2147483647, %v2120
        %vm3682 = vcmp.le.f32.partialorder %v3681, 0.7853982
        %vm3683 = vcmp.lt.s32.totalorder %v2120, 0
        %v3684 = vand.u32 %v2120, 2139095040
        %v3685 = vshrl.u32 %v3684, 23
        %v3686 = vsub.s32 %v3685, 127
        %v3687 = vand.u32 2147483647, %v2120
        %v3688 = vand.u32 %v3687, 8388607
        %v3689 = vor.u32 %v3688, 8388608
        %v3690 = vsub.s32 0, %v3689
        %v3691 = vadd.s32 %v3686, 1
        %vm3692 = vcmp.gt.s32.totalorder %v3691, 0
        %v3693 = vsel %vm3692, %v3691, 0
        %v3694 = vshrl.u32 %v3693, 5
        %v3695 = vand.u32 %v3693, 31
        %v3696 = vsub.s32 32, %v3695
        %v3697 = vshrl.u32 683565275, %v3696
        %v3698 = vshll.u32 683565275, %v3695
        %v3699 = vshrl.u32 2475754826, %v3696
        %v3700 = vor.u32 %v3698, %v3699
        %v3701 = vshll.u32 2475754826, %v3695
        %v3702 = vshrl.u32 2131351028, %v3696
        %v3703 = vor.u32 %v3701, %v3702
        %v3704 = vshll.u32 2131351028, %v3695
        %v3705 = vshrl.u32 2102212464, %v3696
        %v3706 = vor.u32 %v3704, %v3705
        %v3707 = vshll.u32 2102212464, %v3695
        %v3708 = vshrl.u32 920167782, %v3696
        %v3709 = vor.u32 %v3707, %v3708
        %v3710 = vshll.u32 920167782, %v3695
        %v3711 = vshrl.u32 1326507024, %v3696
        %v3712 = vor.u32 %v3710, %v3711
        %vm3713 = vcmp.lt.s32.totalorder %v3694, 1
        %vm3714 = vcmp.lt.s32.totalorder %v3694, 2
        %vm3715 = vcmp.lt.s32.totalorder %v3694, 3
        %vm3716 = vcmp.lt.s32.totalorder %v3694, 4
        %v3717 = vsel %vm3713, %v3697, %v3700
        %v3718 = vsel %vm3716, %v3706, 2102212464
        %v3719 = vsel %vm3715, %v3703, %v3718
        %v3720 = vsel %vm3714, %v3717, %v3719
        %v3721 = vsel %vm3713, %v3700, %v3703
        %v3722 = vsel %vm3716, %v3709, 920167782
        %v3723 = vsel %vm3715, %v3706, %v3722
        %v3724 = vsel %vm3714, %v3721, %v3723
        %v3725 = vsel %vm3713, %v3703, %v3706
        %v3726 = vsel %vm3716, %v3712, 1326507024
        %v3727 = vsel %vm3715, %v3709, %v3726
        %v3728 = vsel %vm3714, %v3725, %v3727
        %v3729 = vshll.u32 %v3689, 8
        %v3730 = vmul.u32.u64.compose %v3729, %v3728
        %v3731 = vextract.low.u32 %v3730
        %v3732 = vextract.high.u32 %v3730
        %v3733 = vmul.u32.u64.compose %v3729, %v3724
        %v3734 = vextract.low.u32 %v3733
        %v3735 = vextract.high.u32 %v3733
        %v3736 = vmul.u32 %v3729, %v3720
        %v3737 = vadd.s32 %v3732, %v3734
        %vm3738 = vc.u32 %v3732, %v3734
        %v3739 = vadd.s32 %v3735, 1
        %v3740 = vsel %vm3738, %v3739, %v3735
        %v3741 = vadd.s32 %v3736, %v3740
        %v3742 = vadd.s32 %v3741, 536870912
        %v3743 = vshrl.u32 %v3742, 30
        %v3744 = vshll.u32 %v3743, 30
        %v3745 = vsub.s32 %v3741, %v3744
        %vm3746 = vcmp.lt.s32.totalorder %v3745, 0
        %v3747 = vsub.s32 0, %v3745
        %v3748 = vsel %vm3746, %v3747, %v3745
        %v3749 = vclz %v3748
        %v3750 = vsub.s32 %v3749, 2
        %vm3751 = vcmp.gt.s32.totalorder 0, %v3750
        %v3752 = vsel %vm3751, 0, %v3750
        %v3753 = vsub.s32 32, %v3752
        %v3754 = vshll.u32 %v3745, %v3752
        %v3755 = vshrl.u32 %v3737, %v3753
        %v3756 = vor.u32 %v3754, %v3755
        %v3757 = vsub.s32 4294967266, %v3752
        %v3758 = vadd.s32 %v3757, 127
        %v3759 = vshll.u32 %v3758, 23
        %v3760 = vor.u32 4788187, %v3759
        %v3761 = vand.u32 2147483647, %v3760
        %v3763 = vcvt.s32.f32 %v3756
        %v3764 = vmul.f32 %v3763, %v3761
        %v3765 = vxor.u32 %v3764, 2147483648
        %v3766 = vsel %vm3683, %v3765, %v3764
        %v3767 = vsub.s32 4, %v3743
        %v3768 = vsel %vm3683, %v3767, %v3743
        %v3769 = vsel %vm3682, %v2120, %v3766
        %v3770 = vsel %vm3682, 0, %v3768
        %v3771 = vcosq.f32.pop %v3769
        %v3772 = vsinq.f32.pop %v3769
        %vm3773 = vweird.f32 %v2120
        %v3774 = vadd.s32 %v3770, 3
        %v3775 = vand.u32 %v3774, 3
        %vm3776 = vcmp.lt.s32.totalorder %v3775, 2
        %vm3777 = vcmp.eq.s32.totalorder %v3775, 0
        %v3778 = vxor.u32 %v3772, 2147483648
        %v3779 = vsel %vm3777, %v3771, %v3778
        %vm3780 = vcmp.eq.s32.totalorder %v3775, 2
        %v3781 = vxor.u32 %v3771, 2147483648
        %v3782 = vsel %vm3780, %v3781, %v3772
        %v3783 = vsel %vm3776, %v3779, %v3782
        %v3784 = vsel %vm3773, nan, %v3783
        %3785 = vst [vmem:[%s237 + $0x80] sm:$0xff] %v2224
        %3786 = vst [vmem:[%s237 + $0x88] sm:$0xff] %v2328
        %3787 = vst [vmem:[%s237 + $0x90] sm:$0xff] %v2432
        %3788 = vst [vmem:[%s237 + $0x98] sm:$0xff] %v2536
        %3789 = vst [vmem:[%s237 + $0xa0] sm:$0xff] %v2640
        %3790 = vst [vmem:[%s237 + $0xa8] sm:$0xff] %v2744
        %3791 = vst [vmem:[%s237 + $0xb0] sm:$0xff] %v2848
        %3792 = vst [vmem:[%s237 + $0xb8] sm:$0xff] %v2952
        %3793 = vst [vmem:[%s237 + $0xc0] sm:$0xff] %v3056
        %3794 = vst [vmem:[%s237 + $0xc8] sm:$0xff] %v3160
        %3795 = vst [vmem:[%s237 + $0xd0] sm:$0xff] %v3264
        %3796 = vst [vmem:[%s237 + $0xd8] sm:$0xff] %v3368
        %3797 = vst [vmem:[%s237 + $0xe0] sm:$0xff] %v3472
        %3798 = vst [vmem:[%s237 + $0xe8] sm:$0xff] %v3576
        %3799 = vst [vmem:[%s237 + $0xf0] sm:$0xff] %v3680
        %3800 = vst [vmem:[%s237 + $0xf8] sm:$0xff] %v3784
        %s3801 = sand.u32 %s138, 1
        %s3802 = scalar_lea.sflag [#allocation3], %s3801
        %s3803 = sand.u32 %s138, 1
        %s3804 = smul.addr %s3803, 256
        %s3805 = scalar_lea.vmem [#allocation2], %s3804
        // Predicated region
        $region37: #{tpu_custom_call.1} parent=35 // pred_check
          %p3806 = pneg %p148
        $region38: #{tpu_custom_call.1} parent=35 // pred_check_branch
          %3808 = sbr.rel (%p3806) target = $region40
        $region39: #{tpu_custom_call.1} parent=35 // pred_region
          %s3809 = smul.u32 2, %s23
          %s3811 = ssub.s32 4096, 4096
          %3812 = vsyncadd %s3802, %s3811
          %s3813 = smul.addr %s22, 32
          %s3814 = sadd.s32 %s3809, %s3813
          %s3815 = smul.addr %s3814, 128
          %s3816 = scalar_lea.hbm %s4, %s3815
          %s3817 = sshll.u32 %s3805, 4
          %s3818 = int_to_ptr.vmem [resolvable:$true] %s3817
          %3823 = dma.vmem_to_hbm [thread:$0]  %s3818, 4096, %s3816, %s3802, 256, 256, 16
        $region40: #{tpu_custom_call.1} parent=35 // pred_fallthru
          _
      $region36: #{tpu_custom_call.1} parent=5 // pred_fallthru
        _
      %p3824 = scmp.le.s32.totalorder 2, %s13
      // Predicated region
      $region41: #{tpu_custom_call.1} parent=5 // pred_check
        %p3825 = pneg %p3824
      $region42: #{tpu_custom_call.1} parent=5 // pred_check_branch
        %3827 = sbr.rel (%p3825) target = $region44
      $region43: #{tpu_custom_call.1} parent=5 // pred_region
        %s3828 = ssub.s32 %s13, 2
        // Predicated region
        $region45: #{tpu_custom_call.1} parent=43 // pred_check
          %p3829 = pneg %p154
        $region46: #{tpu_custom_call.1} parent=43 // pred_check_branch
          %3831 = sbr.rel (%p3829) target = $region48
        $region47: #{tpu_custom_call.1} parent=43 // pred_region
          %s3832 = sand.u32 %s139, 1
          %s3833 = scalar_lea.sflag [#allocation3], %s3832
          %s3834 = sand.u32 %s139, 1
          %s3835 = smul.addr %s3834, 256
          %s3836 = scalar_lea.vmem [#allocation2], %s3835
          %3837 = dma.done %s3833, 4096
        $region48: #{tpu_custom_call.1} parent=43 // pred_fallthru
          _
      $region44: #{tpu_custom_call.1} parent=5 // pred_fallthru
        _
    $region6: #{tpu_custom_call.1} parent=1 // loop_footer
      %s17 = sadd.s32 1, %s13
    $region7: #{tpu_custom_call.1} parent=1 // loop_footer_branch
      %12 = sbr.rel target = $region3
    $region8: #{tpu_custom_call.1} parent=1 // loop_exit
      _
    %3838 = vsyncpa [#allocation3], 1
    %s3839 = scalar_lea.sflag [#allocation3], 1
    %3840 = vsyncpa %s3839, 1

</llo_original>
